<compile_context>
chip_gen: v7x
topology: tpu7x:2x2x1
jax: 0.10.0
libtpu: 0.0.40
codegen_flags: <defaults>
</compile_context>

<pallas_src>
import numpy as np
import jax
import jax.numpy as jnp
from jax import lax
from jax.experimental import pallas as pl
from jax.experimental.pallas import tpu as pltpu

# ----------------------------- configuration -------------------------------
B = 8            # batch
SIZE = 128       # highway width (maps onto the 128-lane axis)
NUM_LAYERS = 3   # highway depth
TB = 8           # batch tile; raise to >=128 (v5e) / >=256 (v6e/v7x) for real
                 # batches so the MXU rows fill and >=2 tiles feed both v7x TCs


# ----------------------------- Pallas kernel --------------------------------
def _highway_kernel(x_ref, w_ref, b_ref, o_ref):
    # x_ref: (TB, S)           input batch tile
    # w_ref: (L, S, 3*S)       ALL layers' [gate | nonlinear | linear] weights (VMEM-resident)
    # b_ref: (L, 1, 3*S)       ALL layers' biases, same concatenation order
    # o_ref: (TB, S)           output batch tile
    num_layers = w_ref.shape[0]
    s = x_ref.shape[-1]

    def layer(l, x):
        y = jnp.dot(x, w_ref[l],
                    preferred_element_type=jnp.float32,
                    precision=lax.Precision.HIGHEST) + b_ref[l]
        gate = jax.nn.sigmoid(y[:, :s])
        nonlinear = jnp.maximum(y[:, s:2 * s], 0.0)     # f = ReLU
        linear = y[:, 2 * s:]
        # gate*n + (1-gate)*lin  ==  lin + gate*(n - lin)   (fewer VALU ops)
        return linear + gate * (nonlinear - linear)

    # L is small and static -> fully unrolled in-kernel loop (no layer grid axis).
    o_ref[...] = lax.fori_loop(0, num_layers, layer, x_ref[...], unroll=True)


def highway_forward(x, w_cat, b_cat, *, tb=TB):
    bb, s = x.shape
    nl = w_cat.shape[0]
    assert bb % tb == 0
    return pl.pallas_call(
        _highway_kernel,
        out_shape=jax.ShapeDtypeStruct((bb, s), jnp.float32),
        grid=(bb // tb,),
        in_specs=[
            pl.BlockSpec((tb, s), lambda b: (b, 0)),               # per-tile activations
            pl.BlockSpec((nl, s, 3 * s), lambda b: (0, 0, 0)),     # full weight stack, resident
            pl.BlockSpec((nl, 1, 3 * s), lambda b: (0, 0, 0)),     # full bias stack, resident
        ],
        out_specs=pl.BlockSpec((tb, s), lambda b: (b, 0)),
        compiler_params=pltpu.CompilerParams(
            dimension_semantics=("parallel",)),
    )(x, w_cat, b_cat)


# ----------------------------- params & reference ---------------------------
def init_params(key):
    ks = jax.random.split(key, 6 * NUM_LAYERS)
    scale = 1.0 / np.sqrt(SIZE)
    ws, bs = [], []
    idx = 0
    for _ in range(NUM_LAYERS):
        layer_w, layer_b = [], []
        for _branch in ("gate", "nonlinear", "linear"):
            w = scale * jax.random.normal(ks[idx], (SIZE, SIZE), jnp.float32); idx += 1
            b = scale * jax.random.normal(ks[idx], (SIZE,), jnp.float32); idx += 1
            layer_w.append(w)     # stored as (in_features, out_features)
            layer_b.append(b)
        ws.append(jnp.concatenate(layer_w, axis=1))     # (SIZE, 3*SIZE)
        bs.append(jnp.concatenate(layer_b)[None, :])    # (1, 3*SIZE)
    return jnp.stack(ws), jnp.stack(bs)                 # (L, S, 3S), (L, 1, 3S)


def reference_forward(x, w_cat, b_cat):
    s = x.shape[-1]
    for l in range(w_cat.shape[0]):
        y = x @ w_cat[l] + b_cat[l, 0]
        g = jax.nn.sigmoid(y[:, :s])
        n = jnp.maximum(y[:, s:2 * s], 0.0)
        lin = y[:, 2 * s:]
        x = g * n + (1.0 - g) * lin
    return x


# ----------------------------------- main -----------------------------------
if __name__ == "__main__":
    key = jax.random.PRNGKey(0)
    pkey, xkey = jax.random.split(key)
    w_cat, b_cat = init_params(pkey)
    x = jax.random.normal(xkey, (B, SIZE), dtype=jnp.float32)

    out = jax.block_until_ready(jax.jit(highway_forward)(x, w_cat, b_cat))
    assert out.shape == (B, SIZE)
    assert bool(jnp.all(jnp.isfinite(out)))

    with jax.default_matmul_precision("float32"):
        ref = jax.block_until_ready(jax.jit(reference_forward)(x, w_cat, b_cat))
    np.testing.assert_allclose(np.asarray(out), np.asarray(ref), rtol=1e-3, atol=1e-4)

    print("KERNEL_OK")
</pallas_src>

<mosaic_0001>
module attributes {stable_mosaic.version = 11 : i64} {
  func.func @_highway_kernel(%arg0: i32, %arg1: memref<8x128xf32, #tpu.memory_space<vmem>>, %arg2: memref<3x128x384xf32, #tpu.memory_space<vmem>>, %arg3: memref<3x1x384xf32, #tpu.memory_space<vmem>>, %arg4: memref<8x128xf32, #tpu.memory_space<vmem>>) attributes {dimension_semantics = [#tpu.dimension_semantics<parallel>], iteration_bounds = array<i64: 1>, scalar_prefetch = 0 : i64, scratch_operands = 0 : i64, tpu.core_type = #tpu.core_type<tc>, window_params = [{transform_indices = @transform_0, window_bounds = array<i64: 8, 128>}, {pipeline_mode = #tpu.pipeline_mode<synchronous>, transform_indices = @transform_1, window_bounds = array<i64: 3, 128, 384>}, {pipeline_mode = #tpu.pipeline_mode<synchronous>, transform_indices = @transform_2, window_bounds = array<i64: 3, 1, 384>}, {transform_indices = @transform_3, window_bounds = array<i64: 8, 128>}]} {
    %c0 = arith.constant 0 : index
    %c0_0 = arith.constant 0 : index
    %0 = vector.load %arg1[%c0, %c0_0] : memref<8x128xf32, #tpu.memory_space<vmem>>, vector<8x128xf32>
    %c0_i32 = arith.constant 0 : i32
    %1 = arith.index_cast %c0_i32 : i32 to index
    %c0_1 = arith.constant 0 : index
    %c0_2 = arith.constant 0 : index
    %2 = vector.load %arg2[%1, %c0_1, %c0_2] : memref<3x128x384xf32, #tpu.memory_space<vmem>>, vector<1x128x384xf32>
    %3 = vector.shape_cast %2 : vector<1x128x384xf32> to vector<128x384xf32>
    %cst = arith.constant dense<0.000000e+00> : vector<8x384xf32>
    %4 = tpu.matmul %0, %3, %cst {dimension_numbers = #tpu.dot_dimension_numbers<[1], [0], [0], [1], [0, 0, 1, 1], [], []>, precision = #tpu.contract_precision<fp32>} : vector<8x128xf32>, vector<128x384xf32>, vector<8x384xf32> -> vector<8x384xf32>
    %5 = arith.index_cast %c0_i32 : i32 to index
    %c0_3 = arith.constant 0 : index
    %c0_4 = arith.constant 0 : index
    %6 = vector.load %arg3[%5, %c0_3, %c0_4] : memref<3x1x384xf32, #tpu.memory_space<vmem>>, vector<1x1x384xf32>
    %7 = vector.shape_cast %6 : vector<1x1x384xf32> to vector<1x384xf32>
    %8 = vector.broadcast %7 : vector<1x384xf32> to vector<8x384xf32>
    %9 = arith.addf %4, %8 : vector<8x384xf32>
    %10 = vector.extract_strided_slice %9 {offsets = [0, 0], sizes = [8, 128], strides = [1, 1]} : vector<8x384xf32> to vector<8x128xf32>
    %11 = arith.negf %10 : vector<8x128xf32>
    %12 = math.exp %11 : vector<8x128xf32>
    %cst_5 = arith.constant 1.000000e+00 : f32
    %13 = vector.broadcast %cst_5 : f32 to vector<8x128xf32>
    %14 = arith.addf %13, %12 : vector<8x128xf32>
    %15 = arith.divf %13, %14 : vector<8x128xf32>
    %16 = vector.extract_strided_slice %9 {offsets = [0, 128], sizes = [8, 128], strides = [1, 1]} : vector<8x384xf32> to vector<8x128xf32>
    %cst_6 = arith.constant 0.000000e+00 : f32
    %17 = vector.broadcast %cst_6 : f32 to vector<8x128xf32>
    %18 = arith.maximumf %16, %17 : vector<8x128xf32>
    %19 = vector.extract_strided_slice %9 {offsets = [0, 256], sizes = [8, 128], strides = [1, 1]} : vector<8x384xf32> to vector<8x128xf32>
    %20 = arith.subf %18, %19 : vector<8x128xf32>
    %21 = arith.mulf %15, %20 : vector<8x128xf32>
    %22 = arith.addf %19, %21 : vector<8x128xf32>
    %c1_i32 = arith.constant 1 : i32
    %23 = arith.index_cast %c1_i32 : i32 to index
    %c0_7 = arith.constant 0 : index
    %c0_8 = arith.constant 0 : index
    %24 = vector.load %arg2[%23, %c0_7, %c0_8] : memref<3x128x384xf32, #tpu.memory_space<vmem>>, vector<1x128x384xf32>
    %25 = vector.shape_cast %24 : vector<1x128x384xf32> to vector<128x384xf32>
    %cst_9 = arith.constant dense<0.000000e+00> : vector<8x384xf32>
    %26 = tpu.matmul %22, %25, %cst_9 {dimension_numbers = #tpu.dot_dimension_numbers<[1], [0], [0], [1], [0, 0, 1, 1], [], []>, precision = #tpu.contract_precision<fp32>} : vector<8x128xf32>, vector<128x384xf32>, vector<8x384xf32> -> vector<8x384xf32>
    %27 = arith.index_cast %c1_i32 : i32 to index
    %c0_10 = arith.constant 0 : index
    %c0_11 = arith.constant 0 : index
    %28 = vector.load %arg3[%27, %c0_10, %c0_11] : memref<3x1x384xf32, #tpu.memory_space<vmem>>, vector<1x1x384xf32>
    %29 = vector.shape_cast %28 : vector<1x1x384xf32> to vector<1x384xf32>
    %30 = vector.broadcast %29 : vector<1x384xf32> to vector<8x384xf32>
    %31 = arith.addf %26, %30 : vector<8x384xf32>
    %32 = vector.extract_strided_slice %31 {offsets = [0, 0], sizes = [8, 128], strides = [1, 1]} : vector<8x384xf32> to vector<8x128xf32>
    %33 = arith.negf %32 : vector<8x128xf32>
    %34 = math.exp %33 : vector<8x128xf32>
    %cst_12 = arith.constant 1.000000e+00 : f32
    %35 = vector.broadcast %cst_12 : f32 to vector<8x128xf32>
    %36 = arith.addf %35, %34 : vector<8x128xf32>
    %37 = arith.divf %35, %36 : vector<8x128xf32>
    %38 = vector.extract_strided_slice %31 {offsets = [0, 128], sizes = [8, 128], strides = [1, 1]} : vector<8x384xf32> to vector<8x128xf32>
    %cst_13 = arith.constant 0.000000e+00 : f32
    %39 = vector.broadcast %cst_13 : f32 to vector<8x128xf32>
    %40 = arith.maximumf %38, %39 : vector<8x128xf32>
    %41 = vector.extract_strided_slice %31 {offsets = [0, 256], sizes = [8, 128], strides = [1, 1]} : vector<8x384xf32> to vector<8x128xf32>
    %42 = arith.subf %40, %41 : vector<8x128xf32>
    %43 = arith.mulf %37, %42 : vector<8x128xf32>
    %44 = arith.addf %41, %43 : vector<8x128xf32>
    %c2_i32 = arith.constant 2 : i32
    %45 = arith.index_cast %c2_i32 : i32 to index
    %c0_14 = arith.constant 0 : index
    %c0_15 = arith.constant 0 : index
    %46 = vector.load %arg2[%45, %c0_14, %c0_15] : memref<3x128x384xf32, #tpu.memory_space<vmem>>, vector<1x128x384xf32>
    %47 = vector.shape_cast %46 : vector<1x128x384xf32> to vector<128x384xf32>
    %cst_16 = arith.constant dense<0.000000e+00> : vector<8x384xf32>
    %48 = tpu.matmul %44, %47, %cst_16 {dimension_numbers = #tpu.dot_dimension_numbers<[1], [0], [0], [1], [0, 0, 1, 1], [], []>, precision = #tpu.contract_precision<fp32>} : vector<8x128xf32>, vector<128x384xf32>, vector<8x384xf32> -> vector<8x384xf32>
    %49 = arith.index_cast %c2_i32 : i32 to index
    %c0_17 = arith.constant 0 : index
    %c0_18 = arith.constant 0 : index
    %50 = vector.load %arg3[%49, %c0_17, %c0_18] : memref<3x1x384xf32, #tpu.memory_space<vmem>>, vector<1x1x384xf32>
    %51 = vector.shape_cast %50 : vector<1x1x384xf32> to vector<1x384xf32>
    %52 = vector.broadcast %51 : vector<1x384xf32> to vector<8x384xf32>
    %53 = arith.addf %48, %52 : vector<8x384xf32>
    %54 = vector.extract_strided_slice %53 {offsets = [0, 0], sizes = [8, 128], strides = [1, 1]} : vector<8x384xf32> to vector<8x128xf32>
    %55 = arith.negf %54 : vector<8x128xf32>
    %56 = math.exp %55 : vector<8x128xf32>
    %cst_19 = arith.constant 1.000000e+00 : f32
    %57 = vector.broadcast %cst_19 : f32 to vector<8x128xf32>
    %58 = arith.addf %57, %56 : vector<8x128xf32>
    %59 = arith.divf %57, %58 : vector<8x128xf32>
    %60 = vector.extract_strided_slice %53 {offsets = [0, 128], sizes = [8, 128], strides = [1, 1]} : vector<8x384xf32> to vector<8x128xf32>
    %cst_20 = arith.constant 0.000000e+00 : f32
    %61 = vector.broadcast %cst_20 : f32 to vector<8x128xf32>
    %62 = arith.maximumf %60, %61 : vector<8x128xf32>
    %63 = vector.extract_strided_slice %53 {offsets = [0, 256], sizes = [8, 128], strides = [1, 1]} : vector<8x384xf32> to vector<8x128xf32>
    %64 = arith.subf %62, %63 : vector<8x128xf32>
    %65 = arith.mulf %59, %64 : vector<8x128xf32>
    %66 = arith.addf %63, %65 : vector<8x128xf32>
    %c3_i32 = arith.constant 3 : i32
    %c0_21 = arith.constant 0 : index
    %c0_22 = arith.constant 0 : index
    %67 = vector.load %arg4[%c0_21, %c0_22] : memref<8x128xf32, #tpu.memory_space<vmem>>, vector<8x128xf32>
    tpu.vector_store %arg4[%c0_21, %c0_22], %66 {strides = array<i32>} : memref<8x128xf32, #tpu.memory_space<vmem>>, vector<8x128xf32>,
    return
  }
  func.func @transform_0(%arg0: i32) -> (i32, i32) {
    %c0_i32 = arith.constant 0 : i32
    %c0_i32_0 = arith.constant 0 : i32
    return %arg0, %c0_i32 : i32, i32
  }
  func.func @transform_1(%arg0: i32) -> (i32, i32, i32) {
    %c0_i32 = arith.constant 0 : i32
    %c0_i32_0 = arith.constant 0 : i32
    %c0_i32_1 = arith.constant 0 : i32
    %c0_i32_2 = arith.constant 0 : i32
    return %c0_i32, %c0_i32_0, %c0_i32_1 : i32, i32, i32
  }
  func.func @transform_2(%arg0: i32) -> (i32, i32, i32) {
    %c0_i32 = arith.constant 0 : i32
    %c0_i32_0 = arith.constant 0 : i32
    %c0_i32_1 = arith.constant 0 : i32
    %c0_i32_2 = arith.constant 0 : i32
    return %c0_i32, %c0_i32_0, %c0_i32_1 : i32, i32, i32
  }
  func.func @transform_3(%arg0: i32) -> (i32, i32) {
    %c0_i32 = arith.constant 0 : i32
    %c0_i32_0 = arith.constant 0 : i32
    return %arg0, %c0_i32 : i32, i32
  }
}

</mosaic_0001>

<llo_original>
// kernel: highway_forward.1
$region0: #{highway_forward.1}
  #allocation0 [shape = 'u32[]', space=smem, size = 0x4, offset = 0x4, fixed_abs, tag = 'smem constant byte address 0x4 - core index']
  #allocation1 [shape = 'u32[144,128]{1,0:T(1,128)}', space=vmem, size = 0x12000, scoped, tag = 'internal scratch']
  %s0 = inlined_call_operand.hbm [shape: f32[8,128], index: 0, kind: input, shape index: {}]
  %s1 = inlined_call_operand.hbm [shape: f32[3,128,384], index: 1, kind: input, shape index: {}]
  %s2 = inlined_call_operand.hbm [shape: f32[3,1,384], index: 2, kind: input, shape index: {}]
  %s3 = inlined_call_operand.hbm [shape: f32[8,128], index: 3, kind: output, shape index: {}]
  %s4 = sld [smem:[#allocation0]]
  $region34: #{highway_forward.1} parent=0
    _
  %s6 = ssub.s32 1, %s4
  %s7 = scalar_select 0, %s6, %s4
  $region1: #{highway_forward.1} parent=0
    #allocation2 [shape = 'u8[4096]{0}', space=vmem, size = 0x1000, scoped, tag = 'input window, operand 0, single buffered']
    #allocation3 [shape = 's32[1]{0}', space=sflag, size = 0x4, scoped, tag = 'scoped memory for highway_forward.1']
    #allocation4 [shape = 's32[1]{0}', space=sflag, size = 0x4, scoped, tag = 'scoped memory for highway_forward.1']
    #allocation5 [shape = 'u8[589824]{0}', space=vmem, size = 0x90000, scoped, tag = 'input window, operand 1, single buffered']
    #allocation6 [shape = 's32[1]{0}', space=sflag, size = 0x4, scoped, tag = 'scoped memory for highway_forward.1']
    #allocation7 [shape = 'u8[4608]{0}', space=vmem, size = 0x1400, scoped, tag = 'input window, operand 2, single buffered']
    #allocation8 [shape = 'u8[4096]{0}', space=vmem, size = 0x1000, scoped, tag = 'output window, operand 0, single buffered']
    %8 = vsyncpa [#allocation3], 0
    %9 = vsyncpa [#allocation6], 0
    %10 = vsyncpa [#allocation4], 0
    // Predicated region
    $region2: #{highway_forward.1} parent=1 // pred_check
      _
    $region3: #{highway_forward.1} parent=1 // pred_check_branch
      %12 = sbr.rel (0) target = $region5
    $region4: #{highway_forward.1} parent=1 // pred_region
      %s14 = ssub.s32 128, 128
      %15 = vsyncadd [#allocation3], %s14
      %s17 = sshll.u32 [#allocation2], 4
      %s18 = int_to_ptr.vmem [resolvable:$true] %s17
      %20 = dma.hbm_to_vmem [thread:$0]  %s0, 128, %s18, [#allocation3]
    $region5: #{highway_forward.1} parent=1 // pred_fallthru
      _
    // Predicated region
    $region6: #{highway_forward.1} parent=1 // pred_check
      _
    $region7: #{highway_forward.1} parent=1 // pred_check_branch
      %22 = sbr.rel (0) target = $region9
    $region8: #{highway_forward.1} parent=1 // pred_region
      %s24 = ssub.s32 18432, 18432
      %25 = vsyncadd [#allocation6], %s24
      %s26 = sshll.u32 [#allocation5], 4
      %s27 = int_to_ptr.vmem [resolvable:$true] %s26
      %32 = dma.hbm_to_vmem [thread:$0]  %s1, 18432, %s27, [#allocation6], 384, 384, 24
    $region9: #{highway_forward.1} parent=1 // pred_fallthru
      _
    // Predicated region
    $region10: #{highway_forward.1} parent=1 // pred_check
      _
    $region11: #{highway_forward.1} parent=1 // pred_check_branch
      %34 = sbr.rel (0) target = $region13
    $region12: #{highway_forward.1} parent=1 // pred_region
      %s36 = ssub.s32 144, 144
      %37 = vsyncadd [#allocation6], %s36
      %s38 = sshll.u32 [#allocation7], 4
      %s39 = int_to_ptr.vmem [resolvable:$true] %s38
      %44 = dma.hbm_to_vmem [thread:$0]  %s2, 144, %s39, [#allocation6], 48, 48, 3
    $region13: #{highway_forward.1} parent=1 // pred_fallthru
      _
    // Predicated region
    $region14: #{highway_forward.1} parent=1 // pred_check
      _
    $region15: #{highway_forward.1} parent=1 // pred_check_branch
      %46 = sbr.rel (0) target = $region17
    $region16: #{highway_forward.1} parent=1 // pred_region
      %47 = dma.done [#allocation3], 128
    $region17: #{highway_forward.1} parent=1 // pred_fallthru
      _
    // Predicated region
    $region18: #{highway_forward.1} parent=1 // pred_check
      _
    $region19: #{highway_forward.1} parent=1 // pred_check_branch
      %49 = sbr.rel (0) target = $region21
    $region20: #{highway_forward.1} parent=1 // pred_region
      %50 = dma.done [#allocation6], 18432
    $region21: #{highway_forward.1} parent=1 // pred_fallthru
      _
    // Predicated region
    $region22: #{highway_forward.1} parent=1 // pred_check
      _
    $region23: #{highway_forward.1} parent=1 // pred_check_branch
      %52 = sbr.rel (0) target = $region25
    $region24: #{highway_forward.1} parent=1 // pred_region
      %53 = dma.done [#allocation6], 144
    $region25: #{highway_forward.1} parent=1 // pred_fallthru
      _
    %v54 = vld [vmem:[#allocation2] sm:$0xff]
    %v55 = vld [vmem:[#allocation5] sm:$0xff]
    %v56 = vld [vmem:[#allocation5 + $0x8] sm:$0xff]
    %v57 = vld [vmem:[#allocation5 + $0x10] sm:$0xff]
    %v58 = vld [vmem:[#allocation5 + $0x18] sm:$0xff]
    %v59 = vld [vmem:[#allocation5 + $0x20] sm:$0xff]
    %v60 = vld [vmem:[#allocation5 + $0x28] sm:$0xff]
    %v61 = vld [vmem:[#allocation5 + $0x30] sm:$0xff]
    %v62 = vld [vmem:[#allocation5 + $0x38] sm:$0xff]
    %v63 = vld [vmem:[#allocation5 + $0x40] sm:$0xff]
    %v64 = vld [vmem:[#allocation5 + $0x48] sm:$0xff]
    %v65 = vld [vmem:[#allocation5 + $0x50] sm:$0xff]
    %v66 = vld [vmem:[#allocation5 + $0x58] sm:$0xff]
    %v67 = vld [vmem:[#allocation5 + $0x60] sm:$0xff]
    %v68 = vld [vmem:[#allocation5 + $0x68] sm:$0xff]
    %v69 = vld [vmem:[#allocation5 + $0x70] sm:$0xff]
    %v70 = vld [vmem:[#allocation5 + $0x78] sm:$0xff]
    %v71 = vld [vmem:[#allocation5 + $0x80] sm:$0xff]
    %v72 = vld [vmem:[#allocation5 + $0x88] sm:$0xff]
    %v73 = vld [vmem:[#allocation5 + $0x90] sm:$0xff]
    %v74 = vld [vmem:[#allocation5 + $0x98] sm:$0xff]
    %v75 = vld [vmem:[#allocation5 + $0xa0] sm:$0xff]
    %v76 = vld [vmem:[#allocation5 + $0xa8] sm:$0xff]
    %v77 = vld [vmem:[#allocation5 + $0xb0] sm:$0xff]
    %v78 = vld [vmem:[#allocation5 + $0xb8] sm:$0xff]
    %v79 = vld [vmem:[#allocation5 + $0xc0] sm:$0xff]
    %v80 = vld [vmem:[#allocation5 + $0xc8] sm:$0xff]
    %v81 = vld [vmem:[#allocation5 + $0xd0] sm:$0xff]
    %v82 = vld [vmem:[#allocation5 + $0xd8] sm:$0xff]
    %v83 = vld [vmem:[#allocation5 + $0xe0] sm:$0xff]
    %v84 = vld [vmem:[#allocation5 + $0xe8] sm:$0xff]
    %v85 = vld [vmem:[#allocation5 + $0xf0] sm:$0xff]
    %v86 = vld [vmem:[#allocation5 + $0xf8] sm:$0xff]
    %v87 = vld [vmem:[#allocation5 + $0x100] sm:$0xff]
    %v88 = vld [vmem:[#allocation5 + $0x108] sm:$0xff]
    %v89 = vld [vmem:[#allocation5 + $0x110] sm:$0xff]
    %v90 = vld [vmem:[#allocation5 + $0x118] sm:$0xff]
    %v91 = vld [vmem:[#allocation5 + $0x120] sm:$0xff]
    %v92 = vld [vmem:[#allocation5 + $0x128] sm:$0xff]
    %v93 = vld [vmem:[#allocation5 + $0x130] sm:$0xff]
    %v94 = vld [vmem:[#allocation5 + $0x138] sm:$0xff]
    %v95 = vld [vmem:[#allocation5 + $0x140] sm:$0xff]
    %v96 = vld [vmem:[#allocation5 + $0x148] sm:$0xff]
    %v97 = vld [vmem:[#allocation5 + $0x150] sm:$0xff]
    %v98 = vld [vmem:[#allocation5 + $0x158] sm:$0xff]
    %v99 = vld [vmem:[#allocation5 + $0x160] sm:$0xff]
    %v100 = vld [vmem:[#allocation5 + $0x168] sm:$0xff]
    %v101 = vld [vmem:[#allocation5 + $0x170] sm:$0xff]
    %v102 = vld [vmem:[#allocation5 + $0x178] sm:$0xff]
    %v103 = vld [vmem:[#allocation7] sm:$0x7]
    %v105 = vlaneseq
    %v106 = vshrl.u32 %v105, 7
    %v107 = vsub.s32 0, %v106
    %v108 = vrot.slane %v103, %v107
    %v109 = vlaneseq
    %v110 = vshrl.u32 %v109, 7
    %v111 = vsub.s32 1, %v110
    %v112 = vrot.slane %v103, %v111
    %v113 = vlaneseq
    %v114 = vshrl.u32 %v113, 7
    %v115 = vsub.s32 2, %v114
    %v116 = vrot.slane %v103, %v115
    %v120 = vand.u32 %v56, 4294901760
    %121 = vmatprep.subr.mxu0 %v120
    %v122 = vand.u32 %v55, 4294901760
    %123 = vmatpush1.msra.mxu0 %v122
    %v124 = vand.u32 %v59, 4294901760
    %125 = vmatprep.subr.mxu0 %v124
    %v126 = vand.u32 %v58, 4294901760
    %127 = vmatpush1.msra.mxu0 %v126
    %v128 = vand.u32 %v62, 4294901760
    %129 = vmatprep.subr.mxu0 %v128
    %v130 = vand.u32 %v61, 4294901760
    %131 = vmatpush1.msra.mxu0 %v130
    %v132 = vand.u32 %v65, 4294901760
    %133 = vmatprep.subr.mxu0 %v132
    %v134 = vand.u32 %v64, 4294901760
    %135 = vmatpush1.msra.mxu0 %v134
    %v136 = vand.u32 %v68, 4294901760
    %137 = vmatprep.subr.mxu0 %v136
    %v138 = vand.u32 %v67, 4294901760
    %139 = vmatpush1.msra.mxu0 %v138
    %v140 = vand.u32 %v71, 4294901760
    %141 = vmatprep.subr.mxu0 %v140
    %v142 = vand.u32 %v70, 4294901760
    %143 = vmatpush1.msra.mxu0 %v142
    %v144 = vand.u32 %v74, 4294901760
    %145 = vmatprep.subr.mxu0 %v144
    %v146 = vand.u32 %v73, 4294901760
    %147 = vmatpush1.msra.mxu0 %v146
    %v148 = vand.u32 %v77, 4294901760
    %149 = vmatprep.subr.mxu0 %v148
    %v150 = vand.u32 %v76, 4294901760
    %151 = vmatpush1.msra.mxu0 %v150
    %v152 = vand.u32 %v80, 4294901760
    %153 = vmatprep.subr.mxu0 %v152
    %v154 = vand.u32 %v79, 4294901760
    %155 = vmatpush1.msra.mxu0 %v154
    %v156 = vand.u32 %v83, 4294901760
    %157 = vmatprep.subr.mxu0 %v156
    %v158 = vand.u32 %v82, 4294901760
    %159 = vmatpush1.msra.mxu0 %v158
    %v160 = vand.u32 %v86, 4294901760
    %161 = vmatprep.subr.mxu0 %v160
    %v162 = vand.u32 %v85, 4294901760
    %163 = vmatpush1.msra.mxu0 %v162
    %v164 = vand.u32 %v89, 4294901760
    %165 = vmatprep.subr.mxu0 %v164
    %v166 = vand.u32 %v88, 4294901760
    %167 = vmatpush1.msra.mxu0 %v166
    %v168 = vand.u32 %v92, 4294901760
    %169 = vmatprep.subr.mxu0 %v168
    %v170 = vand.u32 %v91, 4294901760
    %171 = vmatpush1.msra.mxu0 %v170
    %v172 = vand.u32 %v95, 4294901760
    %173 = vmatprep.subr.mxu0 %v172
    %v174 = vand.u32 %v94, 4294901760
    %175 = vmatpush1.msra.mxu0 %v174
    %v176 = vand.u32 %v98, 4294901760
    %177 = vmatprep.subr.mxu0 %v176
    %v178 = vand.u32 %v97, 4294901760
    %179 = vmatpush1.msra.mxu0 %v178
    %v180 = vand.u32 %v101, 4294901760
    %181 = vmatprep.subr.mxu0 %v180
    %v182 = vand.u32 %v100, 4294901760
    %183 = vmatpush1.msra.mxu0 %v182
    %184 = vmatprep.subr.mxu0 0.0
    %185 = vmatpush1.msra.mxu0 0.0
    %186 = vmatprep.subr.mxu0 0.0
    %187 = vmatpush1.msra.mxu0 0.0
    %188 = vmatprep.subr.mxu0 0.0
    %189 = vmatpush1.msra.mxu0 0.0
    %190 = vmatprep.subr.mxu0 0.0
    %191 = vmatpush1.msra.mxu0 0.0
    %192 = vmatprep.subr.mxu0 0.0
    %193 = vmatpush1.msra.mxu0 0.0
    %194 = vmatprep.subr.mxu0 0.0
    %195 = vmatpush1.msra.mxu0 0.0
    %196 = vmatprep.subr.mxu0 0.0
    %197 = vmatpush1.msra.mxu0 0.0
    %198 = vmatprep.subr.mxu0 0.0
    %199 = vmatpush1.msra.mxu0 0.0
    %200 = vmatprep.subr.mxu0 0.0
    %201 = vmatpush1.msra.mxu0 0.0
    %202 = vmatprep.subr.mxu0 0.0
    %203 = vmatpush1.msra.mxu0 0.0
    %204 = vmatprep.subr.mxu0 0.0
    %205 = vmatpush1.msra.mxu0 0.0
    %206 = vmatprep.subr.mxu0 0.0
    %207 = vmatpush1.msra.mxu0 0.0
    %208 = vmatprep.subr.mxu0 0.0
    %209 = vmatpush1.msra.mxu0 0.0
    %210 = vmatprep.subr.mxu0 0.0
    %211 = vmatpush1.msra.mxu0 0.0
    %212 = vmatprep.subr.mxu0 0.0
    %213 = vmatpush1.msra.mxu0 0.0
    %214 = vmatprep.subr.mxu0 0.0
    %215 = vmatpush1.msra.mxu0 0.0
    %216 = vmatprep.mubr.f32.mxu0 0.0
    %v217 = vand.u32 %v54, 4294901760
    %v218 = vsub.f32 %v54, %v217
    %v219 = vand.u32 %v218, 4294901760
    %v220 = vsub.f32 %v218, %v219
    %v221 = vand.u32 %v220, 4294901760
    %222 = vmatmul.mubr.f32.gmra.mrb[0].mxu0 %v221
    %v223 = vpop.f32.mrb[0].mxu0
    %v224 = vadd.f32 %v108, %v223
    %v225 = vpop.f32.mrb[0].mxu0
    %v226 = vadd.f32 %v112, %v225
    %227 = vdwg.mxu0
    %v228 = vand.u32 %v56, 4294901760
    %v229 = vsub.f32 %v56, %v228
    %v230 = vand.u32 %v229, 4294901760
    %v231 = vsub.f32 %v229, %v230
    %v232 = vand.u32 %v231, 4294901760
    %233 = vmatprep.subr.mxu0 %v232
    %v234 = vand.u32 %v55, 4294901760
    %v235 = vsub.f32 %v55, %v234
    %v236 = vand.u32 %v235, 4294901760
    %v237 = vsub.f32 %v235, %v236
    %v238 = vand.u32 %v237, 4294901760
    %239 = vmatpush1.msra.mxu0 %v238
    %v240 = vand.u32 %v59, 4294901760
    %v241 = vsub.f32 %v59, %v240
    %v242 = vand.u32 %v241, 4294901760
    %v243 = vsub.f32 %v241, %v242
    %v244 = vand.u32 %v243, 4294901760
    %245 = vmatprep.subr.mxu0 %v244
    %v246 = vand.u32 %v58, 4294901760
    %v247 = vsub.f32 %v58, %v246
    %v248 = vand.u32 %v247, 4294901760
    %v249 = vsub.f32 %v247, %v248
    %v250 = vand.u32 %v249, 4294901760
    %251 = vmatpush1.msra.mxu0 %v250
    %v252 = vand.u32 %v62, 4294901760
    %v253 = vsub.f32 %v62, %v252
    %v254 = vand.u32 %v253, 4294901760
    %v255 = vsub.f32 %v253, %v254
    %v256 = vand.u32 %v255, 4294901760
    %257 = vmatprep.subr.mxu0 %v256
    %v258 = vand.u32 %v61, 4294901760
    %v259 = vsub.f32 %v61, %v258
    %v260 = vand.u32 %v259, 4294901760
    %v261 = vsub.f32 %v259, %v260
    %v262 = vand.u32 %v261, 4294901760
    %263 = vmatpush1.msra.mxu0 %v262
    %v264 = vand.u32 %v65, 4294901760
    %v265 = vsub.f32 %v65, %v264
    %v266 = vand.u32 %v265, 4294901760
    %v267 = vsub.f32 %v265, %v266
    %v268 = vand.u32 %v267, 4294901760
    %269 = vmatprep.subr.mxu0 %v268
    %v270 = vand.u32 %v64, 4294901760
    %v271 = vsub.f32 %v64, %v270
    %v272 = vand.u32 %v271, 4294901760
    %v273 = vsub.f32 %v271, %v272
    %v274 = vand.u32 %v273, 4294901760
    %275 = vmatpush1.msra.mxu0 %v274
    %v276 = vand.u32 %v68, 4294901760
    %v277 = vsub.f32 %v68, %v276
    %v278 = vand.u32 %v277, 4294901760
    %v279 = vsub.f32 %v277, %v278
    %v280 = vand.u32 %v279, 4294901760
    %281 = vmatprep.subr.mxu0 %v280
    %v282 = vand.u32 %v67, 4294901760
    %v283 = vsub.f32 %v67, %v282
    %v284 = vand.u32 %v283, 4294901760
    %v285 = vsub.f32 %v283, %v284
    %v286 = vand.u32 %v285, 4294901760
    %287 = vmatpush1.msra.mxu0 %v286
    %v288 = vand.u32 %v71, 4294901760
    %v289 = vsub.f32 %v71, %v288
    %v290 = vand.u32 %v289, 4294901760
    %v291 = vsub.f32 %v289, %v290
    %v292 = vand.u32 %v291, 4294901760
    %293 = vmatprep.subr.mxu0 %v292
    %v294 = vand.u32 %v70, 4294901760
    %v295 = vsub.f32 %v70, %v294
    %v296 = vand.u32 %v295, 4294901760
    %v297 = vsub.f32 %v295, %v296
    %v298 = vand.u32 %v297, 4294901760
    %299 = vmatpush1.msra.mxu0 %v298
    %v300 = vand.u32 %v74, 4294901760
    %v301 = vsub.f32 %v74, %v300
    %v302 = vand.u32 %v301, 4294901760
    %v303 = vsub.f32 %v301, %v302
    %v304 = vand.u32 %v303, 4294901760
    %305 = vmatprep.subr.mxu0 %v304
    %v306 = vand.u32 %v73, 4294901760
    %v307 = vsub.f32 %v73, %v306
    %v308 = vand.u32 %v307, 4294901760
    %v309 = vsub.f32 %v307, %v308
    %v310 = vand.u32 %v309, 4294901760
    %311 = vmatpush1.msra.mxu0 %v310
    %v312 = vand.u32 %v77, 4294901760
    %v313 = vsub.f32 %v77, %v312
    %v314 = vand.u32 %v313, 4294901760
    %v315 = vsub.f32 %v313, %v314
    %v316 = vand.u32 %v315, 4294901760
    %317 = vmatprep.subr.mxu0 %v316
    %v318 = vand.u32 %v76, 4294901760
    %v319 = vsub.f32 %v76, %v318
    %v320 = vand.u32 %v319, 4294901760
    %v321 = vsub.f32 %v319, %v320
    %v322 = vand.u32 %v321, 4294901760
    %323 = vmatpush1.msra.mxu0 %v322
    %v324 = vand.u32 %v80, 4294901760
    %v325 = vsub.f32 %v80, %v324
    %v326 = vand.u32 %v325, 4294901760
    %v327 = vsub.f32 %v325, %v326
    %v328 = vand.u32 %v327, 4294901760
    %329 = vmatprep.subr.mxu0 %v328
    %v330 = vand.u32 %v79, 4294901760
    %v331 = vsub.f32 %v79, %v330
    %v332 = vand.u32 %v331, 4294901760
    %v333 = vsub.f32 %v331, %v332
    %v334 = vand.u32 %v333, 4294901760
    %335 = vmatpush1.msra.mxu0 %v334
    %v336 = vand.u32 %v83, 4294901760
    %v337 = vsub.f32 %v83, %v336
    %v338 = vand.u32 %v337, 4294901760
    %v339 = vsub.f32 %v337, %v338
    %v340 = vand.u32 %v339, 4294901760
    %341 = vmatprep.subr.mxu0 %v340
    %v342 = vand.u32 %v82, 4294901760
    %v343 = vsub.f32 %v82, %v342
    %v344 = vand.u32 %v343, 4294901760
    %v345 = vsub.f32 %v343, %v344
    %v346 = vand.u32 %v345, 4294901760
    %347 = vmatpush1.msra.mxu0 %v346
    %v348 = vand.u32 %v86, 4294901760
    %v349 = vsub.f32 %v86, %v348
    %v350 = vand.u32 %v349, 4294901760
    %v351 = vsub.f32 %v349, %v350
    %v352 = vand.u32 %v351, 4294901760
    %353 = vmatprep.subr.mxu0 %v352
    %v354 = vand.u32 %v85, 4294901760
    %v355 = vsub.f32 %v85, %v354
    %v356 = vand.u32 %v355, 4294901760
    %v357 = vsub.f32 %v355, %v356
    %v358 = vand.u32 %v357, 4294901760
    %359 = vmatpush1.msra.mxu0 %v358
    %v360 = vand.u32 %v89, 4294901760
    %v361 = vsub.f32 %v89, %v360
    %v362 = vand.u32 %v361, 4294901760
    %v363 = vsub.f32 %v361, %v362
    %v364 = vand.u32 %v363, 4294901760
    %365 = vmatprep.subr.mxu0 %v364
    %v366 = vand.u32 %v88, 4294901760
    %v367 = vsub.f32 %v88, %v366
    %v368 = vand.u32 %v367, 4294901760
    %v369 = vsub.f32 %v367, %v368
    %v370 = vand.u32 %v369, 4294901760
    %371 = vmatpush1.msra.mxu0 %v370
    %v372 = vand.u32 %v92, 4294901760
    %v373 = vsub.f32 %v92, %v372
    %v374 = vand.u32 %v373, 4294901760
    %v375 = vsub.f32 %v373, %v374
    %v376 = vand.u32 %v375, 4294901760
    %377 = vmatprep.subr.mxu0 %v376
    %v378 = vand.u32 %v91, 4294901760
    %v379 = vsub.f32 %v91, %v378
    %v380 = vand.u32 %v379, 4294901760
    %v381 = vsub.f32 %v379, %v380
    %v382 = vand.u32 %v381, 4294901760
    %383 = vmatpush1.msra.mxu0 %v382
    %v384 = vand.u32 %v95, 4294901760
    %v385 = vsub.f32 %v95, %v384
    %v386 = vand.u32 %v385, 4294901760
    %v387 = vsub.f32 %v385, %v386
    %v388 = vand.u32 %v387, 4294901760
    %389 = vmatprep.subr.mxu0 %v388
    %v390 = vand.u32 %v94, 4294901760
    %v391 = vsub.f32 %v94, %v390
    %v392 = vand.u32 %v391, 4294901760
    %v393 = vsub.f32 %v391, %v392
    %v394 = vand.u32 %v393, 4294901760
    %395 = vmatpush1.msra.mxu0 %v394
    %v396 = vand.u32 %v98, 4294901760
    %v397 = vsub.f32 %v98, %v396
    %v398 = vand.u32 %v397, 4294901760
    %v399 = vsub.f32 %v397, %v398
    %v400 = vand.u32 %v399, 4294901760
    %401 = vmatprep.subr.mxu0 %v400
    %v402 = vand.u32 %v97, 4294901760
    %v403 = vsub.f32 %v97, %v402
    %v404 = vand.u32 %v403, 4294901760
    %v405 = vsub.f32 %v403, %v404
    %v406 = vand.u32 %v405, 4294901760
    %407 = vmatpush1.msra.mxu0 %v406
    %v408 = vand.u32 %v101, 4294901760
    %v409 = vsub.f32 %v101, %v408
    %v410 = vand.u32 %v409, 4294901760
    %v411 = vsub.f32 %v409, %v410
    %v412 = vand.u32 %v411, 4294901760
    %413 = vmatprep.subr.mxu0 %v412
    %v414 = vand.u32 %v100, 4294901760
    %v415 = vsub.f32 %v100, %v414
    %v416 = vand.u32 %v415, 4294901760
    %v417 = vsub.f32 %v415, %v416
    %v418 = vand.u32 %v417, 4294901760
    %419 = vmatpush1.msra.mxu0 %v418
    %420 = vmatprep.subr.mxu0 0.0
    %421 = vmatpush1.msra.mxu0 0.0
    %422 = vmatprep.subr.mxu0 0.0
    %423 = vmatpush1.msra.mxu0 0.0
    %424 = vmatprep.subr.mxu0 0.0
    %425 = vmatpush1.msra.mxu0 0.0
    %426 = vmatprep.subr.mxu0 0.0
    %427 = vmatpush1.msra.mxu0 0.0
    %428 = vmatprep.subr.mxu0 0.0
    %429 = vmatpush1.msra.mxu0 0.0
    %430 = vmatprep.subr.mxu0 0.0
    %431 = vmatpush1.msra.mxu0 0.0
    %432 = vmatprep.subr.mxu0 0.0
    %433 = vmatpush1.msra.mxu0 0.0
    %434 = vmatprep.subr.mxu0 0.0
    %435 = vmatpush1.msra.mxu0 0.0
    %436 = vmatprep.subr.mxu0 0.0
    %437 = vmatpush1.msra.mxu0 0.0
    %438 = vmatprep.subr.mxu0 0.0
    %439 = vmatpush1.msra.mxu0 0.0
    %440 = vmatprep.subr.mxu0 0.0
    %441 = vmatpush1.msra.mxu0 0.0
    %442 = vmatprep.subr.mxu0 0.0
    %443 = vmatpush1.msra.mxu0 0.0
    %444 = vmatprep.subr.mxu0 0.0
    %445 = vmatpush1.msra.mxu0 0.0
    %446 = vmatprep.subr.mxu0 0.0
    %447 = vmatpush1.msra.mxu0 0.0
    %448 = vmatprep.subr.mxu0 0.0
    %449 = vmatpush1.msra.mxu0 0.0
    %450 = vmatprep.subr.mxu0 0.0
    %451 = vmatpush1.msra.mxu0 0.0
    %452 = vmatprep.mubr.f32.mxu0 0.0
    %v453 = vand.u32 %v54, 4294901760
    %454 = vmatmul.mubr.f32.gmra.mrb[0].mxu0 %v453
    %v455 = vpop.f32.mrb[0].mxu0
    %v456 = vadd.f32 %v224, %v455
    %v457 = vpop.f32.mrb[0].mxu0
    %v458 = vadd.f32 %v226, %v457
    %459 = vdwg.mxu0
    %v460 = vand.u32 %v56, 4294901760
    %v461 = vsub.f32 %v56, %v460
    %462 = vmatprep.subr.mxu0 %v461
    %v463 = vand.u32 %v55, 4294901760
    %v464 = vsub.f32 %v55, %v463
    %465 = vmatpush1.msra.mxu0 %v464
    %v466 = vand.u32 %v59, 4294901760
    %v467 = vsub.f32 %v59, %v466
    %468 = vmatprep.subr.mxu0 %v467
    %v469 = vand.u32 %v58, 4294901760
    %v470 = vsub.f32 %v58, %v469
    %471 = vmatpush1.msra.mxu0 %v470
    %v472 = vand.u32 %v62, 4294901760
    %v473 = vsub.f32 %v62, %v472
    %474 = vmatprep.subr.mxu0 %v473
    %v475 = vand.u32 %v61, 4294901760
    %v476 = vsub.f32 %v61, %v475
    %477 = vmatpush1.msra.mxu0 %v476
    %v478 = vand.u32 %v65, 4294901760
    %v479 = vsub.f32 %v65, %v478
    %480 = vmatprep.subr.mxu0 %v479
    %v481 = vand.u32 %v64, 4294901760
    %v482 = vsub.f32 %v64, %v481
    %483 = vmatpush1.msra.mxu0 %v482
    %v484 = vand.u32 %v68, 4294901760
    %v485 = vsub.f32 %v68, %v484
    %486 = vmatprep.subr.mxu0 %v485
    %v487 = vand.u32 %v67, 4294901760
    %v488 = vsub.f32 %v67, %v487
    %489 = vmatpush1.msra.mxu0 %v488
    %v490 = vand.u32 %v71, 4294901760
    %v491 = vsub.f32 %v71, %v490
    %492 = vmatprep.subr.mxu0 %v491
    %v493 = vand.u32 %v70, 4294901760
    %v494 = vsub.f32 %v70, %v493
    %495 = vmatpush1.msra.mxu0 %v494
    %v496 = vand.u32 %v74, 4294901760
    %v497 = vsub.f32 %v74, %v496
    %498 = vmatprep.subr.mxu0 %v497
    %v499 = vand.u32 %v73, 4294901760
    %v500 = vsub.f32 %v73, %v499
    %501 = vmatpush1.msra.mxu0 %v500
    %v502 = vand.u32 %v77, 4294901760
    %v503 = vsub.f32 %v77, %v502
    %504 = vmatprep.subr.mxu0 %v503
    %v505 = vand.u32 %v76, 4294901760
    %v506 = vsub.f32 %v76, %v505
    %507 = vmatpush1.msra.mxu0 %v506
    %v508 = vand.u32 %v80, 4294901760
    %v509 = vsub.f32 %v80, %v508
    %510 = vmatprep.subr.mxu0 %v509
    %v511 = vand.u32 %v79, 4294901760
    %v512 = vsub.f32 %v79, %v511
    %513 = vmatpush1.msra.mxu0 %v512
    %v514 = vand.u32 %v83, 4294901760
    %v515 = vsub.f32 %v83, %v514
    %516 = vmatprep.subr.mxu0 %v515
    %v517 = vand.u32 %v82, 4294901760
    %v518 = vsub.f32 %v82, %v517
    %519 = vmatpush1.msra.mxu0 %v518
    %v520 = vand.u32 %v86, 4294901760
    %v521 = vsub.f32 %v86, %v520
    %522 = vmatprep.subr.mxu0 %v521
    %v523 = vand.u32 %v85, 4294901760
    %v524 = vsub.f32 %v85, %v523
    %525 = vmatpush1.msra.mxu0 %v524
    %v526 = vand.u32 %v89, 4294901760
    %v527 = vsub.f32 %v89, %v526
    %528 = vmatprep.subr.mxu0 %v527
    %v529 = vand.u32 %v88, 4294901760
    %v530 = vsub.f32 %v88, %v529
    %531 = vmatpush1.msra.mxu0 %v530
    %v532 = vand.u32 %v92, 4294901760
    %v533 = vsub.f32 %v92, %v532
    %534 = vmatprep.subr.mxu0 %v533
    %v535 = vand.u32 %v91, 4294901760
    %v536 = vsub.f32 %v91, %v535
    %537 = vmatpush1.msra.mxu0 %v536
    %v538 = vand.u32 %v95, 4294901760
    %v539 = vsub.f32 %v95, %v538
    %540 = vmatprep.subr.mxu0 %v539
    %v541 = vand.u32 %v94, 4294901760
    %v542 = vsub.f32 %v94, %v541
    %543 = vmatpush1.msra.mxu0 %v542
    %v544 = vand.u32 %v98, 4294901760
    %v545 = vsub.f32 %v98, %v544
    %546 = vmatprep.subr.mxu0 %v545
    %v547 = vand.u32 %v97, 4294901760
    %v548 = vsub.f32 %v97, %v547
    %549 = vmatpush1.msra.mxu0 %v548
    %v550 = vand.u32 %v101, 4294901760
    %v551 = vsub.f32 %v101, %v550
    %552 = vmatprep.subr.mxu0 %v551
    %v553 = vand.u32 %v100, 4294901760
    %v554 = vsub.f32 %v100, %v553
    %555 = vmatpush1.msra.mxu0 %v554
    %556 = vmatprep.subr.mxu0 0.0
    %557 = vmatpush1.msra.mxu0 0.0
    %558 = vmatprep.subr.mxu0 0.0
    %559 = vmatpush1.msra.mxu0 0.0
    %560 = vmatprep.subr.mxu0 0.0
    %561 = vmatpush1.msra.mxu0 0.0
    %562 = vmatprep.subr.mxu0 0.0
    %563 = vmatpush1.msra.mxu0 0.0
    %564 = vmatprep.subr.mxu0 0.0
    %565 = vmatpush1.msra.mxu0 0.0
    %566 = vmatprep.subr.mxu0 0.0
    %567 = vmatpush1.msra.mxu0 0.0
    %568 = vmatprep.subr.mxu0 0.0
    %569 = vmatpush1.msra.mxu0 0.0
    %570 = vmatprep.subr.mxu0 0.0
    %571 = vmatpush1.msra.mxu0 0.0
    %572 = vmatprep.subr.mxu0 0.0
    %573 = vmatpush1.msra.mxu0 0.0
    %574 = vmatprep.subr.mxu0 0.0
    %575 = vmatpush1.msra.mxu0 0.0
    %576 = vmatprep.subr.mxu0 0.0
    %577 = vmatpush1.msra.mxu0 0.0
    %578 = vmatprep.subr.mxu0 0.0
    %579 = vmatpush1.msra.mxu0 0.0
    %580 = vmatprep.subr.mxu0 0.0
    %581 = vmatpush1.msra.mxu0 0.0
    %582 = vmatprep.subr.mxu0 0.0
    %583 = vmatpush1.msra.mxu0 0.0
    %584 = vmatprep.subr.mxu0 0.0
    %585 = vmatpush1.msra.mxu0 0.0
    %586 = vmatprep.subr.mxu0 0.0
    %587 = vmatpush1.msra.mxu0 0.0
    %588 = vmatprep.mubr.f32.mxu0 0.0
    %v589 = vand.u32 %v54, 4294901760
    %v590 = vsub.f32 %v54, %v589
    %591 = vmatmul.mubr.f32.gmra.mrb[0].mxu0 %v590
    %v592 = vpop.f32.mrb[0].mxu0
    %v593 = vadd.f32 %v456, %v592
    %v594 = vpop.f32.mrb[0].mxu0
    %v595 = vadd.f32 %v458, %v594
    %596 = vdwg.mxu0
    %v597 = vand.u32 %v56, 4294901760
    %598 = vmatprep.subr.mxu0 %v597
    %v599 = vand.u32 %v55, 4294901760
    %600 = vmatpush1.msra.mxu0 %v599
    %v601 = vand.u32 %v59, 4294901760
    %602 = vmatprep.subr.mxu0 %v601
    %v603 = vand.u32 %v58, 4294901760
    %604 = vmatpush1.msra.mxu0 %v603
    %v605 = vand.u32 %v62, 4294901760
    %606 = vmatprep.subr.mxu0 %v605
    %v607 = vand.u32 %v61, 4294901760
    %608 = vmatpush1.msra.mxu0 %v607
    %v609 = vand.u32 %v65, 4294901760
    %610 = vmatprep.subr.mxu0 %v609
    %v611 = vand.u32 %v64, 4294901760
    %612 = vmatpush1.msra.mxu0 %v611
    %v613 = vand.u32 %v68, 4294901760
    %614 = vmatprep.subr.mxu0 %v613
    %v615 = vand.u32 %v67, 4294901760
    %616 = vmatpush1.msra.mxu0 %v615
    %v617 = vand.u32 %v71, 4294901760
    %618 = vmatprep.subr.mxu0 %v617
    %v619 = vand.u32 %v70, 4294901760
    %620 = vmatpush1.msra.mxu0 %v619
    %v621 = vand.u32 %v74, 4294901760
    %622 = vmatprep.subr.mxu0 %v621
    %v623 = vand.u32 %v73, 4294901760
    %624 = vmatpush1.msra.mxu0 %v623
    %v625 = vand.u32 %v77, 4294901760
    %626 = vmatprep.subr.mxu0 %v625
    %v627 = vand.u32 %v76, 4294901760
    %628 = vmatpush1.msra.mxu0 %v627
    %v629 = vand.u32 %v80, 4294901760
    %630 = vmatprep.subr.mxu0 %v629
    %v631 = vand.u32 %v79, 4294901760
    %632 = vmatpush1.msra.mxu0 %v631
    %v633 = vand.u32 %v83, 4294901760
    %634 = vmatprep.subr.mxu0 %v633
    %v635 = vand.u32 %v82, 4294901760
    %636 = vmatpush1.msra.mxu0 %v635
    %v637 = vand.u32 %v86, 4294901760
    %638 = vmatprep.subr.mxu0 %v637
    %v639 = vand.u32 %v85, 4294901760
    %640 = vmatpush1.msra.mxu0 %v639
    %v641 = vand.u32 %v89, 4294901760
    %642 = vmatprep.subr.mxu0 %v641
    %v643 = vand.u32 %v88, 4294901760
    %644 = vmatpush1.msra.mxu0 %v643
    %v645 = vand.u32 %v92, 4294901760
    %646 = vmatprep.subr.mxu0 %v645
    %v647 = vand.u32 %v91, 4294901760
    %648 = vmatpush1.msra.mxu0 %v647
    %v649 = vand.u32 %v95, 4294901760
    %650 = vmatprep.subr.mxu0 %v649
    %v651 = vand.u32 %v94, 4294901760
    %652 = vmatpush1.msra.mxu0 %v651
    %v653 = vand.u32 %v98, 4294901760
    %654 = vmatprep.subr.mxu0 %v653
    %v655 = vand.u32 %v97, 4294901760
    %656 = vmatpush1.msra.mxu0 %v655
    %v657 = vand.u32 %v101, 4294901760
    %658 = vmatprep.subr.mxu0 %v657
    %v659 = vand.u32 %v100, 4294901760
    %660 = vmatpush1.msra.mxu0 %v659
    %661 = vmatprep.subr.mxu0 0.0
    %662 = vmatpush1.msra.mxu0 0.0
    %663 = vmatprep.subr.mxu0 0.0
    %664 = vmatpush1.msra.mxu0 0.0
    %665 = vmatprep.subr.mxu0 0.0
    %666 = vmatpush1.msra.mxu0 0.0
    %667 = vmatprep.subr.mxu0 0.0
    %668 = vmatpush1.msra.mxu0 0.0
    %669 = vmatprep.subr.mxu0 0.0
    %670 = vmatpush1.msra.mxu0 0.0
    %671 = vmatprep.subr.mxu0 0.0
    %672 = vmatpush1.msra.mxu0 0.0
    %673 = vmatprep.subr.mxu0 0.0
    %674 = vmatpush1.msra.mxu0 0.0
    %675 = vmatprep.subr.mxu0 0.0
    %676 = vmatpush1.msra.mxu0 0.0
    %677 = vmatprep.subr.mxu0 0.0
    %678 = vmatpush1.msra.mxu0 0.0
    %679 = vmatprep.subr.mxu0 0.0
    %680 = vmatpush1.msra.mxu0 0.0
    %681 = vmatprep.subr.mxu0 0.0
    %682 = vmatpush1.msra.mxu0 0.0
    %683 = vmatprep.subr.mxu0 0.0
    %684 = vmatpush1.msra.mxu0 0.0
    %685 = vmatprep.subr.mxu0 0.0
    %686 = vmatpush1.msra.mxu0 0.0
    %687 = vmatprep.subr.mxu0 0.0
    %688 = vmatpush1.msra.mxu0 0.0
    %689 = vmatprep.subr.mxu0 0.0
    %690 = vmatpush1.msra.mxu0 0.0
    %691 = vmatprep.subr.mxu0 0.0
    %692 = vmatpush1.msra.mxu0 0.0
    %693 = vmatprep.mubr.f32.mxu0 0.0
    %v694 = vand.u32 %v54, 4294901760
    %v695 = vsub.f32 %v54, %v694
    %v696 = vand.u32 %v695, 4294901760
    %697 = vmatmul.mubr.f32.gmra.mrb[0].mxu0 %v696
    %v698 = vpop.f32.mrb[0].mxu0
    %v699 = vadd.f32 %v593, %v698
    %v700 = vpop.f32.mrb[0].mxu0
    %v701 = vadd.f32 %v595, %v700
    %702 = vdwg.mxu0
    %v703 = vand.u32 %v56, 4294901760
    %v704 = vsub.f32 %v56, %v703
    %v705 = vand.u32 %v704, 4294901760
    %706 = vmatprep.subr.mxu0 %v705
    %v707 = vand.u32 %v55, 4294901760
    %v708 = vsub.f32 %v55, %v707
    %v709 = vand.u32 %v708, 4294901760
    %710 = vmatpush1.msra.mxu0 %v709
    %v711 = vand.u32 %v59, 4294901760
    %v712 = vsub.f32 %v59, %v711
    %v713 = vand.u32 %v712, 4294901760
    %714 = vmatprep.subr.mxu0 %v713
    %v715 = vand.u32 %v58, 4294901760
    %v716 = vsub.f32 %v58, %v715
    %v717 = vand.u32 %v716, 4294901760
    %718 = vmatpush1.msra.mxu0 %v717
    %v719 = vand.u32 %v62, 4294901760
    %v720 = vsub.f32 %v62, %v719
    %v721 = vand.u32 %v720, 4294901760
    %722 = vmatprep.subr.mxu0 %v721
    %v723 = vand.u32 %v61, 4294901760
    %v724 = vsub.f32 %v61, %v723
    %v725 = vand.u32 %v724, 4294901760
    %726 = vmatpush1.msra.mxu0 %v725
    %v727 = vand.u32 %v65, 4294901760
    %v728 = vsub.f32 %v65, %v727
    %v729 = vand.u32 %v728, 4294901760
    %730 = vmatprep.subr.mxu0 %v729
    %v731 = vand.u32 %v64, 4294901760
    %v732 = vsub.f32 %v64, %v731
    %v733 = vand.u32 %v732, 4294901760
    %734 = vmatpush1.msra.mxu0 %v733
    %v735 = vand.u32 %v68, 4294901760
    %v736 = vsub.f32 %v68, %v735
    %v737 = vand.u32 %v736, 4294901760
    %738 = vmatprep.subr.mxu0 %v737
    %v739 = vand.u32 %v67, 4294901760
    %v740 = vsub.f32 %v67, %v739
    %v741 = vand.u32 %v740, 4294901760
    %742 = vmatpush1.msra.mxu0 %v741
    %v743 = vand.u32 %v71, 4294901760
    %v744 = vsub.f32 %v71, %v743
    %v745 = vand.u32 %v744, 4294901760
    %746 = vmatprep.subr.mxu0 %v745
    %v747 = vand.u32 %v70, 4294901760
    %v748 = vsub.f32 %v70, %v747
    %v749 = vand.u32 %v748, 4294901760
    %750 = vmatpush1.msra.mxu0 %v749
    %v751 = vand.u32 %v74, 4294901760
    %v752 = vsub.f32 %v74, %v751
    %v753 = vand.u32 %v752, 4294901760
    %754 = vmatprep.subr.mxu0 %v753
    %v755 = vand.u32 %v73, 4294901760
    %v756 = vsub.f32 %v73, %v755
    %v757 = vand.u32 %v756, 4294901760
    %758 = vmatpush1.msra.mxu0 %v757
    %v759 = vand.u32 %v77, 4294901760
    %v760 = vsub.f32 %v77, %v759
    %v761 = vand.u32 %v760, 4294901760
    %762 = vmatprep.subr.mxu0 %v761
    %v763 = vand.u32 %v76, 4294901760
    %v764 = vsub.f32 %v76, %v763
    %v765 = vand.u32 %v764, 4294901760
    %766 = vmatpush1.msra.mxu0 %v765
    %v767 = vand.u32 %v80, 4294901760
    %v768 = vsub.f32 %v80, %v767
    %v769 = vand.u32 %v768, 4294901760
    %770 = vmatprep.subr.mxu0 %v769
    %v771 = vand.u32 %v79, 4294901760
    %v772 = vsub.f32 %v79, %v771
    %v773 = vand.u32 %v772, 4294901760
    %774 = vmatpush1.msra.mxu0 %v773
    %v775 = vand.u32 %v83, 4294901760
    %v776 = vsub.f32 %v83, %v775
    %v777 = vand.u32 %v776, 4294901760
    %778 = vmatprep.subr.mxu0 %v777
    %v779 = vand.u32 %v82, 4294901760
    %v780 = vsub.f32 %v82, %v779
    %v781 = vand.u32 %v780, 4294901760
    %782 = vmatpush1.msra.mxu0 %v781
    %v783 = vand.u32 %v86, 4294901760
    %v784 = vsub.f32 %v86, %v783
    %v785 = vand.u32 %v784, 4294901760
    %786 = vmatprep.subr.mxu0 %v785
    %v787 = vand.u32 %v85, 4294901760
    %v788 = vsub.f32 %v85, %v787
    %v789 = vand.u32 %v788, 4294901760
    %790 = vmatpush1.msra.mxu0 %v789
    %v791 = vand.u32 %v89, 4294901760
    %v792 = vsub.f32 %v89, %v791
    %v793 = vand.u32 %v792, 4294901760
    %794 = vmatprep.subr.mxu0 %v793
    %v795 = vand.u32 %v88, 4294901760
    %v796 = vsub.f32 %v88, %v795
    %v797 = vand.u32 %v796, 4294901760
    %798 = vmatpush1.msra.mxu0 %v797
    %v799 = vand.u32 %v92, 4294901760
    %v800 = vsub.f32 %v92, %v799
    %v801 = vand.u32 %v800, 4294901760
    %802 = vmatprep.subr.mxu0 %v801
    %v803 = vand.u32 %v91, 4294901760
    %v804 = vsub.f32 %v91, %v803
    %v805 = vand.u32 %v804, 4294901760
    %806 = vmatpush1.msra.mxu0 %v805
    %v807 = vand.u32 %v95, 4294901760
    %v808 = vsub.f32 %v95, %v807
    %v809 = vand.u32 %v808, 4294901760
    %810 = vmatprep.subr.mxu0 %v809
    %v811 = vand.u32 %v94, 4294901760
    %v812 = vsub.f32 %v94, %v811
    %v813 = vand.u32 %v812, 4294901760
    %814 = vmatpush1.msra.mxu0 %v813
    %v815 = vand.u32 %v98, 4294901760
    %v816 = vsub.f32 %v98, %v815
    %v817 = vand.u32 %v816, 4294901760
    %818 = vmatprep.subr.mxu0 %v817
    %v819 = vand.u32 %v97, 4294901760
    %v820 = vsub.f32 %v97, %v819
    %v821 = vand.u32 %v820, 4294901760
    %822 = vmatpush1.msra.mxu0 %v821
    %v823 = vand.u32 %v101, 4294901760
    %v824 = vsub.f32 %v101, %v823
    %v825 = vand.u32 %v824, 4294901760
    %826 = vmatprep.subr.mxu0 %v825
    %v827 = vand.u32 %v100, 4294901760
    %v828 = vsub.f32 %v100, %v827
    %v829 = vand.u32 %v828, 4294901760
    %830 = vmatpush1.msra.mxu0 %v829
    %831 = vmatprep.subr.mxu0 0.0
    %832 = vmatpush1.msra.mxu0 0.0
    %833 = vmatprep.subr.mxu0 0.0
    %834 = vmatpush1.msra.mxu0 0.0
    %835 = vmatprep.subr.mxu0 0.0
    %836 = vmatpush1.msra.mxu0 0.0
    %837 = vmatprep.subr.mxu0 0.0
    %838 = vmatpush1.msra.mxu0 0.0
    %839 = vmatprep.subr.mxu0 0.0
    %840 = vmatpush1.msra.mxu0 0.0
    %841 = vmatprep.subr.mxu0 0.0
    %842 = vmatpush1.msra.mxu0 0.0
    %843 = vmatprep.subr.mxu0 0.0
    %844 = vmatpush1.msra.mxu0 0.0
    %845 = vmatprep.subr.mxu0 0.0
    %846 = vmatpush1.msra.mxu0 0.0
    %847 = vmatprep.subr.mxu0 0.0
    %848 = vmatpush1.msra.mxu0 0.0
    %849 = vmatprep.subr.mxu0 0.0
    %850 = vmatpush1.msra.mxu0 0.0
    %851 = vmatprep.subr.mxu0 0.0
    %852 = vmatpush1.msra.mxu0 0.0
    %853 = vmatprep.subr.mxu0 0.0
    %854 = vmatpush1.msra.mxu0 0.0
    %855 = vmatprep.subr.mxu0 0.0
    %856 = vmatpush1.msra.mxu0 0.0
    %857 = vmatprep.subr.mxu0 0.0
    %858 = vmatpush1.msra.mxu0 0.0
    %859 = vmatprep.subr.mxu0 0.0
    %860 = vmatpush1.msra.mxu0 0.0
    %861 = vmatprep.subr.mxu0 0.0
    %862 = vmatpush1.msra.mxu0 0.0
    %863 = vmatprep.mubr.f32.mxu0 0.0
    %v864 = vand.u32 %v54, 4294901760
    %865 = vmatmul.mubr.f32.gmra.mrb[0].mxu0 %v864
    %v866 = vpop.f32.mrb[0].mxu0
    %v867 = vadd.f32 %v699, %v866
    %v868 = vpop.f32.mrb[0].mxu0
    %v869 = vadd.f32 %v701, %v868
    %870 = vdwg.mxu0
    %v871 = vand.u32 %v56, 4294901760
    %872 = vmatprep.subr.mxu0 %v871
    %v873 = vand.u32 %v55, 4294901760
    %874 = vmatpush1.msra.mxu0 %v873
    %v875 = vand.u32 %v59, 4294901760
    %876 = vmatprep.subr.mxu0 %v875
    %v877 = vand.u32 %v58, 4294901760
    %878 = vmatpush1.msra.mxu0 %v877
    %v879 = vand.u32 %v62, 4294901760
    %880 = vmatprep.subr.mxu0 %v879
    %v881 = vand.u32 %v61, 4294901760
    %882 = vmatpush1.msra.mxu0 %v881
    %v883 = vand.u32 %v65, 4294901760
    %884 = vmatprep.subr.mxu0 %v883
    %v885 = vand.u32 %v64, 4294901760
    %886 = vmatpush1.msra.mxu0 %v885
    %v887 = vand.u32 %v68, 4294901760
    %888 = vmatprep.subr.mxu0 %v887
    %v889 = vand.u32 %v67, 4294901760
    %890 = vmatpush1.msra.mxu0 %v889
    %v891 = vand.u32 %v71, 4294901760
    %892 = vmatprep.subr.mxu0 %v891
    %v893 = vand.u32 %v70, 4294901760
    %894 = vmatpush1.msra.mxu0 %v893
    %v895 = vand.u32 %v74, 4294901760
    %896 = vmatprep.subr.mxu0 %v895
    %v897 = vand.u32 %v73, 4294901760
    %898 = vmatpush1.msra.mxu0 %v897
    %v899 = vand.u32 %v77, 4294901760
    %900 = vmatprep.subr.mxu0 %v899
    %v901 = vand.u32 %v76, 4294901760
    %902 = vmatpush1.msra.mxu0 %v901
    %v903 = vand.u32 %v80, 4294901760
    %904 = vmatprep.subr.mxu0 %v903
    %v905 = vand.u32 %v79, 4294901760
    %906 = vmatpush1.msra.mxu0 %v905
    %v907 = vand.u32 %v83, 4294901760
    %908 = vmatprep.subr.mxu0 %v907
    %v909 = vand.u32 %v82, 4294901760
    %910 = vmatpush1.msra.mxu0 %v909
    %v911 = vand.u32 %v86, 4294901760
    %912 = vmatprep.subr.mxu0 %v911
    %v913 = vand.u32 %v85, 4294901760
    %914 = vmatpush1.msra.mxu0 %v913
    %v915 = vand.u32 %v89, 4294901760
    %916 = vmatprep.subr.mxu0 %v915
    %v917 = vand.u32 %v88, 4294901760
    %918 = vmatpush1.msra.mxu0 %v917
    %v919 = vand.u32 %v92, 4294901760
    %920 = vmatprep.subr.mxu0 %v919
    %v921 = vand.u32 %v91, 4294901760
    %922 = vmatpush1.msra.mxu0 %v921
    %v923 = vand.u32 %v95, 4294901760
    %924 = vmatprep.subr.mxu0 %v923
    %v925 = vand.u32 %v94, 4294901760
    %926 = vmatpush1.msra.mxu0 %v925
    %v927 = vand.u32 %v98, 4294901760
    %928 = vmatprep.subr.mxu0 %v927
    %v929 = vand.u32 %v97, 4294901760
    %930 = vmatpush1.msra.mxu0 %v929
    %v931 = vand.u32 %v101, 4294901760
    %932 = vmatprep.subr.mxu0 %v931
    %v933 = vand.u32 %v100, 4294901760
    %934 = vmatpush1.msra.mxu0 %v933
    %935 = vmatprep.subr.mxu0 0.0
    %936 = vmatpush1.msra.mxu0 0.0
    %937 = vmatprep.subr.mxu0 0.0
    %938 = vmatpush1.msra.mxu0 0.0
    %939 = vmatprep.subr.mxu0 0.0
    %940 = vmatpush1.msra.mxu0 0.0
    %941 = vmatprep.subr.mxu0 0.0
    %942 = vmatpush1.msra.mxu0 0.0
    %943 = vmatprep.subr.mxu0 0.0
    %944 = vmatpush1.msra.mxu0 0.0
    %945 = vmatprep.subr.mxu0 0.0
    %946 = vmatpush1.msra.mxu0 0.0
    %947 = vmatprep.subr.mxu0 0.0
    %948 = vmatpush1.msra.mxu0 0.0
    %949 = vmatprep.subr.mxu0 0.0
    %950 = vmatpush1.msra.mxu0 0.0
    %951 = vmatprep.subr.mxu0 0.0
    %952 = vmatpush1.msra.mxu0 0.0
    %953 = vmatprep.subr.mxu0 0.0
    %954 = vmatpush1.msra.mxu0 0.0
    %955 = vmatprep.subr.mxu0 0.0
    %956 = vmatpush1.msra.mxu0 0.0
    %957 = vmatprep.subr.mxu0 0.0
    %958 = vmatpush1.msra.mxu0 0.0
    %959 = vmatprep.subr.mxu0 0.0
    %960 = vmatpush1.msra.mxu0 0.0
    %961 = vmatprep.subr.mxu0 0.0
    %962 = vmatpush1.msra.mxu0 0.0
    %963 = vmatprep.subr.mxu0 0.0
    %964 = vmatpush1.msra.mxu0 0.0
    %965 = vmatprep.subr.mxu0 0.0
    %966 = vmatpush1.msra.mxu0 0.0
    %967 = vmatprep.mubr.f32.mxu0 0.0
    %v968 = vand.u32 %v54, 4294901760
    %969 = vmatmul.mubr.f32.gmra.mrb[0].mxu0 %v968
    %v970 = vpop.f32.mrb[0].mxu0
    %v971 = vadd.f32 %v867, %v970
    %v972 = vpop.f32.mrb[0].mxu0
    %v973 = vadd.f32 %v869, %v972
    %974 = vdwg.mxu0
    %975 = vmatprep.subr.mxu0 0.0
    %v976 = vand.u32 %v57, 4294901760
    %977 = vmatpush1.msra.mxu0 %v976
    %978 = vmatprep.subr.mxu0 0.0
    %v979 = vand.u32 %v60, 4294901760
    %980 = vmatpush1.msra.mxu0 %v979
    %981 = vmatprep.subr.mxu0 0.0
    %v982 = vand.u32 %v63, 4294901760
    %983 = vmatpush1.msra.mxu0 %v982
    %984 = vmatprep.subr.mxu0 0.0
    %v985 = vand.u32 %v66, 4294901760
    %986 = vmatpush1.msra.mxu0 %v985
    %987 = vmatprep.subr.mxu0 0.0
    %v988 = vand.u32 %v69, 4294901760
    %989 = vmatpush1.msra.mxu0 %v988
    %990 = vmatprep.subr.mxu0 0.0
    %v991 = vand.u32 %v72, 4294901760
    %992 = vmatpush1.msra.mxu0 %v991
    %993 = vmatprep.subr.mxu0 0.0
    %v994 = vand.u32 %v75, 4294901760
    %995 = vmatpush1.msra.mxu0 %v994
    %996 = vmatprep.subr.mxu0 0.0
    %v997 = vand.u32 %v78, 4294901760
    %998 = vmatpush1.msra.mxu0 %v997
    %999 = vmatprep.subr.mxu0 0.0
    %v1000 = vand.u32 %v81, 4294901760
    %1001 = vmatpush1.msra.mxu0 %v1000
    %1002 = vmatprep.subr.mxu0 0.0
    %v1003 = vand.u32 %v84, 4294901760
    %1004 = vmatpush1.msra.mxu0 %v1003
    %1005 = vmatprep.subr.mxu0 0.0
    %v1006 = vand.u32 %v87, 4294901760
    %1007 = vmatpush1.msra.mxu0 %v1006
    %1008 = vmatprep.subr.mxu0 0.0
    %v1009 = vand.u32 %v90, 4294901760
    %1010 = vmatpush1.msra.mxu0 %v1009
    %1011 = vmatprep.subr.mxu0 0.0
    %v1012 = vand.u32 %v93, 4294901760
    %1013 = vmatpush1.msra.mxu0 %v1012
    %1014 = vmatprep.subr.mxu0 0.0
    %v1015 = vand.u32 %v96, 4294901760
    %1016 = vmatpush1.msra.mxu0 %v1015
    %1017 = vmatprep.subr.mxu0 0.0
    %v1018 = vand.u32 %v99, 4294901760
    %1019 = vmatpush1.msra.mxu0 %v1018
    %1020 = vmatprep.subr.mxu0 0.0
    %v1021 = vand.u32 %v102, 4294901760
    %1022 = vmatpush1.msra.mxu0 %v1021
    %1023 = vmatprep.subr.mxu0 0.0
    %1024 = vmatpush1.msra.mxu0 0.0
    %1025 = vmatprep.subr.mxu0 0.0
    %1026 = vmatpush1.msra.mxu0 0.0
    %1027 = vmatprep.subr.mxu0 0.0
    %1028 = vmatpush1.msra.mxu0 0.0
    %1029 = vmatprep.subr.mxu0 0.0
    %1030 = vmatpush1.msra.mxu0 0.0
    %1031 = vmatprep.subr.mxu0 0.0
    %1032 = vmatpush1.msra.mxu0 0.0
    %1033 = vmatprep.subr.mxu0 0.0
    %1034 = vmatpush1.msra.mxu0 0.0
    %1035 = vmatprep.subr.mxu0 0.0
    %1036 = vmatpush1.msra.mxu0 0.0
    %1037 = vmatprep.subr.mxu0 0.0
    %1038 = vmatpush1.msra.mxu0 0.0
    %1039 = vmatprep.subr.mxu0 0.0
    %1040 = vmatpush1.msra.mxu0 0.0
    %1041 = vmatprep.subr.mxu0 0.0
    %1042 = vmatpush1.msra.mxu0 0.0
    %1043 = vmatprep.subr.mxu0 0.0
    %1044 = vmatpush1.msra.mxu0 0.0
    %1045 = vmatprep.subr.mxu0 0.0
    %1046 = vmatpush1.msra.mxu0 0.0
    %1047 = vmatprep.subr.mxu0 0.0
    %1048 = vmatpush1.msra.mxu0 0.0
    %1049 = vmatprep.subr.mxu0 0.0
    %1050 = vmatpush1.msra.mxu0 0.0
    %1051 = vmatprep.subr.mxu0 0.0
    %1052 = vmatpush1.msra.mxu0 0.0
    %1053 = vmatprep.subr.mxu0 0.0
    %1054 = vmatpush1.msra.mxu0 0.0
    %1055 = vmatprep.mubr.f32.mxu0 0.0
    %v1056 = vand.u32 %v54, 4294901760
    %v1057 = vsub.f32 %v54, %v1056
    %v1058 = vand.u32 %v1057, 4294901760
    %v1059 = vsub.f32 %v1057, %v1058
    %v1060 = vand.u32 %v1059, 4294901760
    %1061 = vmatmul.mubr.f32.gmra.mrb[0].mxu0 %v1060
    %v1062 = vpop.f32.mrb[0].mxu0
    %v1063 = vadd.f32 %v116, %v1062
    %v1064 = vpop.f32.mrb[0].mxu0
    %1065 = vdwg.mxu0
    %1066 = vmatprep.subr.mxu0 0.0
    %v1067 = vand.u32 %v57, 4294901760
    %v1068 = vsub.f32 %v57, %v1067
    %v1069 = vand.u32 %v1068, 4294901760
    %v1070 = vsub.f32 %v1068, %v1069
    %v1071 = vand.u32 %v1070, 4294901760
    %1072 = vmatpush1.msra.mxu0 %v1071
    %1073 = vmatprep.subr.mxu0 0.0
    %v1074 = vand.u32 %v60, 4294901760
    %v1075 = vsub.f32 %v60, %v1074
    %v1076 = vand.u32 %v1075, 4294901760
    %v1077 = vsub.f32 %v1075, %v1076
    %v1078 = vand.u32 %v1077, 4294901760
    %1079 = vmatpush1.msra.mxu0 %v1078
    %1080 = vmatprep.subr.mxu0 0.0
    %v1081 = vand.u32 %v63, 4294901760
    %v1082 = vsub.f32 %v63, %v1081
    %v1083 = vand.u32 %v1082, 4294901760
    %v1084 = vsub.f32 %v1082, %v1083
    %v1085 = vand.u32 %v1084, 4294901760
    %1086 = vmatpush1.msra.mxu0 %v1085
    %1087 = vmatprep.subr.mxu0 0.0
    %v1088 = vand.u32 %v66, 4294901760
    %v1089 = vsub.f32 %v66, %v1088
    %v1090 = vand.u32 %v1089, 4294901760
    %v1091 = vsub.f32 %v1089, %v1090
    %v1092 = vand.u32 %v1091, 4294901760
    %1093 = vmatpush1.msra.mxu0 %v1092
    %1094 = vmatprep.subr.mxu0 0.0
    %v1095 = vand.u32 %v69, 4294901760
    %v1096 = vsub.f32 %v69, %v1095
    %v1097 = vand.u32 %v1096, 4294901760
    %v1098 = vsub.f32 %v1096, %v1097
    %v1099 = vand.u32 %v1098, 4294901760
    %1100 = vmatpush1.msra.mxu0 %v1099
    %1101 = vmatprep.subr.mxu0 0.0
    %v1102 = vand.u32 %v72, 4294901760
    %v1103 = vsub.f32 %v72, %v1102
    %v1104 = vand.u32 %v1103, 4294901760
    %v1105 = vsub.f32 %v1103, %v1104
    %v1106 = vand.u32 %v1105, 4294901760
    %1107 = vmatpush1.msra.mxu0 %v1106
    %1108 = vmatprep.subr.mxu0 0.0
    %v1109 = vand.u32 %v75, 4294901760
    %v1110 = vsub.f32 %v75, %v1109
    %v1111 = vand.u32 %v1110, 4294901760
    %v1112 = vsub.f32 %v1110, %v1111
    %v1113 = vand.u32 %v1112, 4294901760
    %1114 = vmatpush1.msra.mxu0 %v1113
    %1115 = vmatprep.subr.mxu0 0.0
    %v1116 = vand.u32 %v78, 4294901760
    %v1117 = vsub.f32 %v78, %v1116
    %v1118 = vand.u32 %v1117, 4294901760
    %v1119 = vsub.f32 %v1117, %v1118
    %v1120 = vand.u32 %v1119, 4294901760
    %1121 = vmatpush1.msra.mxu0 %v1120
    %1122 = vmatprep.subr.mxu0 0.0
    %v1123 = vand.u32 %v81, 4294901760
    %v1124 = vsub.f32 %v81, %v1123
    %v1125 = vand.u32 %v1124, 4294901760
    %v1126 = vsub.f32 %v1124, %v1125
    %v1127 = vand.u32 %v1126, 4294901760
    %1128 = vmatpush1.msra.mxu0 %v1127
    %1129 = vmatprep.subr.mxu0 0.0
    %v1130 = vand.u32 %v84, 4294901760
    %v1131 = vsub.f32 %v84, %v1130
    %v1132 = vand.u32 %v1131, 4294901760
    %v1133 = vsub.f32 %v1131, %v1132
    %v1134 = vand.u32 %v1133, 4294901760
    %1135 = vmatpush1.msra.mxu0 %v1134
    %1136 = vmatprep.subr.mxu0 0.0
    %v1137 = vand.u32 %v87, 4294901760
    %v1138 = vsub.f32 %v87, %v1137
    %v1139 = vand.u32 %v1138, 4294901760
    %v1140 = vsub.f32 %v1138, %v1139
    %v1141 = vand.u32 %v1140, 4294901760
    %1142 = vmatpush1.msra.mxu0 %v1141
    %1143 = vmatprep.subr.mxu0 0.0
    %v1144 = vand.u32 %v90, 4294901760
    %v1145 = vsub.f32 %v90, %v1144
    %v1146 = vand.u32 %v1145, 4294901760
    %v1147 = vsub.f32 %v1145, %v1146
    %v1148 = vand.u32 %v1147, 4294901760
    %1149 = vmatpush1.msra.mxu0 %v1148
    %1150 = vmatprep.subr.mxu0 0.0
    %v1151 = vand.u32 %v93, 4294901760
    %v1152 = vsub.f32 %v93, %v1151
    %v1153 = vand.u32 %v1152, 4294901760
    %v1154 = vsub.f32 %v1152, %v1153
    %v1155 = vand.u32 %v1154, 4294901760
    %1156 = vmatpush1.msra.mxu0 %v1155
    %1157 = vmatprep.subr.mxu0 0.0
    %v1158 = vand.u32 %v96, 4294901760
    %v1159 = vsub.f32 %v96, %v1158
    %v1160 = vand.u32 %v1159, 4294901760
    %v1161 = vsub.f32 %v1159, %v1160
    %v1162 = vand.u32 %v1161, 4294901760
    %1163 = vmatpush1.msra.mxu0 %v1162
    %1164 = vmatprep.subr.mxu0 0.0
    %v1165 = vand.u32 %v99, 4294901760
    %v1166 = vsub.f32 %v99, %v1165
    %v1167 = vand.u32 %v1166, 4294901760
    %v1168 = vsub.f32 %v1166, %v1167
    %v1169 = vand.u32 %v1168, 4294901760
    %1170 = vmatpush1.msra.mxu0 %v1169
    %1171 = vmatprep.subr.mxu0 0.0
    %v1172 = vand.u32 %v102, 4294901760
    %v1173 = vsub.f32 %v102, %v1172
    %v1174 = vand.u32 %v1173, 4294901760
    %v1175 = vsub.f32 %v1173, %v1174
    %v1176 = vand.u32 %v1175, 4294901760
    %1177 = vmatpush1.msra.mxu0 %v1176
    %1178 = vmatprep.subr.mxu0 0.0
    %1179 = vmatpush1.msra.mxu0 0.0
    %1180 = vmatprep.subr.mxu0 0.0
    %1181 = vmatpush1.msra.mxu0 0.0
    %1182 = vmatprep.subr.mxu0 0.0
    %1183 = vmatpush1.msra.mxu0 0.0
    %1184 = vmatprep.subr.mxu0 0.0
    %1185 = vmatpush1.msra.mxu0 0.0
    %1186 = vmatprep.subr.mxu0 0.0
    %1187 = vmatpush1.msra.mxu0 0.0
    %1188 = vmatprep.subr.mxu0 0.0
    %1189 = vmatpush1.msra.mxu0 0.0
    %1190 = vmatprep.subr.mxu0 0.0
    %1191 = vmatpush1.msra.mxu0 0.0
    %1192 = vmatprep.subr.mxu0 0.0
    %1193 = vmatpush1.msra.mxu0 0.0
    %1194 = vmatprep.subr.mxu0 0.0
    %1195 = vmatpush1.msra.mxu0 0.0
    %1196 = vmatprep.subr.mxu0 0.0
    %1197 = vmatpush1.msra.mxu0 0.0
    %1198 = vmatprep.subr.mxu0 0.0
    %1199 = vmatpush1.msra.mxu0 0.0
    %1200 = vmatprep.subr.mxu0 0.0
    %1201 = vmatpush1.msra.mxu0 0.0
    %1202 = vmatprep.subr.mxu0 0.0
    %1203 = vmatpush1.msra.mxu0 0.0
    %1204 = vmatprep.subr.mxu0 0.0
    %1205 = vmatpush1.msra.mxu0 0.0
    %1206 = vmatprep.subr.mxu0 0.0
    %1207 = vmatpush1.msra.mxu0 0.0
    %1208 = vmatprep.subr.mxu0 0.0
    %1209 = vmatpush1.msra.mxu0 0.0
    %1210 = vmatprep.mubr.f32.mxu0 0.0
    %v1211 = vand.u32 %v54, 4294901760
    %1212 = vmatmul.mubr.f32.gmra.mrb[0].mxu0 %v1211
    %v1213 = vpop.f32.mrb[0].mxu0
    %v1214 = vadd.f32 %v1063, %v1213
    %v1215 = vpop.f32.mrb[0].mxu0
    %1216 = vdwg.mxu0
    %1217 = vmatprep.subr.mxu0 0.0
    %v1218 = vand.u32 %v57, 4294901760
    %v1219 = vsub.f32 %v57, %v1218
    %1220 = vmatpush1.msra.mxu0 %v1219
    %1221 = vmatprep.subr.mxu0 0.0
    %v1222 = vand.u32 %v60, 4294901760
    %v1223 = vsub.f32 %v60, %v1222
    %1224 = vmatpush1.msra.mxu0 %v1223
    %1225 = vmatprep.subr.mxu0 0.0
    %v1226 = vand.u32 %v63, 4294901760
    %v1227 = vsub.f32 %v63, %v1226
    %1228 = vmatpush1.msra.mxu0 %v1227
    %1229 = vmatprep.subr.mxu0 0.0
    %v1230 = vand.u32 %v66, 4294901760
    %v1231 = vsub.f32 %v66, %v1230
    %1232 = vmatpush1.msra.mxu0 %v1231
    %1233 = vmatprep.subr.mxu0 0.0
    %v1234 = vand.u32 %v69, 4294901760
    %v1235 = vsub.f32 %v69, %v1234
    %1236 = vmatpush1.msra.mxu0 %v1235
    %1237 = vmatprep.subr.mxu0 0.0
    %v1238 = vand.u32 %v72, 4294901760
    %v1239 = vsub.f32 %v72, %v1238
    %1240 = vmatpush1.msra.mxu0 %v1239
    %1241 = vmatprep.subr.mxu0 0.0
    %v1242 = vand.u32 %v75, 4294901760
    %v1243 = vsub.f32 %v75, %v1242
    %1244 = vmatpush1.msra.mxu0 %v1243
    %1245 = vmatprep.subr.mxu0 0.0
    %v1246 = vand.u32 %v78, 4294901760
    %v1247 = vsub.f32 %v78, %v1246
    %1248 = vmatpush1.msra.mxu0 %v1247
    %1249 = vmatprep.subr.mxu0 0.0
    %v1250 = vand.u32 %v81, 4294901760
    %v1251 = vsub.f32 %v81, %v1250
    %1252 = vmatpush1.msra.mxu0 %v1251
    %1253 = vmatprep.subr.mxu0 0.0
    %v1254 = vand.u32 %v84, 4294901760
    %v1255 = vsub.f32 %v84, %v1254
    %1256 = vmatpush1.msra.mxu0 %v1255
    %1257 = vmatprep.subr.mxu0 0.0
    %v1258 = vand.u32 %v87, 4294901760
    %v1259 = vsub.f32 %v87, %v1258
    %1260 = vmatpush1.msra.mxu0 %v1259
    %1261 = vmatprep.subr.mxu0 0.0
    %v1262 = vand.u32 %v90, 4294901760
    %v1263 = vsub.f32 %v90, %v1262
    %1264 = vmatpush1.msra.mxu0 %v1263
    %1265 = vmatprep.subr.mxu0 0.0
    %v1266 = vand.u32 %v93, 4294901760
    %v1267 = vsub.f32 %v93, %v1266
    %1268 = vmatpush1.msra.mxu0 %v1267
    %1269 = vmatprep.subr.mxu0 0.0
    %v1270 = vand.u32 %v96, 4294901760
    %v1271 = vsub.f32 %v96, %v1270
    %1272 = vmatpush1.msra.mxu0 %v1271
    %1273 = vmatprep.subr.mxu0 0.0
    %v1274 = vand.u32 %v99, 4294901760
    %v1275 = vsub.f32 %v99, %v1274
    %1276 = vmatpush1.msra.mxu0 %v1275
    %1277 = vmatprep.subr.mxu0 0.0
    %v1278 = vand.u32 %v102, 4294901760
    %v1279 = vsub.f32 %v102, %v1278
    %1280 = vmatpush1.msra.mxu0 %v1279
    %1281 = vmatprep.subr.mxu0 0.0
    %1282 = vmatpush1.msra.mxu0 0.0
    %1283 = vmatprep.subr.mxu0 0.0
    %1284 = vmatpush1.msra.mxu0 0.0
    %1285 = vmatprep.subr.mxu0 0.0
    %1286 = vmatpush1.msra.mxu0 0.0
    %1287 = vmatprep.subr.mxu0 0.0
    %1288 = vmatpush1.msra.mxu0 0.0
    %1289 = vmatprep.subr.mxu0 0.0
    %1290 = vmatpush1.msra.mxu0 0.0
    %1291 = vmatprep.subr.mxu0 0.0
    %1292 = vmatpush1.msra.mxu0 0.0
    %1293 = vmatprep.subr.mxu0 0.0
    %1294 = vmatpush1.msra.mxu0 0.0
    %1295 = vmatprep.subr.mxu0 0.0
    %1296 = vmatpush1.msra.mxu0 0.0
    %1297 = vmatprep.subr.mxu0 0.0
    %1298 = vmatpush1.msra.mxu0 0.0
    %1299 = vmatprep.subr.mxu0 0.0
    %1300 = vmatpush1.msra.mxu0 0.0
    %1301 = vmatprep.subr.mxu0 0.0
    %1302 = vmatpush1.msra.mxu0 0.0
    %1303 = vmatprep.subr.mxu0 0.0
    %1304 = vmatpush1.msra.mxu0 0.0
    %1305 = vmatprep.subr.mxu0 0.0
    %1306 = vmatpush1.msra.mxu0 0.0
    %1307 = vmatprep.subr.mxu0 0.0
    %1308 = vmatpush1.msra.mxu0 0.0
    %1309 = vmatprep.subr.mxu0 0.0
    %1310 = vmatpush1.msra.mxu0 0.0
    %1311 = vmatprep.subr.mxu0 0.0
    %1312 = vmatpush1.msra.mxu0 0.0
    %1313 = vmatprep.mubr.f32.mxu0 0.0
    %v1314 = vand.u32 %v54, 4294901760
    %v1315 = vsub.f32 %v54, %v1314
    %1316 = vmatmul.mubr.f32.gmra.mrb[0].mxu0 %v1315
    %v1317 = vpop.f32.mrb[0].mxu0
    %v1318 = vadd.f32 %v1214, %v1317
    %v1319 = vpop.f32.mrb[0].mxu0
    %1320 = vdwg.mxu0
    %1321 = vmatprep.subr.mxu0 0.0
    %v1322 = vand.u32 %v57, 4294901760
    %1323 = vmatpush1.msra.mxu0 %v1322
    %1324 = vmatprep.subr.mxu0 0.0
    %v1325 = vand.u32 %v60, 4294901760
    %1326 = vmatpush1.msra.mxu0 %v1325
    %1327 = vmatprep.subr.mxu0 0.0
    %v1328 = vand.u32 %v63, 4294901760
    %1329 = vmatpush1.msra.mxu0 %v1328
    %1330 = vmatprep.subr.mxu0 0.0
    %v1331 = vand.u32 %v66, 4294901760
    %1332 = vmatpush1.msra.mxu0 %v1331
    %1333 = vmatprep.subr.mxu0 0.0
    %v1334 = vand.u32 %v69, 4294901760
    %1335 = vmatpush1.msra.mxu0 %v1334
    %1336 = vmatprep.subr.mxu0 0.0
    %v1337 = vand.u32 %v72, 4294901760
    %1338 = vmatpush1.msra.mxu0 %v1337
    %1339 = vmatprep.subr.mxu0 0.0
    %v1340 = vand.u32 %v75, 4294901760
    %1341 = vmatpush1.msra.mxu0 %v1340
    %1342 = vmatprep.subr.mxu0 0.0
    %v1343 = vand.u32 %v78, 4294901760
    %1344 = vmatpush1.msra.mxu0 %v1343
    %1345 = vmatprep.subr.mxu0 0.0
    %v1346 = vand.u32 %v81, 4294901760
    %1347 = vmatpush1.msra.mxu0 %v1346
    %1348 = vmatprep.subr.mxu0 0.0
    %v1349 = vand.u32 %v84, 4294901760
    %1350 = vmatpush1.msra.mxu0 %v1349
    %1351 = vmatprep.subr.mxu0 0.0
    %v1352 = vand.u32 %v87, 4294901760
    %1353 = vmatpush1.msra.mxu0 %v1352
    %1354 = vmatprep.subr.mxu0 0.0
    %v1355 = vand.u32 %v90, 4294901760
    %1356 = vmatpush1.msra.mxu0 %v1355
    %1357 = vmatprep.subr.mxu0 0.0
    %v1358 = vand.u32 %v93, 4294901760
    %1359 = vmatpush1.msra.mxu0 %v1358
    %1360 = vmatprep.subr.mxu0 0.0
    %v1361 = vand.u32 %v96, 4294901760
    %1362 = vmatpush1.msra.mxu0 %v1361
    %1363 = vmatprep.subr.mxu0 0.0
    %v1364 = vand.u32 %v99, 4294901760
    %1365 = vmatpush1.msra.mxu0 %v1364
    %1366 = vmatprep.subr.mxu0 0.0
    %v1367 = vand.u32 %v102, 4294901760
    %1368 = vmatpush1.msra.mxu0 %v1367
    %1369 = vmatprep.subr.mxu0 0.0
    %1370 = vmatpush1.msra.mxu0 0.0
    %1371 = vmatprep.subr.mxu0 0.0
    %1372 = vmatpush1.msra.mxu0 0.0
    %1373 = vmatprep.subr.mxu0 0.0
    %1374 = vmatpush1.msra.mxu0 0.0
    %1375 = vmatprep.subr.mxu0 0.0
    %1376 = vmatpush1.msra.mxu0 0.0
    %1377 = vmatprep.subr.mxu0 0.0
    %1378 = vmatpush1.msra.mxu0 0.0
    %1379 = vmatprep.subr.mxu0 0.0
    %1380 = vmatpush1.msra.mxu0 0.0
    %1381 = vmatprep.subr.mxu0 0.0
    %1382 = vmatpush1.msra.mxu0 0.0
    %1383 = vmatprep.subr.mxu0 0.0
    %1384 = vmatpush1.msra.mxu0 0.0
    %1385 = vmatprep.subr.mxu0 0.0
    %1386 = vmatpush1.msra.mxu0 0.0
    %1387 = vmatprep.subr.mxu0 0.0
    %1388 = vmatpush1.msra.mxu0 0.0
    %1389 = vmatprep.subr.mxu0 0.0
    %1390 = vmatpush1.msra.mxu0 0.0
    %1391 = vmatprep.subr.mxu0 0.0
    %1392 = vmatpush1.msra.mxu0 0.0
    %1393 = vmatprep.subr.mxu0 0.0
    %1394 = vmatpush1.msra.mxu0 0.0
    %1395 = vmatprep.subr.mxu0 0.0
    %1396 = vmatpush1.msra.mxu0 0.0
    %1397 = vmatprep.subr.mxu0 0.0
    %1398 = vmatpush1.msra.mxu0 0.0
    %1399 = vmatprep.subr.mxu0 0.0
    %1400 = vmatpush1.msra.mxu0 0.0
    %1401 = vmatprep.mubr.f32.mxu0 0.0
    %v1402 = vand.u32 %v54, 4294901760
    %v1403 = vsub.f32 %v54, %v1402
    %v1404 = vand.u32 %v1403, 4294901760
    %1405 = vmatmul.mubr.f32.gmra.mrb[0].mxu0 %v1404
    %v1406 = vpop.f32.mrb[0].mxu0
    %v1407 = vadd.f32 %v1318, %v1406
    %v1408 = vpop.f32.mrb[0].mxu0
    %1409 = vdwg.mxu0
    %1410 = vmatprep.subr.mxu0 0.0
    %v1411 = vand.u32 %v57, 4294901760
    %v1412 = vsub.f32 %v57, %v1411
    %v1413 = vand.u32 %v1412, 4294901760
    %1414 = vmatpush1.msra.mxu0 %v1413
    %1415 = vmatprep.subr.mxu0 0.0
    %v1416 = vand.u32 %v60, 4294901760
    %v1417 = vsub.f32 %v60, %v1416
    %v1418 = vand.u32 %v1417, 4294901760
    %1419 = vmatpush1.msra.mxu0 %v1418
    %1420 = vmatprep.subr.mxu0 0.0
    %v1421 = vand.u32 %v63, 4294901760
    %v1422 = vsub.f32 %v63, %v1421
    %v1423 = vand.u32 %v1422, 4294901760
    %1424 = vmatpush1.msra.mxu0 %v1423
    %1425 = vmatprep.subr.mxu0 0.0
    %v1426 = vand.u32 %v66, 4294901760
    %v1427 = vsub.f32 %v66, %v1426
    %v1428 = vand.u32 %v1427, 4294901760
    %1429 = vmatpush1.msra.mxu0 %v1428
    %1430 = vmatprep.subr.mxu0 0.0
    %v1431 = vand.u32 %v69, 4294901760
    %v1432 = vsub.f32 %v69, %v1431
    %v1433 = vand.u32 %v1432, 4294901760
    %1434 = vmatpush1.msra.mxu0 %v1433
    %1435 = vmatprep.subr.mxu0 0.0
    %v1436 = vand.u32 %v72, 4294901760
    %v1437 = vsub.f32 %v72, %v1436
    %v1438 = vand.u32 %v1437, 4294901760
    %1439 = vmatpush1.msra.mxu0 %v1438
    %1440 = vmatprep.subr.mxu0 0.0
    %v1441 = vand.u32 %v75, 4294901760
    %v1442 = vsub.f32 %v75, %v1441
    %v1443 = vand.u32 %v1442, 4294901760
    %1444 = vmatpush1.msra.mxu0 %v1443
    %1445 = vmatprep.subr.mxu0 0.0
    %v1446 = vand.u32 %v78, 4294901760
    %v1447 = vsub.f32 %v78, %v1446
    %v1448 = vand.u32 %v1447, 4294901760
    %1449 = vmatpush1.msra.mxu0 %v1448
    %1450 = vmatprep.subr.mxu0 0.0
    %v1451 = vand.u32 %v81, 4294901760
    %v1452 = vsub.f32 %v81, %v1451
    %v1453 = vand.u32 %v1452, 4294901760
    %1454 = vmatpush1.msra.mxu0 %v1453
    %1455 = vmatprep.subr.mxu0 0.0
    %v1456 = vand.u32 %v84, 4294901760
    %v1457 = vsub.f32 %v84, %v1456
    %v1458 = vand.u32 %v1457, 4294901760
    %1459 = vmatpush1.msra.mxu0 %v1458
    %1460 = vmatprep.subr.mxu0 0.0
    %v1461 = vand.u32 %v87, 4294901760
    %v1462 = vsub.f32 %v87, %v1461
    %v1463 = vand.u32 %v1462, 4294901760
    %1464 = vmatpush1.msra.mxu0 %v1463
    %1465 = vmatprep.subr.mxu0 0.0
    %v1466 = vand.u32 %v90, 4294901760
    %v1467 = vsub.f32 %v90, %v1466
    %v1468 = vand.u32 %v1467, 4294901760
    %1469 = vmatpush1.msra.mxu0 %v1468
    %1470 = vmatprep.subr.mxu0 0.0
    %v1471 = vand.u32 %v93, 4294901760
    %v1472 = vsub.f32 %v93, %v1471
    %v1473 = vand.u32 %v1472, 4294901760
    %1474 = vmatpush1.msra.mxu0 %v1473
    %1475 = vmatprep.subr.mxu0 0.0
    %v1476 = vand.u32 %v96, 4294901760
    %v1477 = vsub.f32 %v96, %v1476
    %v1478 = vand.u32 %v1477, 4294901760
    %1479 = vmatpush1.msra.mxu0 %v1478
    %1480 = vmatprep.subr.mxu0 0.0
    %v1481 = vand.u32 %v99, 4294901760
    %v1482 = vsub.f32 %v99, %v1481
    %v1483 = vand.u32 %v1482, 4294901760
    %1484 = vmatpush1.msra.mxu0 %v1483
    %1485 = vmatprep.subr.mxu0 0.0
    %v1486 = vand.u32 %v102, 4294901760
    %v1487 = vsub.f32 %v102, %v1486
    %v1488 = vand.u32 %v1487, 4294901760
    %1489 = vmatpush1.msra.mxu0 %v1488
    %1490 = vmatprep.subr.mxu0 0.0
    %1491 = vmatpush1.msra.mxu0 0.0
    %1492 = vmatprep.subr.mxu0 0.0
    %1493 = vmatpush1.msra.mxu0 0.0
    %1494 = vmatprep.subr.mxu0 0.0
    %1495 = vmatpush1.msra.mxu0 0.0
    %1496 = vmatprep.subr.mxu0 0.0
    %1497 = vmatpush1.msra.mxu0 0.0
    %1498 = vmatprep.subr.mxu0 0.0
    %1499 = vmatpush1.msra.mxu0 0.0
    %1500 = vmatprep.subr.mxu0 0.0
    %1501 = vmatpush1.msra.mxu0 0.0
    %1502 = vmatprep.subr.mxu0 0.0
    %1503 = vmatpush1.msra.mxu0 0.0
    %1504 = vmatprep.subr.mxu0 0.0
    %1505 = vmatpush1.msra.mxu0 0.0
    %1506 = vmatprep.subr.mxu0 0.0
    %1507 = vmatpush1.msra.mxu0 0.0
    %1508 = vmatprep.subr.mxu0 0.0
    %1509 = vmatpush1.msra.mxu0 0.0
    %1510 = vmatprep.subr.mxu0 0.0
    %1511 = vmatpush1.msra.mxu0 0.0
    %1512 = vmatprep.subr.mxu0 0.0
    %1513 = vmatpush1.msra.mxu0 0.0
    %1514 = vmatprep.subr.mxu0 0.0
    %1515 = vmatpush1.msra.mxu0 0.0
    %1516 = vmatprep.subr.mxu0 0.0
    %1517 = vmatpush1.msra.mxu0 0.0
    %1518 = vmatprep.subr.mxu0 0.0
    %1519 = vmatpush1.msra.mxu0 0.0
    %1520 = vmatprep.subr.mxu0 0.0
    %1521 = vmatpush1.msra.mxu0 0.0
    %1522 = vmatprep.mubr.f32.mxu0 0.0
    %v1523 = vand.u32 %v54, 4294901760
    %1524 = vmatmul.mubr.f32.gmra.mrb[0].mxu0 %v1523
    %v1525 = vpop.f32.mrb[0].mxu0
    %v1526 = vadd.f32 %v1407, %v1525
    %v1527 = vpop.f32.mrb[0].mxu0
    %1528 = vdwg.mxu0
    %1529 = vmatprep.subr.mxu0 0.0
    %v1530 = vand.u32 %v57, 4294901760
    %1531 = vmatpush1.msra.mxu0 %v1530
    %1532 = vmatprep.subr.mxu0 0.0
    %v1533 = vand.u32 %v60, 4294901760
    %1534 = vmatpush1.msra.mxu0 %v1533
    %1535 = vmatprep.subr.mxu0 0.0
    %v1536 = vand.u32 %v63, 4294901760
    %1537 = vmatpush1.msra.mxu0 %v1536
    %1538 = vmatprep.subr.mxu0 0.0
    %v1539 = vand.u32 %v66, 4294901760
    %1540 = vmatpush1.msra.mxu0 %v1539
    %1541 = vmatprep.subr.mxu0 0.0
    %v1542 = vand.u32 %v69, 4294901760
    %1543 = vmatpush1.msra.mxu0 %v1542
    %1544 = vmatprep.subr.mxu0 0.0
    %v1545 = vand.u32 %v72, 4294901760
    %1546 = vmatpush1.msra.mxu0 %v1545
    %1547 = vmatprep.subr.mxu0 0.0
    %v1548 = vand.u32 %v75, 4294901760
    %1549 = vmatpush1.msra.mxu0 %v1548
    %1550 = vmatprep.subr.mxu0 0.0
    %v1551 = vand.u32 %v78, 4294901760
    %1552 = vmatpush1.msra.mxu0 %v1551
    %1553 = vmatprep.subr.mxu0 0.0
    %v1554 = vand.u32 %v81, 4294901760
    %1555 = vmatpush1.msra.mxu0 %v1554
    %1556 = vmatprep.subr.mxu0 0.0
    %v1557 = vand.u32 %v84, 4294901760
    %1558 = vmatpush1.msra.mxu0 %v1557
    %1559 = vmatprep.subr.mxu0 0.0
    %v1560 = vand.u32 %v87, 4294901760
    %1561 = vmatpush1.msra.mxu0 %v1560
    %1562 = vmatprep.subr.mxu0 0.0
    %v1563 = vand.u32 %v90, 4294901760
    %1564 = vmatpush1.msra.mxu0 %v1563
    %1565 = vmatprep.subr.mxu0 0.0
    %v1566 = vand.u32 %v93, 4294901760
    %1567 = vmatpush1.msra.mxu0 %v1566
    %1568 = vmatprep.subr.mxu0 0.0
    %v1569 = vand.u32 %v96, 4294901760
    %1570 = vmatpush1.msra.mxu0 %v1569
    %1571 = vmatprep.subr.mxu0 0.0
    %v1572 = vand.u32 %v99, 4294901760
    %1573 = vmatpush1.msra.mxu0 %v1572
    %1574 = vmatprep.subr.mxu0 0.0
    %v1575 = vand.u32 %v102, 4294901760
    %1576 = vmatpush1.msra.mxu0 %v1575
    %1577 = vmatprep.subr.mxu0 0.0
    %1578 = vmatpush1.msra.mxu0 0.0
    %1579 = vmatprep.subr.mxu0 0.0
    %1580 = vmatpush1.msra.mxu0 0.0
    %1581 = vmatprep.subr.mxu0 0.0
    %1582 = vmatpush1.msra.mxu0 0.0
    %1583 = vmatprep.subr.mxu0 0.0
    %1584 = vmatpush1.msra.mxu0 0.0
    %1585 = vmatprep.subr.mxu0 0.0
    %1586 = vmatpush1.msra.mxu0 0.0
    %1587 = vmatprep.subr.mxu0 0.0
    %1588 = vmatpush1.msra.mxu0 0.0
    %1589 = vmatprep.subr.mxu0 0.0
    %1590 = vmatpush1.msra.mxu0 0.0
    %1591 = vmatprep.subr.mxu0 0.0
    %1592 = vmatpush1.msra.mxu0 0.0
    %1593 = vmatprep.subr.mxu0 0.0
    %1594 = vmatpush1.msra.mxu0 0.0
    %1595 = vmatprep.subr.mxu0 0.0
    %1596 = vmatpush1.msra.mxu0 0.0
    %1597 = vmatprep.subr.mxu0 0.0
    %1598 = vmatpush1.msra.mxu0 0.0
    %1599 = vmatprep.subr.mxu0 0.0
    %1600 = vmatpush1.msra.mxu0 0.0
    %1601 = vmatprep.subr.mxu0 0.0
    %1602 = vmatpush1.msra.mxu0 0.0
    %1603 = vmatprep.subr.mxu0 0.0
    %1604 = vmatpush1.msra.mxu0 0.0
    %1605 = vmatprep.subr.mxu0 0.0
    %1606 = vmatpush1.msra.mxu0 0.0
    %1607 = vmatprep.subr.mxu0 0.0
    %1608 = vmatpush1.msra.mxu0 0.0
    %1609 = vmatprep.mubr.f32.mxu0 0.0
    %v1610 = vand.u32 %v54, 4294901760
    %1611 = vmatmul.mubr.f32.gmra.mrb[0].mxu0 %v1610
    %v1612 = vpop.f32.mrb[0].mxu0
    %v1613 = vadd.f32 %v1526, %v1612
    %v1614 = vpop.f32.mrb[0].mxu0
    %1615 = vdwg.mxu0
    %v1616 = vxor.u32 %v971, 2147483648
    %v1617 = vmul.f32 %v1616, 1.442695
    %v1618 = vpow.pop %v1617
    %v1619 = vadd.f32 %v1618, 1.0
    %v1620 = vrcp.pop %v1619
    %v1621 = vmul.f32 1.0, %v1620
    %v1622 = vmax.f32 %v973, 0.0
    %v1623 = vsub.f32 %v1622, %v1613
    %v1624 = vmul.f32 %v1621, %v1623
    %v1625 = vadd.f32 %v1613, %v1624
    %s1626 = scalar_lea.vmem [#allocation5], 384
    %v1627 = vld [vmem:[%s1626] sm:$0xff]
    %v1628 = vld [vmem:[%s1626 + $0x8] sm:$0xff]
    %v1629 = vld [vmem:[%s1626 + $0x10] sm:$0xff]
    %v1630 = vld [vmem:[%s1626 + $0x18] sm:$0xff]
    %v1631 = vld [vmem:[%s1626 + $0x20] sm:$0xff]
    %v1632 = vld [vmem:[%s1626 + $0x28] sm:$0xff]
    %v1633 = vld [vmem:[%s1626 + $0x30] sm:$0xff]
    %v1634 = vld [vmem:[%s1626 + $0x38] sm:$0xff]
    %v1635 = vld [vmem:[%s1626 + $0x40] sm:$0xff]
    %v1636 = vld [vmem:[%s1626 + $0x48] sm:$0xff]
    %v1637 = vld [vmem:[%s1626 + $0x50] sm:$0xff]
    %v1638 = vld [vmem:[%s1626 + $0x58] sm:$0xff]
    %v1639 = vld [vmem:[%s1626 + $0x60] sm:$0xff]
    %v1640 = vld [vmem:[%s1626 + $0x68] sm:$0xff]
    %v1641 = vld [vmem:[%s1626 + $0x70] sm:$0xff]
    %v1642 = vld [vmem:[%s1626 + $0x78] sm:$0xff]
    %v1643 = vld [vmem:[%s1626 + $0x80] sm:$0xff]
    %v1644 = vld [vmem:[%s1626 + $0x88] sm:$0xff]
    %v1645 = vld [vmem:[%s1626 + $0x90] sm:$0xff]
    %v1646 = vld [vmem:[%s1626 + $0x98] sm:$0xff]
    %v1647 = vld [vmem:[%s1626 + $0xa0] sm:$0xff]
    %v1648 = vld [vmem:[%s1626 + $0xa8] sm:$0xff]
    %v1649 = vld [vmem:[%s1626 + $0xb0] sm:$0xff]
    %v1650 = vld [vmem:[%s1626 + $0xb8] sm:$0xff]
    %v1651 = vld [vmem:[%s1626 + $0xc0] sm:$0xff]
    %v1652 = vld [vmem:[%s1626 + $0xc8] sm:$0xff]
    %v1653 = vld [vmem:[%s1626 + $0xd0] sm:$0xff]
    %v1654 = vld [vmem:[%s1626 + $0xd8] sm:$0xff]
    %v1655 = vld [vmem:[%s1626 + $0xe0] sm:$0xff]
    %v1656 = vld [vmem:[%s1626 + $0xe8] sm:$0xff]
    %v1657 = vld [vmem:[%s1626 + $0xf0] sm:$0xff]
    %v1658 = vld [vmem:[%s1626 + $0xf8] sm:$0xff]
    %v1659 = vld [vmem:[%s1626 + $0x100] sm:$0xff]
    %v1660 = vld [vmem:[%s1626 + $0x108] sm:$0xff]
    %v1661 = vld [vmem:[%s1626 + $0x110] sm:$0xff]
    %v1662 = vld [vmem:[%s1626 + $0x118] sm:$0xff]
    %v1663 = vld [vmem:[%s1626 + $0x120] sm:$0xff]
    %v1664 = vld [vmem:[%s1626 + $0x128] sm:$0xff]
    %v1665 = vld [vmem:[%s1626 + $0x130] sm:$0xff]
    %v1666 = vld [vmem:[%s1626 + $0x138] sm:$0xff]
    %v1667 = vld [vmem:[%s1626 + $0x140] sm:$0xff]
    %v1668 = vld [vmem:[%s1626 + $0x148] sm:$0xff]
    %v1669 = vld [vmem:[%s1626 + $0x150] sm:$0xff]
    %v1670 = vld [vmem:[%s1626 + $0x158] sm:$0xff]
    %v1671 = vld [vmem:[%s1626 + $0x160] sm:$0xff]
    %v1672 = vld [vmem:[%s1626 + $0x168] sm:$0xff]
    %v1673 = vld [vmem:[%s1626 + $0x170] sm:$0xff]
    %v1674 = vld [vmem:[%s1626 + $0x178] sm:$0xff]
    %s1675 = scalar_lea.vmem [#allocation7], 3
    %v1676 = vld [vmem:[%s1675] sm:$0x7]
    %v1678 = vlaneseq
    %v1679 = vshrl.u32 %v1678, 7
    %v1680 = vsub.s32 0, %v1679
    %v1681 = vrot.slane %v1676, %v1680
    %v1682 = vlaneseq
    %v1683 = vshrl.u32 %v1682, 7
    %v1684 = vsub.s32 1, %v1683
    %v1685 = vrot.slane %v1676, %v1684
    %v1686 = vlaneseq
    %v1687 = vshrl.u32 %v1686, 7
    %v1688 = vsub.s32 2, %v1687
    %v1689 = vrot.slane %v1676, %v1688
    %v1693 = vand.u32 %v1628, 4294901760
    %1694 = vmatprep.subr.mxu0 %v1693
    %v1695 = vand.u32 %v1627, 4294901760
    %1696 = vmatpush1.msra.mxu0 %v1695
    %v1697 = vand.u32 %v1631, 4294901760
    %1698 = vmatprep.subr.mxu0 %v1697
    %v1699 = vand.u32 %v1630, 4294901760
    %1700 = vmatpush1.msra.mxu0 %v1699
    %v1701 = vand.u32 %v1634, 4294901760
    %1702 = vmatprep.subr.mxu0 %v1701
    %v1703 = vand.u32 %v1633, 4294901760
    %1704 = vmatpush1.msra.mxu0 %v1703
    %v1705 = vand.u32 %v1637, 4294901760
    %1706 = vmatprep.subr.mxu0 %v1705
    %v1707 = vand.u32 %v1636, 4294901760
    %1708 = vmatpush1.msra.mxu0 %v1707
    %v1709 = vand.u32 %v1640, 4294901760
    %1710 = vmatprep.subr.mxu0 %v1709
    %v1711 = vand.u32 %v1639, 4294901760
    %1712 = vmatpush1.msra.mxu0 %v1711
    %v1713 = vand.u32 %v1643, 4294901760
    %1714 = vmatprep.subr.mxu0 %v1713
    %v1715 = vand.u32 %v1642, 4294901760
    %1716 = vmatpush1.msra.mxu0 %v1715
    %v1717 = vand.u32 %v1646, 4294901760
    %1718 = vmatprep.subr.mxu0 %v1717
    %v1719 = vand.u32 %v1645, 4294901760
    %1720 = vmatpush1.msra.mxu0 %v1719
    %v1721 = vand.u32 %v1649, 4294901760
    %1722 = vmatprep.subr.mxu0 %v1721
    %v1723 = vand.u32 %v1648, 4294901760
    %1724 = vmatpush1.msra.mxu0 %v1723
    %v1725 = vand.u32 %v1652, 4294901760
    %1726 = vmatprep.subr.mxu0 %v1725
    %v1727 = vand.u32 %v1651, 4294901760
    %1728 = vmatpush1.msra.mxu0 %v1727
    %v1729 = vand.u32 %v1655, 4294901760
    %1730 = vmatprep.subr.mxu0 %v1729
    %v1731 = vand.u32 %v1654, 4294901760
    %1732 = vmatpush1.msra.mxu0 %v1731
    %v1733 = vand.u32 %v1658, 4294901760
    %1734 = vmatprep.subr.mxu0 %v1733
    %v1735 = vand.u32 %v1657, 4294901760
    %1736 = vmatpush1.msra.mxu0 %v1735
    %v1737 = vand.u32 %v1661, 4294901760
    %1738 = vmatprep.subr.mxu0 %v1737
    %v1739 = vand.u32 %v1660, 4294901760
    %1740 = vmatpush1.msra.mxu0 %v1739
    %v1741 = vand.u32 %v1664, 4294901760
    %1742 = vmatprep.subr.mxu0 %v1741
    %v1743 = vand.u32 %v1663, 4294901760
    %1744 = vmatpush1.msra.mxu0 %v1743
    %v1745 = vand.u32 %v1667, 4294901760
    %1746 = vmatprep.subr.mxu0 %v1745
    %v1747 = vand.u32 %v1666, 4294901760
    %1748 = vmatpush1.msra.mxu0 %v1747
    %v1749 = vand.u32 %v1670, 4294901760
    %1750 = vmatprep.subr.mxu0 %v1749
    %v1751 = vand.u32 %v1669, 4294901760
    %1752 = vmatpush1.msra.mxu0 %v1751
    %v1753 = vand.u32 %v1673, 4294901760
    %1754 = vmatprep.subr.mxu0 %v1753
    %v1755 = vand.u32 %v1672, 4294901760
    %1756 = vmatpush1.msra.mxu0 %v1755
    %1757 = vmatprep.subr.mxu0 0.0
    %1758 = vmatpush1.msra.mxu0 0.0
    %1759 = vmatprep.subr.mxu0 0.0
    %1760 = vmatpush1.msra.mxu0 0.0
    %1761 = vmatprep.subr.mxu0 0.0
    %1762 = vmatpush1.msra.mxu0 0.0
    %1763 = vmatprep.subr.mxu0 0.0
    %1764 = vmatpush1.msra.mxu0 0.0
    %1765 = vmatprep.subr.mxu0 0.0
    %1766 = vmatpush1.msra.mxu0 0.0
    %1767 = vmatprep.subr.mxu0 0.0
    %1768 = vmatpush1.msra.mxu0 0.0
    %1769 = vmatprep.subr.mxu0 0.0
    %1770 = vmatpush1.msra.mxu0 0.0
    %1771 = vmatprep.subr.mxu0 0.0
    %1772 = vmatpush1.msra.mxu0 0.0
    %1773 = vmatprep.subr.mxu0 0.0
    %1774 = vmatpush1.msra.mxu0 0.0
    %1775 = vmatprep.subr.mxu0 0.0
    %1776 = vmatpush1.msra.mxu0 0.0
    %1777 = vmatprep.subr.mxu0 0.0
    %1778 = vmatpush1.msra.mxu0 0.0
    %1779 = vmatprep.subr.mxu0 0.0
    %1780 = vmatpush1.msra.mxu0 0.0
    %1781 = vmatprep.subr.mxu0 0.0
    %1782 = vmatpush1.msra.mxu0 0.0
    %1783 = vmatprep.subr.mxu0 0.0
    %1784 = vmatpush1.msra.mxu0 0.0
    %1785 = vmatprep.subr.mxu0 0.0
    %1786 = vmatpush1.msra.mxu0 0.0
    %1787 = vmatprep.subr.mxu0 0.0
    %1788 = vmatpush1.msra.mxu0 0.0
    %1789 = vmatprep.mubr.f32.mxu0 0.0
    %v1790 = vand.u32 %v1625, 4294901760
    %v1791 = vsub.f32 %v1625, %v1790
    %v1792 = vand.u32 %v1791, 4294901760
    %v1793 = vsub.f32 %v1791, %v1792
    %v1794 = vand.u32 %v1793, 4294901760
    %1795 = vmatmul.mubr.f32.gmra.mrb[0].mxu0 %v1794
    %v1796 = vpop.f32.mrb[0].mxu0
    %v1797 = vadd.f32 %v1681, %v1796
    %v1798 = vpop.f32.mrb[0].mxu0
    %v1799 = vadd.f32 %v1685, %v1798
    %1800 = vdwg.mxu0
    %v1801 = vand.u32 %v1628, 4294901760
    %v1802 = vsub.f32 %v1628, %v1801
    %v1803 = vand.u32 %v1802, 4294901760
    %v1804 = vsub.f32 %v1802, %v1803
    %v1805 = vand.u32 %v1804, 4294901760
    %1806 = vmatprep.subr.mxu0 %v1805
    %v1807 = vand.u32 %v1627, 4294901760
    %v1808 = vsub.f32 %v1627, %v1807
    %v1809 = vand.u32 %v1808, 4294901760
    %v1810 = vsub.f32 %v1808, %v1809
    %v1811 = vand.u32 %v1810, 4294901760
    %1812 = vmatpush1.msra.mxu0 %v1811
    %v1813 = vand.u32 %v1631, 4294901760
    %v1814 = vsub.f32 %v1631, %v1813
    %v1815 = vand.u32 %v1814, 4294901760
    %v1816 = vsub.f32 %v1814, %v1815
    %v1817 = vand.u32 %v1816, 4294901760
    %1818 = vmatprep.subr.mxu0 %v1817
    %v1819 = vand.u32 %v1630, 4294901760
    %v1820 = vsub.f32 %v1630, %v1819
    %v1821 = vand.u32 %v1820, 4294901760
    %v1822 = vsub.f32 %v1820, %v1821
    %v1823 = vand.u32 %v1822, 4294901760
    %1824 = vmatpush1.msra.mxu0 %v1823
    %v1825 = vand.u32 %v1634, 4294901760
    %v1826 = vsub.f32 %v1634, %v1825
    %v1827 = vand.u32 %v1826, 4294901760
    %v1828 = vsub.f32 %v1826, %v1827
    %v1829 = vand.u32 %v1828, 4294901760
    %1830 = vmatprep.subr.mxu0 %v1829
    %v1831 = vand.u32 %v1633, 4294901760
    %v1832 = vsub.f32 %v1633, %v1831
    %v1833 = vand.u32 %v1832, 4294901760
    %v1834 = vsub.f32 %v1832, %v1833
    %v1835 = vand.u32 %v1834, 4294901760
    %1836 = vmatpush1.msra.mxu0 %v1835
    %v1837 = vand.u32 %v1637, 4294901760
    %v1838 = vsub.f32 %v1637, %v1837
    %v1839 = vand.u32 %v1838, 4294901760
    %v1840 = vsub.f32 %v1838, %v1839
    %v1841 = vand.u32 %v1840, 4294901760
    %1842 = vmatprep.subr.mxu0 %v1841
    %v1843 = vand.u32 %v1636, 4294901760
    %v1844 = vsub.f32 %v1636, %v1843
    %v1845 = vand.u32 %v1844, 4294901760
    %v1846 = vsub.f32 %v1844, %v1845
    %v1847 = vand.u32 %v1846, 4294901760
    %1848 = vmatpush1.msra.mxu0 %v1847
    %v1849 = vand.u32 %v1640, 4294901760
    %v1850 = vsub.f32 %v1640, %v1849
    %v1851 = vand.u32 %v1850, 4294901760
    %v1852 = vsub.f32 %v1850, %v1851
    %v1853 = vand.u32 %v1852, 4294901760
    %1854 = vmatprep.subr.mxu0 %v1853
    %v1855 = vand.u32 %v1639, 4294901760
    %v1856 = vsub.f32 %v1639, %v1855
    %v1857 = vand.u32 %v1856, 4294901760
    %v1858 = vsub.f32 %v1856, %v1857
    %v1859 = vand.u32 %v1858, 4294901760
    %1860 = vmatpush1.msra.mxu0 %v1859
    %v1861 = vand.u32 %v1643, 4294901760
    %v1862 = vsub.f32 %v1643, %v1861
    %v1863 = vand.u32 %v1862, 4294901760
    %v1864 = vsub.f32 %v1862, %v1863
    %v1865 = vand.u32 %v1864, 4294901760
    %1866 = vmatprep.subr.mxu0 %v1865
    %v1867 = vand.u32 %v1642, 4294901760
    %v1868 = vsub.f32 %v1642, %v1867
    %v1869 = vand.u32 %v1868, 4294901760
    %v1870 = vsub.f32 %v1868, %v1869
    %v1871 = vand.u32 %v1870, 4294901760
    %1872 = vmatpush1.msra.mxu0 %v1871
    %v1873 = vand.u32 %v1646, 4294901760
    %v1874 = vsub.f32 %v1646, %v1873
    %v1875 = vand.u32 %v1874, 4294901760
    %v1876 = vsub.f32 %v1874, %v1875
    %v1877 = vand.u32 %v1876, 4294901760
    %1878 = vmatprep.subr.mxu0 %v1877
    %v1879 = vand.u32 %v1645, 4294901760
    %v1880 = vsub.f32 %v1645, %v1879
    %v1881 = vand.u32 %v1880, 4294901760
    %v1882 = vsub.f32 %v1880, %v1881
    %v1883 = vand.u32 %v1882, 4294901760
    %1884 = vmatpush1.msra.mxu0 %v1883
    %v1885 = vand.u32 %v1649, 4294901760
    %v1886 = vsub.f32 %v1649, %v1885
    %v1887 = vand.u32 %v1886, 4294901760
    %v1888 = vsub.f32 %v1886, %v1887
    %v1889 = vand.u32 %v1888, 4294901760
    %1890 = vmatprep.subr.mxu0 %v1889
    %v1891 = vand.u32 %v1648, 4294901760
    %v1892 = vsub.f32 %v1648, %v1891
    %v1893 = vand.u32 %v1892, 4294901760
    %v1894 = vsub.f32 %v1892, %v1893
    %v1895 = vand.u32 %v1894, 4294901760
    %1896 = vmatpush1.msra.mxu0 %v1895
    %v1897 = vand.u32 %v1652, 4294901760
    %v1898 = vsub.f32 %v1652, %v1897
    %v1899 = vand.u32 %v1898, 4294901760
    %v1900 = vsub.f32 %v1898, %v1899
    %v1901 = vand.u32 %v1900, 4294901760
    %1902 = vmatprep.subr.mxu0 %v1901
    %v1903 = vand.u32 %v1651, 4294901760
    %v1904 = vsub.f32 %v1651, %v1903
    %v1905 = vand.u32 %v1904, 4294901760
    %v1906 = vsub.f32 %v1904, %v1905
    %v1907 = vand.u32 %v1906, 4294901760
    %1908 = vmatpush1.msra.mxu0 %v1907
    %v1909 = vand.u32 %v1655, 4294901760
    %v1910 = vsub.f32 %v1655, %v1909
    %v1911 = vand.u32 %v1910, 4294901760
    %v1912 = vsub.f32 %v1910, %v1911
    %v1913 = vand.u32 %v1912, 4294901760
    %1914 = vmatprep.subr.mxu0 %v1913
    %v1915 = vand.u32 %v1654, 4294901760
    %v1916 = vsub.f32 %v1654, %v1915
    %v1917 = vand.u32 %v1916, 4294901760
    %v1918 = vsub.f32 %v1916, %v1917
    %v1919 = vand.u32 %v1918, 4294901760
    %1920 = vmatpush1.msra.mxu0 %v1919
    %v1921 = vand.u32 %v1658, 4294901760
    %v1922 = vsub.f32 %v1658, %v1921
    %v1923 = vand.u32 %v1922, 4294901760
    %v1924 = vsub.f32 %v1922, %v1923
    %v1925 = vand.u32 %v1924, 4294901760
    %1926 = vmatprep.subr.mxu0 %v1925
    %v1927 = vand.u32 %v1657, 4294901760
    %v1928 = vsub.f32 %v1657, %v1927
    %v1929 = vand.u32 %v1928, 4294901760
    %v1930 = vsub.f32 %v1928, %v1929
    %v1931 = vand.u32 %v1930, 4294901760
    %1932 = vmatpush1.msra.mxu0 %v1931
    %v1933 = vand.u32 %v1661, 4294901760
    %v1934 = vsub.f32 %v1661, %v1933
    %v1935 = vand.u32 %v1934, 4294901760
    %v1936 = vsub.f32 %v1934, %v1935
    %v1937 = vand.u32 %v1936, 4294901760
    %1938 = vmatprep.subr.mxu0 %v1937
    %v1939 = vand.u32 %v1660, 4294901760
    %v1940 = vsub.f32 %v1660, %v1939
    %v1941 = vand.u32 %v1940, 4294901760
    %v1942 = vsub.f32 %v1940, %v1941
    %v1943 = vand.u32 %v1942, 4294901760
    %1944 = vmatpush1.msra.mxu0 %v1943
    %v1945 = vand.u32 %v1664, 4294901760
    %v1946 = vsub.f32 %v1664, %v1945
    %v1947 = vand.u32 %v1946, 4294901760
    %v1948 = vsub.f32 %v1946, %v1947
    %v1949 = vand.u32 %v1948, 4294901760
    %1950 = vmatprep.subr.mxu0 %v1949
    %v1951 = vand.u32 %v1663, 4294901760
    %v1952 = vsub.f32 %v1663, %v1951
    %v1953 = vand.u32 %v1952, 4294901760
    %v1954 = vsub.f32 %v1952, %v1953
    %v1955 = vand.u32 %v1954, 4294901760
    %1956 = vmatpush1.msra.mxu0 %v1955
    %v1957 = vand.u32 %v1667, 4294901760
    %v1958 = vsub.f32 %v1667, %v1957
    %v1959 = vand.u32 %v1958, 4294901760
    %v1960 = vsub.f32 %v1958, %v1959
    %v1961 = vand.u32 %v1960, 4294901760
    %1962 = vmatprep.subr.mxu0 %v1961
    %v1963 = vand.u32 %v1666, 4294901760
    %v1964 = vsub.f32 %v1666, %v1963
    %v1965 = vand.u32 %v1964, 4294901760
    %v1966 = vsub.f32 %v1964, %v1965
    %v1967 = vand.u32 %v1966, 4294901760
    %1968 = vmatpush1.msra.mxu0 %v1967
    %v1969 = vand.u32 %v1670, 4294901760
    %v1970 = vsub.f32 %v1670, %v1969
    %v1971 = vand.u32 %v1970, 4294901760
    %v1972 = vsub.f32 %v1970, %v1971
    %v1973 = vand.u32 %v1972, 4294901760
    %1974 = vmatprep.subr.mxu0 %v1973
    %v1975 = vand.u32 %v1669, 4294901760
    %v1976 = vsub.f32 %v1669, %v1975
    %v1977 = vand.u32 %v1976, 4294901760
    %v1978 = vsub.f32 %v1976, %v1977
    %v1979 = vand.u32 %v1978, 4294901760
    %1980 = vmatpush1.msra.mxu0 %v1979
    %v1981 = vand.u32 %v1673, 4294901760
    %v1982 = vsub.f32 %v1673, %v1981
    %v1983 = vand.u32 %v1982, 4294901760
    %v1984 = vsub.f32 %v1982, %v1983
    %v1985 = vand.u32 %v1984, 4294901760
    %1986 = vmatprep.subr.mxu0 %v1985
    %v1987 = vand.u32 %v1672, 4294901760
    %v1988 = vsub.f32 %v1672, %v1987
    %v1989 = vand.u32 %v1988, 4294901760
    %v1990 = vsub.f32 %v1988, %v1989
    %v1991 = vand.u32 %v1990, 4294901760
    %1992 = vmatpush1.msra.mxu0 %v1991
    %1993 = vmatprep.subr.mxu0 0.0
    %1994 = vmatpush1.msra.mxu0 0.0
    %1995 = vmatprep.subr.mxu0 0.0
    %1996 = vmatpush1.msra.mxu0 0.0
    %1997 = vmatprep.subr.mxu0 0.0
    %1998 = vmatpush1.msra.mxu0 0.0
    %1999 = vmatprep.subr.mxu0 0.0
    %2000 = vmatpush1.msra.mxu0 0.0
    %2001 = vmatprep.subr.mxu0 0.0
    %2002 = vmatpush1.msra.mxu0 0.0
    %2003 = vmatprep.subr.mxu0 0.0
    %2004 = vmatpush1.msra.mxu0 0.0
    %2005 = vmatprep.subr.mxu0 0.0
    %2006 = vmatpush1.msra.mxu0 0.0
    %2007 = vmatprep.subr.mxu0 0.0
    %2008 = vmatpush1.msra.mxu0 0.0
    %2009 = vmatprep.subr.mxu0 0.0
    %2010 = vmatpush1.msra.mxu0 0.0
    %2011 = vmatprep.subr.mxu0 0.0
    %2012 = vmatpush1.msra.mxu0 0.0
    %2013 = vmatprep.subr.mxu0 0.0
    %2014 = vmatpush1.msra.mxu0 0.0
    %2015 = vmatprep.subr.mxu0 0.0
    %2016 = vmatpush1.msra.mxu0 0.0
    %2017 = vmatprep.subr.mxu0 0.0
    %2018 = vmatpush1.msra.mxu0 0.0
    %2019 = vmatprep.subr.mxu0 0.0
    %2020 = vmatpush1.msra.mxu0 0.0
    %2021 = vmatprep.subr.mxu0 0.0
    %2022 = vmatpush1.msra.mxu0 0.0
    %2023 = vmatprep.subr.mxu0 0.0
    %2024 = vmatpush1.msra.mxu0 0.0
    %2025 = vmatprep.mubr.f32.mxu0 0.0
    %v2026 = vand.u32 %v1625, 4294901760
    %2027 = vmatmul.mubr.f32.gmra.mrb[0].mxu0 %v2026
    %v2028 = vpop.f32.mrb[0].mxu0
    %v2029 = vadd.f32 %v1797, %v2028
    %v2030 = vpop.f32.mrb[0].mxu0
    %v2031 = vadd.f32 %v1799, %v2030
    %2032 = vdwg.mxu0
    %v2033 = vand.u32 %v1628, 4294901760
    %v2034 = vsub.f32 %v1628, %v2033
    %2035 = vmatprep.subr.mxu0 %v2034
    %v2036 = vand.u32 %v1627, 4294901760
    %v2037 = vsub.f32 %v1627, %v2036
    %2038 = vmatpush1.msra.mxu0 %v2037
    %v2039 = vand.u32 %v1631, 4294901760
    %v2040 = vsub.f32 %v1631, %v2039
    %2041 = vmatprep.subr.mxu0 %v2040
    %v2042 = vand.u32 %v1630, 4294901760
    %v2043 = vsub.f32 %v1630, %v2042
    %2044 = vmatpush1.msra.mxu0 %v2043
    %v2045 = vand.u32 %v1634, 4294901760
    %v2046 = vsub.f32 %v1634, %v2045
    %2047 = vmatprep.subr.mxu0 %v2046
    %v2048 = vand.u32 %v1633, 4294901760
    %v2049 = vsub.f32 %v1633, %v2048
    %2050 = vmatpush1.msra.mxu0 %v2049
    %v2051 = vand.u32 %v1637, 4294901760
    %v2052 = vsub.f32 %v1637, %v2051
    %2053 = vmatprep.subr.mxu0 %v2052
    %v2054 = vand.u32 %v1636, 4294901760
    %v2055 = vsub.f32 %v1636, %v2054
    %2056 = vmatpush1.msra.mxu0 %v2055
    %v2057 = vand.u32 %v1640, 4294901760
    %v2058 = vsub.f32 %v1640, %v2057
    %2059 = vmatprep.subr.mxu0 %v2058
    %v2060 = vand.u32 %v1639, 4294901760
    %v2061 = vsub.f32 %v1639, %v2060
    %2062 = vmatpush1.msra.mxu0 %v2061
    %v2063 = vand.u32 %v1643, 4294901760
    %v2064 = vsub.f32 %v1643, %v2063
    %2065 = vmatprep.subr.mxu0 %v2064
    %v2066 = vand.u32 %v1642, 4294901760
    %v2067 = vsub.f32 %v1642, %v2066
    %2068 = vmatpush1.msra.mxu0 %v2067
    %v2069 = vand.u32 %v1646, 4294901760
    %v2070 = vsub.f32 %v1646, %v2069
    %2071 = vmatprep.subr.mxu0 %v2070
    %v2072 = vand.u32 %v1645, 4294901760
    %v2073 = vsub.f32 %v1645, %v2072
    %2074 = vmatpush1.msra.mxu0 %v2073
    %v2075 = vand.u32 %v1649, 4294901760
    %v2076 = vsub.f32 %v1649, %v2075
    %2077 = vmatprep.subr.mxu0 %v2076
    %v2078 = vand.u32 %v1648, 4294901760
    %v2079 = vsub.f32 %v1648, %v2078
    %2080 = vmatpush1.msra.mxu0 %v2079
    %v2081 = vand.u32 %v1652, 4294901760
    %v2082 = vsub.f32 %v1652, %v2081
    %2083 = vmatprep.subr.mxu0 %v2082
    %v2084 = vand.u32 %v1651, 4294901760
    %v2085 = vsub.f32 %v1651, %v2084
    %2086 = vmatpush1.msra.mxu0 %v2085
    %v2087 = vand.u32 %v1655, 4294901760
    %v2088 = vsub.f32 %v1655, %v2087
    %2089 = vmatprep.subr.mxu0 %v2088
    %v2090 = vand.u32 %v1654, 4294901760
    %v2091 = vsub.f32 %v1654, %v2090
    %2092 = vmatpush1.msra.mxu0 %v2091
    %v2093 = vand.u32 %v1658, 4294901760
    %v2094 = vsub.f32 %v1658, %v2093
    %2095 = vmatprep.subr.mxu0 %v2094
    %v2096 = vand.u32 %v1657, 4294901760
    %v2097 = vsub.f32 %v1657, %v2096
    %2098 = vmatpush1.msra.mxu0 %v2097
    %v2099 = vand.u32 %v1661, 4294901760
    %v2100 = vsub.f32 %v1661, %v2099
    %2101 = vmatprep.subr.mxu0 %v2100
    %v2102 = vand.u32 %v1660, 4294901760
    %v2103 = vsub.f32 %v1660, %v2102
    %2104 = vmatpush1.msra.mxu0 %v2103
    %v2105 = vand.u32 %v1664, 4294901760
    %v2106 = vsub.f32 %v1664, %v2105
    %2107 = vmatprep.subr.mxu0 %v2106
    %v2108 = vand.u32 %v1663, 4294901760
    %v2109 = vsub.f32 %v1663, %v2108
    %2110 = vmatpush1.msra.mxu0 %v2109
    %v2111 = vand.u32 %v1667, 4294901760
    %v2112 = vsub.f32 %v1667, %v2111
    %2113 = vmatprep.subr.mxu0 %v2112
    %v2114 = vand.u32 %v1666, 4294901760
    %v2115 = vsub.f32 %v1666, %v2114
    %2116 = vmatpush1.msra.mxu0 %v2115
    %v2117 = vand.u32 %v1670, 4294901760
    %v2118 = vsub.f32 %v1670, %v2117
    %2119 = vmatprep.subr.mxu0 %v2118
    %v2120 = vand.u32 %v1669, 4294901760
    %v2121 = vsub.f32 %v1669, %v2120
    %2122 = vmatpush1.msra.mxu0 %v2121
    %v2123 = vand.u32 %v1673, 4294901760
    %v2124 = vsub.f32 %v1673, %v2123
    %2125 = vmatprep.subr.mxu0 %v2124
    %v2126 = vand.u32 %v1672, 4294901760
    %v2127 = vsub.f32 %v1672, %v2126
    %2128 = vmatpush1.msra.mxu0 %v2127
    %2129 = vmatprep.subr.mxu0 0.0
    %2130 = vmatpush1.msra.mxu0 0.0
    %2131 = vmatprep.subr.mxu0 0.0
    %2132 = vmatpush1.msra.mxu0 0.0
    %2133 = vmatprep.subr.mxu0 0.0
    %2134 = vmatpush1.msra.mxu0 0.0
    %2135 = vmatprep.subr.mxu0 0.0
    %2136 = vmatpush1.msra.mxu0 0.0
    %2137 = vmatprep.subr.mxu0 0.0
    %2138 = vmatpush1.msra.mxu0 0.0
    %2139 = vmatprep.subr.mxu0 0.0
    %2140 = vmatpush1.msra.mxu0 0.0
    %2141 = vmatprep.subr.mxu0 0.0
    %2142 = vmatpush1.msra.mxu0 0.0
    %2143 = vmatprep.subr.mxu0 0.0
    %2144 = vmatpush1.msra.mxu0 0.0
    %2145 = vmatprep.subr.mxu0 0.0
    %2146 = vmatpush1.msra.mxu0 0.0
    %2147 = vmatprep.subr.mxu0 0.0
    %2148 = vmatpush1.msra.mxu0 0.0
    %2149 = vmatprep.subr.mxu0 0.0
    %2150 = vmatpush1.msra.mxu0 0.0
    %2151 = vmatprep.subr.mxu0 0.0
    %2152 = vmatpush1.msra.mxu0 0.0
    %2153 = vmatprep.subr.mxu0 0.0
    %2154 = vmatpush1.msra.mxu0 0.0
    %2155 = vmatprep.subr.mxu0 0.0
    %2156 = vmatpush1.msra.mxu0 0.0
    %2157 = vmatprep.subr.mxu0 0.0
    %2158 = vmatpush1.msra.mxu0 0.0
    %2159 = vmatprep.subr.mxu0 0.0
    %2160 = vmatpush1.msra.mxu0 0.0
    %2161 = vmatprep.mubr.f32.mxu0 0.0
    %v2162 = vand.u32 %v1625, 4294901760
    %v2163 = vsub.f32 %v1625, %v2162
    %2164 = vmatmul.mubr.f32.gmra.mrb[0].mxu0 %v2163
    %v2165 = vpop.f32.mrb[0].mxu0
    %v2166 = vadd.f32 %v2029, %v2165
    %v2167 = vpop.f32.mrb[0].mxu0
    %v2168 = vadd.f32 %v2031, %v2167
    %2169 = vdwg.mxu0
    %v2170 = vand.u32 %v1628, 4294901760
    %2171 = vmatprep.subr.mxu0 %v2170
    %v2172 = vand.u32 %v1627, 4294901760
    %2173 = vmatpush1.msra.mxu0 %v2172
    %v2174 = vand.u32 %v1631, 4294901760
    %2175 = vmatprep.subr.mxu0 %v2174
    %v2176 = vand.u32 %v1630, 4294901760
    %2177 = vmatpush1.msra.mxu0 %v2176
    %v2178 = vand.u32 %v1634, 4294901760
    %2179 = vmatprep.subr.mxu0 %v2178
    %v2180 = vand.u32 %v1633, 4294901760
    %2181 = vmatpush1.msra.mxu0 %v2180
    %v2182 = vand.u32 %v1637, 4294901760
    %2183 = vmatprep.subr.mxu0 %v2182
    %v2184 = vand.u32 %v1636, 4294901760
    %2185 = vmatpush1.msra.mxu0 %v2184
    %v2186 = vand.u32 %v1640, 4294901760
    %2187 = vmatprep.subr.mxu0 %v2186
    %v2188 = vand.u32 %v1639, 4294901760
    %2189 = vmatpush1.msra.mxu0 %v2188
    %v2190 = vand.u32 %v1643, 4294901760
    %2191 = vmatprep.subr.mxu0 %v2190
    %v2192 = vand.u32 %v1642, 4294901760
    %2193 = vmatpush1.msra.mxu0 %v2192
    %v2194 = vand.u32 %v1646, 4294901760
    %2195 = vmatprep.subr.mxu0 %v2194
    %v2196 = vand.u32 %v1645, 4294901760
    %2197 = vmatpush1.msra.mxu0 %v2196
    %v2198 = vand.u32 %v1649, 4294901760
    %2199 = vmatprep.subr.mxu0 %v2198
    %v2200 = vand.u32 %v1648, 4294901760
    %2201 = vmatpush1.msra.mxu0 %v2200
    %v2202 = vand.u32 %v1652, 4294901760
    %2203 = vmatprep.subr.mxu0 %v2202
    %v2204 = vand.u32 %v1651, 4294901760
    %2205 = vmatpush1.msra.mxu0 %v2204
    %v2206 = vand.u32 %v1655, 4294901760
    %2207 = vmatprep.subr.mxu0 %v2206
    %v2208 = vand.u32 %v1654, 4294901760
    %2209 = vmatpush1.msra.mxu0 %v2208
    %v2210 = vand.u32 %v1658, 4294901760
    %2211 = vmatprep.subr.mxu0 %v2210
    %v2212 = vand.u32 %v1657, 4294901760
    %2213 = vmatpush1.msra.mxu0 %v2212
    %v2214 = vand.u32 %v1661, 4294901760
    %2215 = vmatprep.subr.mxu0 %v2214
    %v2216 = vand.u32 %v1660, 4294901760
    %2217 = vmatpush1.msra.mxu0 %v2216
    %v2218 = vand.u32 %v1664, 4294901760
    %2219 = vmatprep.subr.mxu0 %v2218
    %v2220 = vand.u32 %v1663, 4294901760
    %2221 = vmatpush1.msra.mxu0 %v2220
    %v2222 = vand.u32 %v1667, 4294901760
    %2223 = vmatprep.subr.mxu0 %v2222
    %v2224 = vand.u32 %v1666, 4294901760
    %2225 = vmatpush1.msra.mxu0 %v2224
    %v2226 = vand.u32 %v1670, 4294901760
    %2227 = vmatprep.subr.mxu0 %v2226
    %v2228 = vand.u32 %v1669, 4294901760
    %2229 = vmatpush1.msra.mxu0 %v2228
    %v2230 = vand.u32 %v1673, 4294901760
    %2231 = vmatprep.subr.mxu0 %v2230
    %v2232 = vand.u32 %v1672, 4294901760
    %2233 = vmatpush1.msra.mxu0 %v2232
    %2234 = vmatprep.subr.mxu0 0.0
    %2235 = vmatpush1.msra.mxu0 0.0
    %2236 = vmatprep.subr.mxu0 0.0
    %2237 = vmatpush1.msra.mxu0 0.0
    %2238 = vmatprep.subr.mxu0 0.0
    %2239 = vmatpush1.msra.mxu0 0.0
    %2240 = vmatprep.subr.mxu0 0.0
    %2241 = vmatpush1.msra.mxu0 0.0
    %2242 = vmatprep.subr.mxu0 0.0
    %2243 = vmatpush1.msra.mxu0 0.0
    %2244 = vmatprep.subr.mxu0 0.0
    %2245 = vmatpush1.msra.mxu0 0.0
    %2246 = vmatprep.subr.mxu0 0.0
    %2247 = vmatpush1.msra.mxu0 0.0
    %2248 = vmatprep.subr.mxu0 0.0
    %2249 = vmatpush1.msra.mxu0 0.0
    %2250 = vmatprep.subr.mxu0 0.0
    %2251 = vmatpush1.msra.mxu0 0.0
    %2252 = vmatprep.subr.mxu0 0.0
    %2253 = vmatpush1.msra.mxu0 0.0
    %2254 = vmatprep.subr.mxu0 0.0
    %2255 = vmatpush1.msra.mxu0 0.0
    %2256 = vmatprep.subr.mxu0 0.0
    %2257 = vmatpush1.msra.mxu0 0.0
    %2258 = vmatprep.subr.mxu0 0.0
    %2259 = vmatpush1.msra.mxu0 0.0
    %2260 = vmatprep.subr.mxu0 0.0
    %2261 = vmatpush1.msra.mxu0 0.0
    %2262 = vmatprep.subr.mxu0 0.0
    %2263 = vmatpush1.msra.mxu0 0.0
    %2264 = vmatprep.subr.mxu0 0.0
    %2265 = vmatpush1.msra.mxu0 0.0
    %2266 = vmatprep.mubr.f32.mxu0 0.0
    %v2267 = vand.u32 %v1625, 4294901760
    %v2268 = vsub.f32 %v1625, %v2267
    %v2269 = vand.u32 %v2268, 4294901760
    %2270 = vmatmul.mubr.f32.gmra.mrb[0].mxu0 %v2269
    %v2271 = vpop.f32.mrb[0].mxu0
    %v2272 = vadd.f32 %v2166, %v2271
    %v2273 = vpop.f32.mrb[0].mxu0
    %v2274 = vadd.f32 %v2168, %v2273
    %2275 = vdwg.mxu0
    %v2276 = vand.u32 %v1628, 4294901760
    %v2277 = vsub.f32 %v1628, %v2276
    %v2278 = vand.u32 %v2277, 4294901760
    %2279 = vmatprep.subr.mxu0 %v2278
    %v2280 = vand.u32 %v1627, 4294901760
    %v2281 = vsub.f32 %v1627, %v2280
    %v2282 = vand.u32 %v2281, 4294901760
    %2283 = vmatpush1.msra.mxu0 %v2282
    %v2284 = vand.u32 %v1631, 4294901760
    %v2285 = vsub.f32 %v1631, %v2284
    %v2286 = vand.u32 %v2285, 4294901760
    %2287 = vmatprep.subr.mxu0 %v2286
    %v2288 = vand.u32 %v1630, 4294901760
    %v2289 = vsub.f32 %v1630, %v2288
    %v2290 = vand.u32 %v2289, 4294901760
    %2291 = vmatpush1.msra.mxu0 %v2290
    %v2292 = vand.u32 %v1634, 4294901760
    %v2293 = vsub.f32 %v1634, %v2292
    %v2294 = vand.u32 %v2293, 4294901760
    %2295 = vmatprep.subr.mxu0 %v2294
    %v2296 = vand.u32 %v1633, 4294901760
    %v2297 = vsub.f32 %v1633, %v2296
    %v2298 = vand.u32 %v2297, 4294901760
    %2299 = vmatpush1.msra.mxu0 %v2298
    %v2300 = vand.u32 %v1637, 4294901760
    %v2301 = vsub.f32 %v1637, %v2300
    %v2302 = vand.u32 %v2301, 4294901760
    %2303 = vmatprep.subr.mxu0 %v2302
    %v2304 = vand.u32 %v1636, 4294901760
    %v2305 = vsub.f32 %v1636, %v2304
    %v2306 = vand.u32 %v2305, 4294901760
    %2307 = vmatpush1.msra.mxu0 %v2306
    %v2308 = vand.u32 %v1640, 4294901760
    %v2309 = vsub.f32 %v1640, %v2308
    %v2310 = vand.u32 %v2309, 4294901760
    %2311 = vmatprep.subr.mxu0 %v2310
    %v2312 = vand.u32 %v1639, 4294901760
    %v2313 = vsub.f32 %v1639, %v2312
    %v2314 = vand.u32 %v2313, 4294901760
    %2315 = vmatpush1.msra.mxu0 %v2314
    %v2316 = vand.u32 %v1643, 4294901760
    %v2317 = vsub.f32 %v1643, %v2316
    %v2318 = vand.u32 %v2317, 4294901760
    %2319 = vmatprep.subr.mxu0 %v2318
    %v2320 = vand.u32 %v1642, 4294901760
    %v2321 = vsub.f32 %v1642, %v2320
    %v2322 = vand.u32 %v2321, 4294901760
    %2323 = vmatpush1.msra.mxu0 %v2322
    %v2324 = vand.u32 %v1646, 4294901760
    %v2325 = vsub.f32 %v1646, %v2324
    %v2326 = vand.u32 %v2325, 4294901760
    %2327 = vmatprep.subr.mxu0 %v2326
    %v2328 = vand.u32 %v1645, 4294901760
    %v2329 = vsub.f32 %v1645, %v2328
    %v2330 = vand.u32 %v2329, 4294901760
    %2331 = vmatpush1.msra.mxu0 %v2330
    %v2332 = vand.u32 %v1649, 4294901760
    %v2333 = vsub.f32 %v1649, %v2332
    %v2334 = vand.u32 %v2333, 4294901760
    %2335 = vmatprep.subr.mxu0 %v2334
    %v2336 = vand.u32 %v1648, 4294901760
    %v2337 = vsub.f32 %v1648, %v2336
    %v2338 = vand.u32 %v2337, 4294901760
    %2339 = vmatpush1.msra.mxu0 %v2338
    %v2340 = vand.u32 %v1652, 4294901760
    %v2341 = vsub.f32 %v1652, %v2340
    %v2342 = vand.u32 %v2341, 4294901760
    %2343 = vmatprep.subr.mxu0 %v2342
    %v2344 = vand.u32 %v1651, 4294901760
    %v2345 = vsub.f32 %v1651, %v2344
    %v2346 = vand.u32 %v2345, 4294901760
    %2347 = vmatpush1.msra.mxu0 %v2346
    %v2348 = vand.u32 %v1655, 4294901760
    %v2349 = vsub.f32 %v1655, %v2348
    %v2350 = vand.u32 %v2349, 4294901760
    %2351 = vmatprep.subr.mxu0 %v2350
    %v2352 = vand.u32 %v1654, 4294901760
    %v2353 = vsub.f32 %v1654, %v2352
    %v2354 = vand.u32 %v2353, 4294901760
    %2355 = vmatpush1.msra.mxu0 %v2354
    %v2356 = vand.u32 %v1658, 4294901760
    %v2357 = vsub.f32 %v1658, %v2356
    %v2358 = vand.u32 %v2357, 4294901760
    %2359 = vmatprep.subr.mxu0 %v2358
    %v2360 = vand.u32 %v1657, 4294901760
    %v2361 = vsub.f32 %v1657, %v2360
    %v2362 = vand.u32 %v2361, 4294901760
    %2363 = vmatpush1.msra.mxu0 %v2362
    %v2364 = vand.u32 %v1661, 4294901760
    %v2365 = vsub.f32 %v1661, %v2364
    %v2366 = vand.u32 %v2365, 4294901760
    %2367 = vmatprep.subr.mxu0 %v2366
    %v2368 = vand.u32 %v1660, 4294901760
    %v2369 = vsub.f32 %v1660, %v2368
    %v2370 = vand.u32 %v2369, 4294901760
    %2371 = vmatpush1.msra.mxu0 %v2370
    %v2372 = vand.u32 %v1664, 4294901760
    %v2373 = vsub.f32 %v1664, %v2372
    %v2374 = vand.u32 %v2373, 4294901760
    %2375 = vmatprep.subr.mxu0 %v2374
    %v2376 = vand.u32 %v1663, 4294901760
    %v2377 = vsub.f32 %v1663, %v2376
    %v2378 = vand.u32 %v2377, 4294901760
    %2379 = vmatpush1.msra.mxu0 %v2378
    %v2380 = vand.u32 %v1667, 4294901760
    %v2381 = vsub.f32 %v1667, %v2380
    %v2382 = vand.u32 %v2381, 4294901760
    %2383 = vmatprep.subr.mxu0 %v2382
    %v2384 = vand.u32 %v1666, 4294901760
    %v2385 = vsub.f32 %v1666, %v2384
    %v2386 = vand.u32 %v2385, 4294901760
    %2387 = vmatpush1.msra.mxu0 %v2386
    %v2388 = vand.u32 %v1670, 4294901760
    %v2389 = vsub.f32 %v1670, %v2388
    %v2390 = vand.u32 %v2389, 4294901760
    %2391 = vmatprep.subr.mxu0 %v2390
    %v2392 = vand.u32 %v1669, 4294901760
    %v2393 = vsub.f32 %v1669, %v2392
    %v2394 = vand.u32 %v2393, 4294901760
    %2395 = vmatpush1.msra.mxu0 %v2394
    %v2396 = vand.u32 %v1673, 4294901760
    %v2397 = vsub.f32 %v1673, %v2396
    %v2398 = vand.u32 %v2397, 4294901760
    %2399 = vmatprep.subr.mxu0 %v2398
    %v2400 = vand.u32 %v1672, 4294901760
    %v2401 = vsub.f32 %v1672, %v2400
    %v2402 = vand.u32 %v2401, 4294901760
    %2403 = vmatpush1.msra.mxu0 %v2402
    %2404 = vmatprep.subr.mxu0 0.0
    %2405 = vmatpush1.msra.mxu0 0.0
    %2406 = vmatprep.subr.mxu0 0.0
    %2407 = vmatpush1.msra.mxu0 0.0
    %2408 = vmatprep.subr.mxu0 0.0
    %2409 = vmatpush1.msra.mxu0 0.0
    %2410 = vmatprep.subr.mxu0 0.0
    %2411 = vmatpush1.msra.mxu0 0.0
    %2412 = vmatprep.subr.mxu0 0.0
    %2413 = vmatpush1.msra.mxu0 0.0
    %2414 = vmatprep.subr.mxu0 0.0
    %2415 = vmatpush1.msra.mxu0 0.0
    %2416 = vmatprep.subr.mxu0 0.0
    %2417 = vmatpush1.msra.mxu0 0.0
    %2418 = vmatprep.subr.mxu0 0.0
    %2419 = vmatpush1.msra.mxu0 0.0
    %2420 = vmatprep.subr.mxu0 0.0
    %2421 = vmatpush1.msra.mxu0 0.0
    %2422 = vmatprep.subr.mxu0 0.0
    %2423 = vmatpush1.msra.mxu0 0.0
    %2424 = vmatprep.subr.mxu0 0.0
    %2425 = vmatpush1.msra.mxu0 0.0
    %2426 = vmatprep.subr.mxu0 0.0
    %2427 = vmatpush1.msra.mxu0 0.0
    %2428 = vmatprep.subr.mxu0 0.0
    %2429 = vmatpush1.msra.mxu0 0.0
    %2430 = vmatprep.subr.mxu0 0.0
    %2431 = vmatpush1.msra.mxu0 0.0
    %2432 = vmatprep.subr.mxu0 0.0
    %2433 = vmatpush1.msra.mxu0 0.0
    %2434 = vmatprep.subr.mxu0 0.0
    %2435 = vmatpush1.msra.mxu0 0.0
    %2436 = vmatprep.mubr.f32.mxu0 0.0
    %v2437 = vand.u32 %v1625, 4294901760
    %2438 = vmatmul.mubr.f32.gmra.mrb[0].mxu0 %v2437
    %v2439 = vpop.f32.mrb[0].mxu0
    %v2440 = vadd.f32 %v2272, %v2439
    %v2441 = vpop.f32.mrb[0].mxu0
    %v2442 = vadd.f32 %v2274, %v2441
    %2443 = vdwg.mxu0
    %v2444 = vand.u32 %v1628, 4294901760
    %2445 = vmatprep.subr.mxu0 %v2444
    %v2446 = vand.u32 %v1627, 4294901760
    %2447 = vmatpush1.msra.mxu0 %v2446
    %v2448 = vand.u32 %v1631, 4294901760
    %2449 = vmatprep.subr.mxu0 %v2448
    %v2450 = vand.u32 %v1630, 4294901760
    %2451 = vmatpush1.msra.mxu0 %v2450
    %v2452 = vand.u32 %v1634, 4294901760
    %2453 = vmatprep.subr.mxu0 %v2452
    %v2454 = vand.u32 %v1633, 4294901760
    %2455 = vmatpush1.msra.mxu0 %v2454
    %v2456 = vand.u32 %v1637, 4294901760
    %2457 = vmatprep.subr.mxu0 %v2456
    %v2458 = vand.u32 %v1636, 4294901760
    %2459 = vmatpush1.msra.mxu0 %v2458
    %v2460 = vand.u32 %v1640, 4294901760
    %2461 = vmatprep.subr.mxu0 %v2460
    %v2462 = vand.u32 %v1639, 4294901760
    %2463 = vmatpush1.msra.mxu0 %v2462
    %v2464 = vand.u32 %v1643, 4294901760
    %2465 = vmatprep.subr.mxu0 %v2464
    %v2466 = vand.u32 %v1642, 4294901760
    %2467 = vmatpush1.msra.mxu0 %v2466
    %v2468 = vand.u32 %v1646, 4294901760
    %2469 = vmatprep.subr.mxu0 %v2468
    %v2470 = vand.u32 %v1645, 4294901760
    %2471 = vmatpush1.msra.mxu0 %v2470
    %v2472 = vand.u32 %v1649, 4294901760
    %2473 = vmatprep.subr.mxu0 %v2472
    %v2474 = vand.u32 %v1648, 4294901760
    %2475 = vmatpush1.msra.mxu0 %v2474
    %v2476 = vand.u32 %v1652, 4294901760
    %2477 = vmatprep.subr.mxu0 %v2476
    %v2478 = vand.u32 %v1651, 4294901760
    %2479 = vmatpush1.msra.mxu0 %v2478
    %v2480 = vand.u32 %v1655, 4294901760
    %2481 = vmatprep.subr.mxu0 %v2480
    %v2482 = vand.u32 %v1654, 4294901760
    %2483 = vmatpush1.msra.mxu0 %v2482
    %v2484 = vand.u32 %v1658, 4294901760
    %2485 = vmatprep.subr.mxu0 %v2484
    %v2486 = vand.u32 %v1657, 4294901760
    %2487 = vmatpush1.msra.mxu0 %v2486
    %v2488 = vand.u32 %v1661, 4294901760
    %2489 = vmatprep.subr.mxu0 %v2488
    %v2490 = vand.u32 %v1660, 4294901760
    %2491 = vmatpush1.msra.mxu0 %v2490
    %v2492 = vand.u32 %v1664, 4294901760
    %2493 = vmatprep.subr.mxu0 %v2492
    %v2494 = vand.u32 %v1663, 4294901760
    %2495 = vmatpush1.msra.mxu0 %v2494
    %v2496 = vand.u32 %v1667, 4294901760
    %2497 = vmatprep.subr.mxu0 %v2496
    %v2498 = vand.u32 %v1666, 4294901760
    %2499 = vmatpush1.msra.mxu0 %v2498
    %v2500 = vand.u32 %v1670, 4294901760
    %2501 = vmatprep.subr.mxu0 %v2500
    %v2502 = vand.u32 %v1669, 4294901760
    %2503 = vmatpush1.msra.mxu0 %v2502
    %v2504 = vand.u32 %v1673, 4294901760
    %2505 = vmatprep.subr.mxu0 %v2504
    %v2506 = vand.u32 %v1672, 4294901760
    %2507 = vmatpush1.msra.mxu0 %v2506
    %2508 = vmatprep.subr.mxu0 0.0
    %2509 = vmatpush1.msra.mxu0 0.0
    %2510 = vmatprep.subr.mxu0 0.0
    %2511 = vmatpush1.msra.mxu0 0.0
    %2512 = vmatprep.subr.mxu0 0.0
    %2513 = vmatpush1.msra.mxu0 0.0
    %2514 = vmatprep.subr.mxu0 0.0
    %2515 = vmatpush1.msra.mxu0 0.0
    %2516 = vmatprep.subr.mxu0 0.0
    %2517 = vmatpush1.msra.mxu0 0.0
    %2518 = vmatprep.subr.mxu0 0.0
    %2519 = vmatpush1.msra.mxu0 0.0
    %2520 = vmatprep.subr.mxu0 0.0
    %2521 = vmatpush1.msra.mxu0 0.0
    %2522 = vmatprep.subr.mxu0 0.0
    %2523 = vmatpush1.msra.mxu0 0.0
    %2524 = vmatprep.subr.mxu0 0.0
    %2525 = vmatpush1.msra.mxu0 0.0
    %2526 = vmatprep.subr.mxu0 0.0
    %2527 = vmatpush1.msra.mxu0 0.0
    %2528 = vmatprep.subr.mxu0 0.0
    %2529 = vmatpush1.msra.mxu0 0.0
    %2530 = vmatprep.subr.mxu0 0.0
    %2531 = vmatpush1.msra.mxu0 0.0
    %2532 = vmatprep.subr.mxu0 0.0
    %2533 = vmatpush1.msra.mxu0 0.0
    %2534 = vmatprep.subr.mxu0 0.0
    %2535 = vmatpush1.msra.mxu0 0.0
    %2536 = vmatprep.subr.mxu0 0.0
    %2537 = vmatpush1.msra.mxu0 0.0
    %2538 = vmatprep.subr.mxu0 0.0
    %2539 = vmatpush1.msra.mxu0 0.0
    %2540 = vmatprep.mubr.f32.mxu0 0.0
    %v2541 = vand.u32 %v1625, 4294901760
    %2542 = vmatmul.mubr.f32.gmra.mrb[0].mxu0 %v2541
    %v2543 = vpop.f32.mrb[0].mxu0
    %v2544 = vadd.f32 %v2440, %v2543
    %v2545 = vpop.f32.mrb[0].mxu0
    %v2546 = vadd.f32 %v2442, %v2545
    %2547 = vdwg.mxu0
    %2548 = vmatprep.subr.mxu0 0.0
    %v2549 = vand.u32 %v1629, 4294901760
    %2550 = vmatpush1.msra.mxu0 %v2549
    %2551 = vmatprep.subr.mxu0 0.0
    %v2552 = vand.u32 %v1632, 4294901760
    %2553 = vmatpush1.msra.mxu0 %v2552
    %2554 = vmatprep.subr.mxu0 0.0
    %v2555 = vand.u32 %v1635, 4294901760
    %2556 = vmatpush1.msra.mxu0 %v2555
    %2557 = vmatprep.subr.mxu0 0.0
    %v2558 = vand.u32 %v1638, 4294901760
    %2559 = vmatpush1.msra.mxu0 %v2558
    %2560 = vmatprep.subr.mxu0 0.0
    %v2561 = vand.u32 %v1641, 4294901760
    %2562 = vmatpush1.msra.mxu0 %v2561
    %2563 = vmatprep.subr.mxu0 0.0
    %v2564 = vand.u32 %v1644, 4294901760
    %2565 = vmatpush1.msra.mxu0 %v2564
    %2566 = vmatprep.subr.mxu0 0.0
    %v2567 = vand.u32 %v1647, 4294901760
    %2568 = vmatpush1.msra.mxu0 %v2567
    %2569 = vmatprep.subr.mxu0 0.0
    %v2570 = vand.u32 %v1650, 4294901760
    %2571 = vmatpush1.msra.mxu0 %v2570
    %2572 = vmatprep.subr.mxu0 0.0
    %v2573 = vand.u32 %v1653, 4294901760
    %2574 = vmatpush1.msra.mxu0 %v2573
    %2575 = vmatprep.subr.mxu0 0.0
    %v2576 = vand.u32 %v1656, 4294901760
    %2577 = vmatpush1.msra.mxu0 %v2576
    %2578 = vmatprep.subr.mxu0 0.0
    %v2579 = vand.u32 %v1659, 4294901760
    %2580 = vmatpush1.msra.mxu0 %v2579
    %2581 = vmatprep.subr.mxu0 0.0
    %v2582 = vand.u32 %v1662, 4294901760
    %2583 = vmatpush1.msra.mxu0 %v2582
    %2584 = vmatprep.subr.mxu0 0.0
    %v2585 = vand.u32 %v1665, 4294901760
    %2586 = vmatpush1.msra.mxu0 %v2585
    %2587 = vmatprep.subr.mxu0 0.0
    %v2588 = vand.u32 %v1668, 4294901760
    %2589 = vmatpush1.msra.mxu0 %v2588
    %2590 = vmatprep.subr.mxu0 0.0
    %v2591 = vand.u32 %v1671, 4294901760
    %2592 = vmatpush1.msra.mxu0 %v2591
    %2593 = vmatprep.subr.mxu0 0.0
    %v2594 = vand.u32 %v1674, 4294901760
    %2595 = vmatpush1.msra.mxu0 %v2594
    %2596 = vmatprep.subr.mxu0 0.0
    %2597 = vmatpush1.msra.mxu0 0.0
    %2598 = vmatprep.subr.mxu0 0.0
    %2599 = vmatpush1.msra.mxu0 0.0
    %2600 = vmatprep.subr.mxu0 0.0
    %2601 = vmatpush1.msra.mxu0 0.0
    %2602 = vmatprep.subr.mxu0 0.0
    %2603 = vmatpush1.msra.mxu0 0.0
    %2604 = vmatprep.subr.mxu0 0.0
    %2605 = vmatpush1.msra.mxu0 0.0
    %2606 = vmatprep.subr.mxu0 0.0
    %2607 = vmatpush1.msra.mxu0 0.0
    %2608 = vmatprep.subr.mxu0 0.0
    %2609 = vmatpush1.msra.mxu0 0.0
    %2610 = vmatprep.subr.mxu0 0.0
    %2611 = vmatpush1.msra.mxu0 0.0
    %2612 = vmatprep.subr.mxu0 0.0
    %2613 = vmatpush1.msra.mxu0 0.0
    %2614 = vmatprep.subr.mxu0 0.0
    %2615 = vmatpush1.msra.mxu0 0.0
    %2616 = vmatprep.subr.mxu0 0.0
    %2617 = vmatpush1.msra.mxu0 0.0
    %2618 = vmatprep.subr.mxu0 0.0
    %2619 = vmatpush1.msra.mxu0 0.0
    %2620 = vmatprep.subr.mxu0 0.0
    %2621 = vmatpush1.msra.mxu0 0.0
    %2622 = vmatprep.subr.mxu0 0.0
    %2623 = vmatpush1.msra.mxu0 0.0
    %2624 = vmatprep.subr.mxu0 0.0
    %2625 = vmatpush1.msra.mxu0 0.0
    %2626 = vmatprep.subr.mxu0 0.0
    %2627 = vmatpush1.msra.mxu0 0.0
    %2628 = vmatprep.mubr.f32.mxu0 0.0
    %v2629 = vand.u32 %v1625, 4294901760
    %v2630 = vsub.f32 %v1625, %v2629
    %v2631 = vand.u32 %v2630, 4294901760
    %v2632 = vsub.f32 %v2630, %v2631
    %v2633 = vand.u32 %v2632, 4294901760
    %2634 = vmatmul.mubr.f32.gmra.mrb[0].mxu0 %v2633
    %v2635 = vpop.f32.mrb[0].mxu0
    %v2636 = vadd.f32 %v1689, %v2635
    %v2637 = vpop.f32.mrb[0].mxu0
    %2638 = vdwg.mxu0
    %2639 = vmatprep.subr.mxu0 0.0
    %v2640 = vand.u32 %v1629, 4294901760
    %v2641 = vsub.f32 %v1629, %v2640
    %v2642 = vand.u32 %v2641, 4294901760
    %v2643 = vsub.f32 %v2641, %v2642
    %v2644 = vand.u32 %v2643, 4294901760
    %2645 = vmatpush1.msra.mxu0 %v2644
    %2646 = vmatprep.subr.mxu0 0.0
    %v2647 = vand.u32 %v1632, 4294901760
    %v2648 = vsub.f32 %v1632, %v2647
    %v2649 = vand.u32 %v2648, 4294901760
    %v2650 = vsub.f32 %v2648, %v2649
    %v2651 = vand.u32 %v2650, 4294901760
    %2652 = vmatpush1.msra.mxu0 %v2651
    %2653 = vmatprep.subr.mxu0 0.0
    %v2654 = vand.u32 %v1635, 4294901760
    %v2655 = vsub.f32 %v1635, %v2654
    %v2656 = vand.u32 %v2655, 4294901760
    %v2657 = vsub.f32 %v2655, %v2656
    %v2658 = vand.u32 %v2657, 4294901760
    %2659 = vmatpush1.msra.mxu0 %v2658
    %2660 = vmatprep.subr.mxu0 0.0
    %v2661 = vand.u32 %v1638, 4294901760
    %v2662 = vsub.f32 %v1638, %v2661
    %v2663 = vand.u32 %v2662, 4294901760
    %v2664 = vsub.f32 %v2662, %v2663
    %v2665 = vand.u32 %v2664, 4294901760
    %2666 = vmatpush1.msra.mxu0 %v2665
    %2667 = vmatprep.subr.mxu0 0.0
    %v2668 = vand.u32 %v1641, 4294901760
    %v2669 = vsub.f32 %v1641, %v2668
    %v2670 = vand.u32 %v2669, 4294901760
    %v2671 = vsub.f32 %v2669, %v2670
    %v2672 = vand.u32 %v2671, 4294901760
    %2673 = vmatpush1.msra.mxu0 %v2672
    %2674 = vmatprep.subr.mxu0 0.0
    %v2675 = vand.u32 %v1644, 4294901760
    %v2676 = vsub.f32 %v1644, %v2675
    %v2677 = vand.u32 %v2676, 4294901760
    %v2678 = vsub.f32 %v2676, %v2677
    %v2679 = vand.u32 %v2678, 4294901760
    %2680 = vmatpush1.msra.mxu0 %v2679
    %2681 = vmatprep.subr.mxu0 0.0
    %v2682 = vand.u32 %v1647, 4294901760
    %v2683 = vsub.f32 %v1647, %v2682
    %v2684 = vand.u32 %v2683, 4294901760
    %v2685 = vsub.f32 %v2683, %v2684
    %v2686 = vand.u32 %v2685, 4294901760
    %2687 = vmatpush1.msra.mxu0 %v2686
    %2688 = vmatprep.subr.mxu0 0.0
    %v2689 = vand.u32 %v1650, 4294901760
    %v2690 = vsub.f32 %v1650, %v2689
    %v2691 = vand.u32 %v2690, 4294901760
    %v2692 = vsub.f32 %v2690, %v2691
    %v2693 = vand.u32 %v2692, 4294901760
    %2694 = vmatpush1.msra.mxu0 %v2693
    %2695 = vmatprep.subr.mxu0 0.0
    %v2696 = vand.u32 %v1653, 4294901760
    %v2697 = vsub.f32 %v1653, %v2696
    %v2698 = vand.u32 %v2697, 4294901760
    %v2699 = vsub.f32 %v2697, %v2698
    %v2700 = vand.u32 %v2699, 4294901760
    %2701 = vmatpush1.msra.mxu0 %v2700
    %2702 = vmatprep.subr.mxu0 0.0
    %v2703 = vand.u32 %v1656, 4294901760
    %v2704 = vsub.f32 %v1656, %v2703
    %v2705 = vand.u32 %v2704, 4294901760
    %v2706 = vsub.f32 %v2704, %v2705
    %v2707 = vand.u32 %v2706, 4294901760
    %2708 = vmatpush1.msra.mxu0 %v2707
    %2709 = vmatprep.subr.mxu0 0.0
    %v2710 = vand.u32 %v1659, 4294901760
    %v2711 = vsub.f32 %v1659, %v2710
    %v2712 = vand.u32 %v2711, 4294901760
    %v2713 = vsub.f32 %v2711, %v2712
    %v2714 = vand.u32 %v2713, 4294901760
    %2715 = vmatpush1.msra.mxu0 %v2714
    %2716 = vmatprep.subr.mxu0 0.0
    %v2717 = vand.u32 %v1662, 4294901760
    %v2718 = vsub.f32 %v1662, %v2717
    %v2719 = vand.u32 %v2718, 4294901760
    %v2720 = vsub.f32 %v2718, %v2719
    %v2721 = vand.u32 %v2720, 4294901760
    %2722 = vmatpush1.msra.mxu0 %v2721
    %2723 = vmatprep.subr.mxu0 0.0
    %v2724 = vand.u32 %v1665, 4294901760
    %v2725 = vsub.f32 %v1665, %v2724
    %v2726 = vand.u32 %v2725, 4294901760
    %v2727 = vsub.f32 %v2725, %v2726
    %v2728 = vand.u32 %v2727, 4294901760
    %2729 = vmatpush1.msra.mxu0 %v2728
    %2730 = vmatprep.subr.mxu0 0.0
    %v2731 = vand.u32 %v1668, 4294901760
    %v2732 = vsub.f32 %v1668, %v2731
    %v2733 = vand.u32 %v2732, 4294901760
    %v2734 = vsub.f32 %v2732, %v2733
    %v2735 = vand.u32 %v2734, 4294901760
    %2736 = vmatpush1.msra.mxu0 %v2735
    %2737 = vmatprep.subr.mxu0 0.0
    %v2738 = vand.u32 %v1671, 4294901760
    %v2739 = vsub.f32 %v1671, %v2738
    %v2740 = vand.u32 %v2739, 4294901760
    %v2741 = vsub.f32 %v2739, %v2740
    %v2742 = vand.u32 %v2741, 4294901760
    %2743 = vmatpush1.msra.mxu0 %v2742
    %2744 = vmatprep.subr.mxu0 0.0
    %v2745 = vand.u32 %v1674, 4294901760
    %v2746 = vsub.f32 %v1674, %v2745
    %v2747 = vand.u32 %v2746, 4294901760
    %v2748 = vsub.f32 %v2746, %v2747
    %v2749 = vand.u32 %v2748, 4294901760
    %2750 = vmatpush1.msra.mxu0 %v2749
    %2751 = vmatprep.subr.mxu0 0.0
    %2752 = vmatpush1.msra.mxu0 0.0
    %2753 = vmatprep.subr.mxu0 0.0
    %2754 = vmatpush1.msra.mxu0 0.0
    %2755 = vmatprep.subr.mxu0 0.0
    %2756 = vmatpush1.msra.mxu0 0.0
    %2757 = vmatprep.subr.mxu0 0.0
    %2758 = vmatpush1.msra.mxu0 0.0
    %2759 = vmatprep.subr.mxu0 0.0
    %2760 = vmatpush1.msra.mxu0 0.0
    %2761 = vmatprep.subr.mxu0 0.0
    %2762 = vmatpush1.msra.mxu0 0.0
    %2763 = vmatprep.subr.mxu0 0.0
    %2764 = vmatpush1.msra.mxu0 0.0
    %2765 = vmatprep.subr.mxu0 0.0
    %2766 = vmatpush1.msra.mxu0 0.0
    %2767 = vmatprep.subr.mxu0 0.0
    %2768 = vmatpush1.msra.mxu0 0.0
    %2769 = vmatprep.subr.mxu0 0.0
    %2770 = vmatpush1.msra.mxu0 0.0
    %2771 = vmatprep.subr.mxu0 0.0
    %2772 = vmatpush1.msra.mxu0 0.0
    %2773 = vmatprep.subr.mxu0 0.0
    %2774 = vmatpush1.msra.mxu0 0.0
    %2775 = vmatprep.subr.mxu0 0.0
    %2776 = vmatpush1.msra.mxu0 0.0
    %2777 = vmatprep.subr.mxu0 0.0
    %2778 = vmatpush1.msra.mxu0 0.0
    %2779 = vmatprep.subr.mxu0 0.0
    %2780 = vmatpush1.msra.mxu0 0.0
    %2781 = vmatprep.subr.mxu0 0.0
    %2782 = vmatpush1.msra.mxu0 0.0
    %2783 = vmatprep.mubr.f32.mxu0 0.0
    %v2784 = vand.u32 %v1625, 4294901760
    %2785 = vmatmul.mubr.f32.gmra.mrb[0].mxu0 %v2784
    %v2786 = vpop.f32.mrb[0].mxu0
    %v2787 = vadd.f32 %v2636, %v2786
    %v2788 = vpop.f32.mrb[0].mxu0
    %2789 = vdwg.mxu0
    %2790 = vmatprep.subr.mxu0 0.0
    %v2791 = vand.u32 %v1629, 4294901760
    %v2792 = vsub.f32 %v1629, %v2791
    %2793 = vmatpush1.msra.mxu0 %v2792
    %2794 = vmatprep.subr.mxu0 0.0
    %v2795 = vand.u32 %v1632, 4294901760
    %v2796 = vsub.f32 %v1632, %v2795
    %2797 = vmatpush1.msra.mxu0 %v2796
    %2798 = vmatprep.subr.mxu0 0.0
    %v2799 = vand.u32 %v1635, 4294901760
    %v2800 = vsub.f32 %v1635, %v2799
    %2801 = vmatpush1.msra.mxu0 %v2800
    %2802 = vmatprep.subr.mxu0 0.0
    %v2803 = vand.u32 %v1638, 4294901760
    %v2804 = vsub.f32 %v1638, %v2803
    %2805 = vmatpush1.msra.mxu0 %v2804
    %2806 = vmatprep.subr.mxu0 0.0
    %v2807 = vand.u32 %v1641, 4294901760
    %v2808 = vsub.f32 %v1641, %v2807
    %2809 = vmatpush1.msra.mxu0 %v2808
    %2810 = vmatprep.subr.mxu0 0.0
    %v2811 = vand.u32 %v1644, 4294901760
    %v2812 = vsub.f32 %v1644, %v2811
    %2813 = vmatpush1.msra.mxu0 %v2812
    %2814 = vmatprep.subr.mxu0 0.0
    %v2815 = vand.u32 %v1647, 4294901760
    %v2816 = vsub.f32 %v1647, %v2815
    %2817 = vmatpush1.msra.mxu0 %v2816
    %2818 = vmatprep.subr.mxu0 0.0
    %v2819 = vand.u32 %v1650, 4294901760
    %v2820 = vsub.f32 %v1650, %v2819
    %2821 = vmatpush1.msra.mxu0 %v2820
    %2822 = vmatprep.subr.mxu0 0.0
    %v2823 = vand.u32 %v1653, 4294901760
    %v2824 = vsub.f32 %v1653, %v2823
    %2825 = vmatpush1.msra.mxu0 %v2824
    %2826 = vmatprep.subr.mxu0 0.0
    %v2827 = vand.u32 %v1656, 4294901760
    %v2828 = vsub.f32 %v1656, %v2827
    %2829 = vmatpush1.msra.mxu0 %v2828
    %2830 = vmatprep.subr.mxu0 0.0
    %v2831 = vand.u32 %v1659, 4294901760
    %v2832 = vsub.f32 %v1659, %v2831
    %2833 = vmatpush1.msra.mxu0 %v2832
    %2834 = vmatprep.subr.mxu0 0.0
    %v2835 = vand.u32 %v1662, 4294901760
    %v2836 = vsub.f32 %v1662, %v2835
    %2837 = vmatpush1.msra.mxu0 %v2836
    %2838 = vmatprep.subr.mxu0 0.0
    %v2839 = vand.u32 %v1665, 4294901760
    %v2840 = vsub.f32 %v1665, %v2839
    %2841 = vmatpush1.msra.mxu0 %v2840
    %2842 = vmatprep.subr.mxu0 0.0
    %v2843 = vand.u32 %v1668, 4294901760
    %v2844 = vsub.f32 %v1668, %v2843
    %2845 = vmatpush1.msra.mxu0 %v2844
    %2846 = vmatprep.subr.mxu0 0.0
    %v2847 = vand.u32 %v1671, 4294901760
    %v2848 = vsub.f32 %v1671, %v2847
    %2849 = vmatpush1.msra.mxu0 %v2848
    %2850 = vmatprep.subr.mxu0 0.0
    %v2851 = vand.u32 %v1674, 4294901760
    %v2852 = vsub.f32 %v1674, %v2851
    %2853 = vmatpush1.msra.mxu0 %v2852
    %2854 = vmatprep.subr.mxu0 0.0
    %2855 = vmatpush1.msra.mxu0 0.0
    %2856 = vmatprep.subr.mxu0 0.0
    %2857 = vmatpush1.msra.mxu0 0.0
    %2858 = vmatprep.subr.mxu0 0.0
    %2859 = vmatpush1.msra.mxu0 0.0
    %2860 = vmatprep.subr.mxu0 0.0
    %2861 = vmatpush1.msra.mxu0 0.0
    %2862 = vmatprep.subr.mxu0 0.0
    %2863 = vmatpush1.msra.mxu0 0.0
    %2864 = vmatprep.subr.mxu0 0.0
    %2865 = vmatpush1.msra.mxu0 0.0
    %2866 = vmatprep.subr.mxu0 0.0
    %2867 = vmatpush1.msra.mxu0 0.0
    %2868 = vmatprep.subr.mxu0 0.0
    %2869 = vmatpush1.msra.mxu0 0.0
    %2870 = vmatprep.subr.mxu0 0.0
    %2871 = vmatpush1.msra.mxu0 0.0
    %2872 = vmatprep.subr.mxu0 0.0
    %2873 = vmatpush1.msra.mxu0 0.0
    %2874 = vmatprep.subr.mxu0 0.0
    %2875 = vmatpush1.msra.mxu0 0.0
    %2876 = vmatprep.subr.mxu0 0.0
    %2877 = vmatpush1.msra.mxu0 0.0
    %2878 = vmatprep.subr.mxu0 0.0
    %2879 = vmatpush1.msra.mxu0 0.0
    %2880 = vmatprep.subr.mxu0 0.0
    %2881 = vmatpush1.msra.mxu0 0.0
    %2882 = vmatprep.subr.mxu0 0.0
    %2883 = vmatpush1.msra.mxu0 0.0
    %2884 = vmatprep.subr.mxu0 0.0
    %2885 = vmatpush1.msra.mxu0 0.0
    %2886 = vmatprep.mubr.f32.mxu0 0.0
    %v2887 = vand.u32 %v1625, 4294901760
    %v2888 = vsub.f32 %v1625, %v2887
    %2889 = vmatmul.mubr.f32.gmra.mrb[0].mxu0 %v2888
    %v2890 = vpop.f32.mrb[0].mxu0
    %v2891 = vadd.f32 %v2787, %v2890
    %v2892 = vpop.f32.mrb[0].mxu0
    %2893 = vdwg.mxu0
    %2894 = vmatprep.subr.mxu0 0.0
    %v2895 = vand.u32 %v1629, 4294901760
    %2896 = vmatpush1.msra.mxu0 %v2895
    %2897 = vmatprep.subr.mxu0 0.0
    %v2898 = vand.u32 %v1632, 4294901760
    %2899 = vmatpush1.msra.mxu0 %v2898
    %2900 = vmatprep.subr.mxu0 0.0
    %v2901 = vand.u32 %v1635, 4294901760
    %2902 = vmatpush1.msra.mxu0 %v2901
    %2903 = vmatprep.subr.mxu0 0.0
    %v2904 = vand.u32 %v1638, 4294901760
    %2905 = vmatpush1.msra.mxu0 %v2904
    %2906 = vmatprep.subr.mxu0 0.0
    %v2907 = vand.u32 %v1641, 4294901760
    %2908 = vmatpush1.msra.mxu0 %v2907
    %2909 = vmatprep.subr.mxu0 0.0
    %v2910 = vand.u32 %v1644, 4294901760
    %2911 = vmatpush1.msra.mxu0 %v2910
    %2912 = vmatprep.subr.mxu0 0.0
    %v2913 = vand.u32 %v1647, 4294901760
    %2914 = vmatpush1.msra.mxu0 %v2913
    %2915 = vmatprep.subr.mxu0 0.0
    %v2916 = vand.u32 %v1650, 4294901760
    %2917 = vmatpush1.msra.mxu0 %v2916
    %2918 = vmatprep.subr.mxu0 0.0
    %v2919 = vand.u32 %v1653, 4294901760
    %2920 = vmatpush1.msra.mxu0 %v2919
    %2921 = vmatprep.subr.mxu0 0.0
    %v2922 = vand.u32 %v1656, 4294901760
    %2923 = vmatpush1.msra.mxu0 %v2922
    %2924 = vmatprep.subr.mxu0 0.0
    %v2925 = vand.u32 %v1659, 4294901760
    %2926 = vmatpush1.msra.mxu0 %v2925
    %2927 = vmatprep.subr.mxu0 0.0
    %v2928 = vand.u32 %v1662, 4294901760
    %2929 = vmatpush1.msra.mxu0 %v2928
    %2930 = vmatprep.subr.mxu0 0.0
    %v2931 = vand.u32 %v1665, 4294901760
    %2932 = vmatpush1.msra.mxu0 %v2931
    %2933 = vmatprep.subr.mxu0 0.0
    %v2934 = vand.u32 %v1668, 4294901760
    %2935 = vmatpush1.msra.mxu0 %v2934
    %2936 = vmatprep.subr.mxu0 0.0
    %v2937 = vand.u32 %v1671, 4294901760
    %2938 = vmatpush1.msra.mxu0 %v2937
    %2939 = vmatprep.subr.mxu0 0.0
    %v2940 = vand.u32 %v1674, 4294901760
    %2941 = vmatpush1.msra.mxu0 %v2940
    %2942 = vmatprep.subr.mxu0 0.0
    %2943 = vmatpush1.msra.mxu0 0.0
    %2944 = vmatprep.subr.mxu0 0.0
    %2945 = vmatpush1.msra.mxu0 0.0
    %2946 = vmatprep.subr.mxu0 0.0
    %2947 = vmatpush1.msra.mxu0 0.0
    %2948 = vmatprep.subr.mxu0 0.0
    %2949 = vmatpush1.msra.mxu0 0.0
    %2950 = vmatprep.subr.mxu0 0.0
    %2951 = vmatpush1.msra.mxu0 0.0
    %2952 = vmatprep.subr.mxu0 0.0
    %2953 = vmatpush1.msra.mxu0 0.0
    %2954 = vmatprep.subr.mxu0 0.0
    %2955 = vmatpush1.msra.mxu0 0.0
    %2956 = vmatprep.subr.mxu0 0.0
    %2957 = vmatpush1.msra.mxu0 0.0
    %2958 = vmatprep.subr.mxu0 0.0
    %2959 = vmatpush1.msra.mxu0 0.0
    %2960 = vmatprep.subr.mxu0 0.0
    %2961 = vmatpush1.msra.mxu0 0.0
    %2962 = vmatprep.subr.mxu0 0.0
    %2963 = vmatpush1.msra.mxu0 0.0
    %2964 = vmatprep.subr.mxu0 0.0
    %2965 = vmatpush1.msra.mxu0 0.0
    %2966 = vmatprep.subr.mxu0 0.0
    %2967 = vmatpush1.msra.mxu0 0.0
    %2968 = vmatprep.subr.mxu0 0.0
    %2969 = vmatpush1.msra.mxu0 0.0
    %2970 = vmatprep.subr.mxu0 0.0
    %2971 = vmatpush1.msra.mxu0 0.0
    %2972 = vmatprep.subr.mxu0 0.0
    %2973 = vmatpush1.msra.mxu0 0.0
    %2974 = vmatprep.mubr.f32.mxu0 0.0
    %v2975 = vand.u32 %v1625, 4294901760
    %v2976 = vsub.f32 %v1625, %v2975
    %v2977 = vand.u32 %v2976, 4294901760
    %2978 = vmatmul.mubr.f32.gmra.mrb[0].mxu0 %v2977
    %v2979 = vpop.f32.mrb[0].mxu0
    %v2980 = vadd.f32 %v2891, %v2979
    %v2981 = vpop.f32.mrb[0].mxu0
    %2982 = vdwg.mxu0
    %2983 = vmatprep.subr.mxu0 0.0
    %v2984 = vand.u32 %v1629, 4294901760
    %v2985 = vsub.f32 %v1629, %v2984
    %v2986 = vand.u32 %v2985, 4294901760
    %2987 = vmatpush1.msra.mxu0 %v2986
    %2988 = vmatprep.subr.mxu0 0.0
    %v2989 = vand.u32 %v1632, 4294901760
    %v2990 = vsub.f32 %v1632, %v2989
    %v2991 = vand.u32 %v2990, 4294901760
    %2992 = vmatpush1.msra.mxu0 %v2991
    %2993 = vmatprep.subr.mxu0 0.0
    %v2994 = vand.u32 %v1635, 4294901760
    %v2995 = vsub.f32 %v1635, %v2994
    %v2996 = vand.u32 %v2995, 4294901760
    %2997 = vmatpush1.msra.mxu0 %v2996
    %2998 = vmatprep.subr.mxu0 0.0
    %v2999 = vand.u32 %v1638, 4294901760
    %v3000 = vsub.f32 %v1638, %v2999
    %v3001 = vand.u32 %v3000, 4294901760
    %3002 = vmatpush1.msra.mxu0 %v3001
    %3003 = vmatprep.subr.mxu0 0.0
    %v3004 = vand.u32 %v1641, 4294901760
    %v3005 = vsub.f32 %v1641, %v3004
    %v3006 = vand.u32 %v3005, 4294901760
    %3007 = vmatpush1.msra.mxu0 %v3006
    %3008 = vmatprep.subr.mxu0 0.0
    %v3009 = vand.u32 %v1644, 4294901760
    %v3010 = vsub.f32 %v1644, %v3009
    %v3011 = vand.u32 %v3010, 4294901760
    %3012 = vmatpush1.msra.mxu0 %v3011
    %3013 = vmatprep.subr.mxu0 0.0
    %v3014 = vand.u32 %v1647, 4294901760
    %v3015 = vsub.f32 %v1647, %v3014
    %v3016 = vand.u32 %v3015, 4294901760
    %3017 = vmatpush1.msra.mxu0 %v3016
    %3018 = vmatprep.subr.mxu0 0.0
    %v3019 = vand.u32 %v1650, 4294901760
    %v3020 = vsub.f32 %v1650, %v3019
    %v3021 = vand.u32 %v3020, 4294901760
    %3022 = vmatpush1.msra.mxu0 %v3021
    %3023 = vmatprep.subr.mxu0 0.0
    %v3024 = vand.u32 %v1653, 4294901760
    %v3025 = vsub.f32 %v1653, %v3024
    %v3026 = vand.u32 %v3025, 4294901760
    %3027 = vmatpush1.msra.mxu0 %v3026
    %3028 = vmatprep.subr.mxu0 0.0
    %v3029 = vand.u32 %v1656, 4294901760
    %v3030 = vsub.f32 %v1656, %v3029
    %v3031 = vand.u32 %v3030, 4294901760
    %3032 = vmatpush1.msra.mxu0 %v3031
    %3033 = vmatprep.subr.mxu0 0.0
    %v3034 = vand.u32 %v1659, 4294901760
    %v3035 = vsub.f32 %v1659, %v3034
    %v3036 = vand.u32 %v3035, 4294901760
    %3037 = vmatpush1.msra.mxu0 %v3036
    %3038 = vmatprep.subr.mxu0 0.0
    %v3039 = vand.u32 %v1662, 4294901760
    %v3040 = vsub.f32 %v1662, %v3039
    %v3041 = vand.u32 %v3040, 4294901760
    %3042 = vmatpush1.msra.mxu0 %v3041
    %3043 = vmatprep.subr.mxu0 0.0
    %v3044 = vand.u32 %v1665, 4294901760
    %v3045 = vsub.f32 %v1665, %v3044
    %v3046 = vand.u32 %v3045, 4294901760
    %3047 = vmatpush1.msra.mxu0 %v3046
    %3048 = vmatprep.subr.mxu0 0.0
    %v3049 = vand.u32 %v1668, 4294901760
    %v3050 = vsub.f32 %v1668, %v3049
    %v3051 = vand.u32 %v3050, 4294901760
    %3052 = vmatpush1.msra.mxu0 %v3051
    %3053 = vmatprep.subr.mxu0 0.0
    %v3054 = vand.u32 %v1671, 4294901760
    %v3055 = vsub.f32 %v1671, %v3054
    %v3056 = vand.u32 %v3055, 4294901760
    %3057 = vmatpush1.msra.mxu0 %v3056
    %3058 = vmatprep.subr.mxu0 0.0
    %v3059 = vand.u32 %v1674, 4294901760
    %v3060 = vsub.f32 %v1674, %v3059
    %v3061 = vand.u32 %v3060, 4294901760
    %3062 = vmatpush1.msra.mxu0 %v3061
    %3063 = vmatprep.subr.mxu0 0.0
    %3064 = vmatpush1.msra.mxu0 0.0
    %3065 = vmatprep.subr.mxu0 0.0
    %3066 = vmatpush1.msra.mxu0 0.0
    %3067 = vmatprep.subr.mxu0 0.0
    %3068 = vmatpush1.msra.mxu0 0.0
    %3069 = vmatprep.subr.mxu0 0.0
    %3070 = vmatpush1.msra.mxu0 0.0
    %3071 = vmatprep.subr.mxu0 0.0
    %3072 = vmatpush1.msra.mxu0 0.0
    %3073 = vmatprep.subr.mxu0 0.0
    %3074 = vmatpush1.msra.mxu0 0.0
    %3075 = vmatprep.subr.mxu0 0.0
    %3076 = vmatpush1.msra.mxu0 0.0
    %3077 = vmatprep.subr.mxu0 0.0
    %3078 = vmatpush1.msra.mxu0 0.0
    %3079 = vmatprep.subr.mxu0 0.0
    %3080 = vmatpush1.msra.mxu0 0.0
    %3081 = vmatprep.subr.mxu0 0.0
    %3082 = vmatpush1.msra.mxu0 0.0
    %3083 = vmatprep.subr.mxu0 0.0
    %3084 = vmatpush1.msra.mxu0 0.0
    %3085 = vmatprep.subr.mxu0 0.0
    %3086 = vmatpush1.msra.mxu0 0.0
    %3087 = vmatprep.subr.mxu0 0.0
    %3088 = vmatpush1.msra.mxu0 0.0
    %3089 = vmatprep.subr.mxu0 0.0
    %3090 = vmatpush1.msra.mxu0 0.0
    %3091 = vmatprep.subr.mxu0 0.0
    %3092 = vmatpush1.msra.mxu0 0.0
    %3093 = vmatprep.subr.mxu0 0.0
    %3094 = vmatpush1.msra.mxu0 0.0
    %3095 = vmatprep.mubr.f32.mxu0 0.0
    %v3096 = vand.u32 %v1625, 4294901760
    %3097 = vmatmul.mubr.f32.gmra.mrb[0].mxu0 %v3096
    %v3098 = vpop.f32.mrb[0].mxu0
    %v3099 = vadd.f32 %v2980, %v3098
    %v3100 = vpop.f32.mrb[0].mxu0
    %3101 = vdwg.mxu0
    %3102 = vmatprep.subr.mxu0 0.0
    %v3103 = vand.u32 %v1629, 4294901760
    %3104 = vmatpush1.msra.mxu0 %v3103
    %3105 = vmatprep.subr.mxu0 0.0
    %v3106 = vand.u32 %v1632, 4294901760
    %3107 = vmatpush1.msra.mxu0 %v3106
    %3108 = vmatprep.subr.mxu0 0.0
    %v3109 = vand.u32 %v1635, 4294901760
    %3110 = vmatpush1.msra.mxu0 %v3109
    %3111 = vmatprep.subr.mxu0 0.0
    %v3112 = vand.u32 %v1638, 4294901760
    %3113 = vmatpush1.msra.mxu0 %v3112
    %3114 = vmatprep.subr.mxu0 0.0
    %v3115 = vand.u32 %v1641, 4294901760
    %3116 = vmatpush1.msra.mxu0 %v3115
    %3117 = vmatprep.subr.mxu0 0.0
    %v3118 = vand.u32 %v1644, 4294901760
    %3119 = vmatpush1.msra.mxu0 %v3118
    %3120 = vmatprep.subr.mxu0 0.0
    %v3121 = vand.u32 %v1647, 4294901760
    %3122 = vmatpush1.msra.mxu0 %v3121
    %3123 = vmatprep.subr.mxu0 0.0
    %v3124 = vand.u32 %v1650, 4294901760
    %3125 = vmatpush1.msra.mxu0 %v3124
    %3126 = vmatprep.subr.mxu0 0.0
    %v3127 = vand.u32 %v1653, 4294901760
    %3128 = vmatpush1.msra.mxu0 %v3127
    %3129 = vmatprep.subr.mxu0 0.0
    %v3130 = vand.u32 %v1656, 4294901760
    %3131 = vmatpush1.msra.mxu0 %v3130
    %3132 = vmatprep.subr.mxu0 0.0
    %v3133 = vand.u32 %v1659, 4294901760
    %3134 = vmatpush1.msra.mxu0 %v3133
    %3135 = vmatprep.subr.mxu0 0.0
    %v3136 = vand.u32 %v1662, 4294901760
    %3137 = vmatpush1.msra.mxu0 %v3136
    %3138 = vmatprep.subr.mxu0 0.0
    %v3139 = vand.u32 %v1665, 4294901760
    %3140 = vmatpush1.msra.mxu0 %v3139
    %3141 = vmatprep.subr.mxu0 0.0
    %v3142 = vand.u32 %v1668, 4294901760
    %3143 = vmatpush1.msra.mxu0 %v3142
    %3144 = vmatprep.subr.mxu0 0.0
    %v3145 = vand.u32 %v1671, 4294901760
    %3146 = vmatpush1.msra.mxu0 %v3145
    %3147 = vmatprep.subr.mxu0 0.0
    %v3148 = vand.u32 %v1674, 4294901760
    %3149 = vmatpush1.msra.mxu0 %v3148
    %3150 = vmatprep.subr.mxu0 0.0
    %3151 = vmatpush1.msra.mxu0 0.0
    %3152 = vmatprep.subr.mxu0 0.0
    %3153 = vmatpush1.msra.mxu0 0.0
    %3154 = vmatprep.subr.mxu0 0.0
    %3155 = vmatpush1.msra.mxu0 0.0
    %3156 = vmatprep.subr.mxu0 0.0
    %3157 = vmatpush1.msra.mxu0 0.0
    %3158 = vmatprep.subr.mxu0 0.0
    %3159 = vmatpush1.msra.mxu0 0.0
    %3160 = vmatprep.subr.mxu0 0.0
    %3161 = vmatpush1.msra.mxu0 0.0
    %3162 = vmatprep.subr.mxu0 0.0
    %3163 = vmatpush1.msra.mxu0 0.0
    %3164 = vmatprep.subr.mxu0 0.0
    %3165 = vmatpush1.msra.mxu0 0.0
    %3166 = vmatprep.subr.mxu0 0.0
    %3167 = vmatpush1.msra.mxu0 0.0
    %3168 = vmatprep.subr.mxu0 0.0
    %3169 = vmatpush1.msra.mxu0 0.0
    %3170 = vmatprep.subr.mxu0 0.0
    %3171 = vmatpush1.msra.mxu0 0.0
    %3172 = vmatprep.subr.mxu0 0.0
    %3173 = vmatpush1.msra.mxu0 0.0
    %3174 = vmatprep.subr.mxu0 0.0
    %3175 = vmatpush1.msra.mxu0 0.0
    %3176 = vmatprep.subr.mxu0 0.0
    %3177 = vmatpush1.msra.mxu0 0.0
    %3178 = vmatprep.subr.mxu0 0.0
    %3179 = vmatpush1.msra.mxu0 0.0
    %3180 = vmatprep.subr.mxu0 0.0
    %3181 = vmatpush1.msra.mxu0 0.0
    %3182 = vmatprep.mubr.f32.mxu0 0.0
    %v3183 = vand.u32 %v1625, 4294901760
    %3184 = vmatmul.mubr.f32.gmra.mrb[0].mxu0 %v3183
    %v3185 = vpop.f32.mrb[0].mxu0
    %v3186 = vadd.f32 %v3099, %v3185
    %v3187 = vpop.f32.mrb[0].mxu0
    %3188 = vdwg.mxu0
    %v3189 = vxor.u32 %v2544, 2147483648
    %v3190 = vmul.f32 %v3189, 1.442695
    %v3191 = vpow.pop %v3190
    %v3192 = vadd.f32 %v3191, 1.0
    %v3193 = vrcp.pop %v3192
    %v3194 = vmul.f32 1.0, %v3193
    %v3195 = vmax.f32 %v2546, 0.0
    %v3196 = vsub.f32 %v3195, %v3186
    %v3197 = vmul.f32 %v3194, %v3196
    %v3198 = vadd.f32 %v3186, %v3197
    %s3199 = scalar_lea.vmem [#allocation5], 768
    %v3200 = vld [vmem:[%s3199] sm:$0xff]
    %v3201 = vld [vmem:[%s3199 + $0x8] sm:$0xff]
    %v3202 = vld [vmem:[%s3199 + $0x10] sm:$0xff]
    %v3203 = vld [vmem:[%s3199 + $0x18] sm:$0xff]
    %v3204 = vld [vmem:[%s3199 + $0x20] sm:$0xff]
    %v3205 = vld [vmem:[%s3199 + $0x28] sm:$0xff]
    %v3206 = vld [vmem:[%s3199 + $0x30] sm:$0xff]
    %v3207 = vld [vmem:[%s3199 + $0x38] sm:$0xff]
    %v3208 = vld [vmem:[%s3199 + $0x40] sm:$0xff]
    %v3209 = vld [vmem:[%s3199 + $0x48] sm:$0xff]
    %v3210 = vld [vmem:[%s3199 + $0x50] sm:$0xff]
    %v3211 = vld [vmem:[%s3199 + $0x58] sm:$0xff]
    %v3212 = vld [vmem:[%s3199 + $0x60] sm:$0xff]
    %v3213 = vld [vmem:[%s3199 + $0x68] sm:$0xff]
    %v3214 = vld [vmem:[%s3199 + $0x70] sm:$0xff]
    %v3215 = vld [vmem:[%s3199 + $0x78] sm:$0xff]
    %v3216 = vld [vmem:[%s3199 + $0x80] sm:$0xff]
    %v3217 = vld [vmem:[%s3199 + $0x88] sm:$0xff]
    %v3218 = vld [vmem:[%s3199 + $0x90] sm:$0xff]
    %v3219 = vld [vmem:[%s3199 + $0x98] sm:$0xff]
    %v3220 = vld [vmem:[%s3199 + $0xa0] sm:$0xff]
    %v3221 = vld [vmem:[%s3199 + $0xa8] sm:$0xff]
    %v3222 = vld [vmem:[%s3199 + $0xb0] sm:$0xff]
    %v3223 = vld [vmem:[%s3199 + $0xb8] sm:$0xff]
    %v3224 = vld [vmem:[%s3199 + $0xc0] sm:$0xff]
    %v3225 = vld [vmem:[%s3199 + $0xc8] sm:$0xff]
    %v3226 = vld [vmem:[%s3199 + $0xd0] sm:$0xff]
    %v3227 = vld [vmem:[%s3199 + $0xd8] sm:$0xff]
    %v3228 = vld [vmem:[%s3199 + $0xe0] sm:$0xff]
    %v3229 = vld [vmem:[%s3199 + $0xe8] sm:$0xff]
    %v3230 = vld [vmem:[%s3199 + $0xf0] sm:$0xff]
    %v3231 = vld [vmem:[%s3199 + $0xf8] sm:$0xff]
    %v3232 = vld [vmem:[%s3199 + $0x100] sm:$0xff]
    %v3233 = vld [vmem:[%s3199 + $0x108] sm:$0xff]
    %v3234 = vld [vmem:[%s3199 + $0x110] sm:$0xff]
    %v3235 = vld [vmem:[%s3199 + $0x118] sm:$0xff]
    %v3236 = vld [vmem:[%s3199 + $0x120] sm:$0xff]
    %v3237 = vld [vmem:[%s3199 + $0x128] sm:$0xff]
    %v3238 = vld [vmem:[%s3199 + $0x130] sm:$0xff]
    %v3239 = vld [vmem:[%s3199 + $0x138] sm:$0xff]
    %v3240 = vld [vmem:[%s3199 + $0x140] sm:$0xff]
    %v3241 = vld [vmem:[%s3199 + $0x148] sm:$0xff]
    %v3242 = vld [vmem:[%s3199 + $0x150] sm:$0xff]
    %v3243 = vld [vmem:[%s3199 + $0x158] sm:$0xff]
    %v3244 = vld [vmem:[%s3199 + $0x160] sm:$0xff]
    %v3245 = vld [vmem:[%s3199 + $0x168] sm:$0xff]
    %v3246 = vld [vmem:[%s3199 + $0x170] sm:$0xff]
    %v3247 = vld [vmem:[%s3199 + $0x178] sm:$0xff]
    %s3248 = scalar_lea.vmem [#allocation7], 6
    %v3249 = vld [vmem:[%s3248] sm:$0x7]
    %v3251 = vlaneseq
    %v3252 = vshrl.u32 %v3251, 7
    %v3253 = vsub.s32 0, %v3252
    %v3254 = vrot.slane %v3249, %v3253
    %v3255 = vlaneseq
    %v3256 = vshrl.u32 %v3255, 7
    %v3257 = vsub.s32 1, %v3256
    %v3258 = vrot.slane %v3249, %v3257
    %v3259 = vlaneseq
    %v3260 = vshrl.u32 %v3259, 7
    %v3261 = vsub.s32 2, %v3260
    %v3262 = vrot.slane %v3249, %v3261
    %v3266 = vand.u32 %v3201, 4294901760
    %3267 = vmatprep.subr.mxu0 %v3266
    %v3268 = vand.u32 %v3200, 4294901760
    %3269 = vmatpush1.msra.mxu0 %v3268
    %v3270 = vand.u32 %v3204, 4294901760
    %3271 = vmatprep.subr.mxu0 %v3270
    %v3272 = vand.u32 %v3203, 4294901760
    %3273 = vmatpush1.msra.mxu0 %v3272
    %v3274 = vand.u32 %v3207, 4294901760
    %3275 = vmatprep.subr.mxu0 %v3274
    %v3276 = vand.u32 %v3206, 4294901760
    %3277 = vmatpush1.msra.mxu0 %v3276
    %v3278 = vand.u32 %v3210, 4294901760
    %3279 = vmatprep.subr.mxu0 %v3278
    %v3280 = vand.u32 %v3209, 4294901760
    %3281 = vmatpush1.msra.mxu0 %v3280
    %v3282 = vand.u32 %v3213, 4294901760
    %3283 = vmatprep.subr.mxu0 %v3282
    %v3284 = vand.u32 %v3212, 4294901760
    %3285 = vmatpush1.msra.mxu0 %v3284
    %v3286 = vand.u32 %v3216, 4294901760
    %3287 = vmatprep.subr.mxu0 %v3286
    %v3288 = vand.u32 %v3215, 4294901760
    %3289 = vmatpush1.msra.mxu0 %v3288
    %v3290 = vand.u32 %v3219, 4294901760
    %3291 = vmatprep.subr.mxu0 %v3290
    %v3292 = vand.u32 %v3218, 4294901760
    %3293 = vmatpush1.msra.mxu0 %v3292
    %v3294 = vand.u32 %v3222, 4294901760
    %3295 = vmatprep.subr.mxu0 %v3294
    %v3296 = vand.u32 %v3221, 4294901760
    %3297 = vmatpush1.msra.mxu0 %v3296
    %v3298 = vand.u32 %v3225, 4294901760
    %3299 = vmatprep.subr.mxu0 %v3298
    %v3300 = vand.u32 %v3224, 4294901760
    %3301 = vmatpush1.msra.mxu0 %v3300
    %v3302 = vand.u32 %v3228, 4294901760
    %3303 = vmatprep.subr.mxu0 %v3302
    %v3304 = vand.u32 %v3227, 4294901760
    %3305 = vmatpush1.msra.mxu0 %v3304
    %v3306 = vand.u32 %v3231, 4294901760
    %3307 = vmatprep.subr.mxu0 %v3306
    %v3308 = vand.u32 %v3230, 4294901760
    %3309 = vmatpush1.msra.mxu0 %v3308
    %v3310 = vand.u32 %v3234, 4294901760
    %3311 = vmatprep.subr.mxu0 %v3310
    %v3312 = vand.u32 %v3233, 4294901760
    %3313 = vmatpush1.msra.mxu0 %v3312
    %v3314 = vand.u32 %v3237, 4294901760
    %3315 = vmatprep.subr.mxu0 %v3314
    %v3316 = vand.u32 %v3236, 4294901760
    %3317 = vmatpush1.msra.mxu0 %v3316
    %v3318 = vand.u32 %v3240, 4294901760
    %3319 = vmatprep.subr.mxu0 %v3318
    %v3320 = vand.u32 %v3239, 4294901760
    %3321 = vmatpush1.msra.mxu0 %v3320
    %v3322 = vand.u32 %v3243, 4294901760
    %3323 = vmatprep.subr.mxu0 %v3322
    %v3324 = vand.u32 %v3242, 4294901760
    %3325 = vmatpush1.msra.mxu0 %v3324
    %v3326 = vand.u32 %v3246, 4294901760
    %3327 = vmatprep.subr.mxu0 %v3326
    %v3328 = vand.u32 %v3245, 4294901760
    %3329 = vmatpush1.msra.mxu0 %v3328
    %3330 = vmatprep.subr.mxu0 0.0
    %3331 = vmatpush1.msra.mxu0 0.0
    %3332 = vmatprep.subr.mxu0 0.0
    %3333 = vmatpush1.msra.mxu0 0.0
    %3334 = vmatprep.subr.mxu0 0.0
    %3335 = vmatpush1.msra.mxu0 0.0
    %3336 = vmatprep.subr.mxu0 0.0
    %3337 = vmatpush1.msra.mxu0 0.0
    %3338 = vmatprep.subr.mxu0 0.0
    %3339 = vmatpush1.msra.mxu0 0.0
    %3340 = vmatprep.subr.mxu0 0.0
    %3341 = vmatpush1.msra.mxu0 0.0
    %3342 = vmatprep.subr.mxu0 0.0
    %3343 = vmatpush1.msra.mxu0 0.0
    %3344 = vmatprep.subr.mxu0 0.0
    %3345 = vmatpush1.msra.mxu0 0.0
    %3346 = vmatprep.subr.mxu0 0.0
    %3347 = vmatpush1.msra.mxu0 0.0
    %3348 = vmatprep.subr.mxu0 0.0
    %3349 = vmatpush1.msra.mxu0 0.0
    %3350 = vmatprep.subr.mxu0 0.0
    %3351 = vmatpush1.msra.mxu0 0.0
    %3352 = vmatprep.subr.mxu0 0.0
    %3353 = vmatpush1.msra.mxu0 0.0
    %3354 = vmatprep.subr.mxu0 0.0
    %3355 = vmatpush1.msra.mxu0 0.0
    %3356 = vmatprep.subr.mxu0 0.0
    %3357 = vmatpush1.msra.mxu0 0.0
    %3358 = vmatprep.subr.mxu0 0.0
    %3359 = vmatpush1.msra.mxu0 0.0
    %3360 = vmatprep.subr.mxu0 0.0
    %3361 = vmatpush1.msra.mxu0 0.0
    %3362 = vmatprep.mubr.f32.mxu0 0.0
    %v3363 = vand.u32 %v3198, 4294901760
    %v3364 = vsub.f32 %v3198, %v3363
    %v3365 = vand.u32 %v3364, 4294901760
    %v3366 = vsub.f32 %v3364, %v3365
    %v3367 = vand.u32 %v3366, 4294901760
    %3368 = vmatmul.mubr.f32.gmra.mrb[0].mxu0 %v3367
    %v3369 = vpop.f32.mrb[0].mxu0
    %v3370 = vadd.f32 %v3254, %v3369
    %v3371 = vpop.f32.mrb[0].mxu0
    %v3372 = vadd.f32 %v3258, %v3371
    %3373 = vdwg.mxu0
    %v3374 = vand.u32 %v3201, 4294901760
    %v3375 = vsub.f32 %v3201, %v3374
    %v3376 = vand.u32 %v3375, 4294901760
    %v3377 = vsub.f32 %v3375, %v3376
    %v3378 = vand.u32 %v3377, 4294901760
    %3379 = vmatprep.subr.mxu0 %v3378
    %v3380 = vand.u32 %v3200, 4294901760
    %v3381 = vsub.f32 %v3200, %v3380
    %v3382 = vand.u32 %v3381, 4294901760
    %v3383 = vsub.f32 %v3381, %v3382
    %v3384 = vand.u32 %v3383, 4294901760
    %3385 = vmatpush1.msra.mxu0 %v3384
    %v3386 = vand.u32 %v3204, 4294901760
    %v3387 = vsub.f32 %v3204, %v3386
    %v3388 = vand.u32 %v3387, 4294901760
    %v3389 = vsub.f32 %v3387, %v3388
    %v3390 = vand.u32 %v3389, 4294901760
    %3391 = vmatprep.subr.mxu0 %v3390
    %v3392 = vand.u32 %v3203, 4294901760
    %v3393 = vsub.f32 %v3203, %v3392
    %v3394 = vand.u32 %v3393, 4294901760
    %v3395 = vsub.f32 %v3393, %v3394
    %v3396 = vand.u32 %v3395, 4294901760
    %3397 = vmatpush1.msra.mxu0 %v3396
    %v3398 = vand.u32 %v3207, 4294901760
    %v3399 = vsub.f32 %v3207, %v3398
    %v3400 = vand.u32 %v3399, 4294901760
    %v3401 = vsub.f32 %v3399, %v3400
    %v3402 = vand.u32 %v3401, 4294901760
    %3403 = vmatprep.subr.mxu0 %v3402
    %v3404 = vand.u32 %v3206, 4294901760
    %v3405 = vsub.f32 %v3206, %v3404
    %v3406 = vand.u32 %v3405, 4294901760
    %v3407 = vsub.f32 %v3405, %v3406
    %v3408 = vand.u32 %v3407, 4294901760
    %3409 = vmatpush1.msra.mxu0 %v3408
    %v3410 = vand.u32 %v3210, 4294901760
    %v3411 = vsub.f32 %v3210, %v3410
    %v3412 = vand.u32 %v3411, 4294901760
    %v3413 = vsub.f32 %v3411, %v3412
    %v3414 = vand.u32 %v3413, 4294901760
    %3415 = vmatprep.subr.mxu0 %v3414
    %v3416 = vand.u32 %v3209, 4294901760
    %v3417 = vsub.f32 %v3209, %v3416
    %v3418 = vand.u32 %v3417, 4294901760
    %v3419 = vsub.f32 %v3417, %v3418
    %v3420 = vand.u32 %v3419, 4294901760
    %3421 = vmatpush1.msra.mxu0 %v3420
    %v3422 = vand.u32 %v3213, 4294901760
    %v3423 = vsub.f32 %v3213, %v3422
    %v3424 = vand.u32 %v3423, 4294901760
    %v3425 = vsub.f32 %v3423, %v3424
    %v3426 = vand.u32 %v3425, 4294901760
    %3427 = vmatprep.subr.mxu0 %v3426
    %v3428 = vand.u32 %v3212, 4294901760
    %v3429 = vsub.f32 %v3212, %v3428
    %v3430 = vand.u32 %v3429, 4294901760
    %v3431 = vsub.f32 %v3429, %v3430
    %v3432 = vand.u32 %v3431, 4294901760
    %3433 = vmatpush1.msra.mxu0 %v3432
    %v3434 = vand.u32 %v3216, 4294901760
    %v3435 = vsub.f32 %v3216, %v3434
    %v3436 = vand.u32 %v3435, 4294901760
    %v3437 = vsub.f32 %v3435, %v3436
    %v3438 = vand.u32 %v3437, 4294901760
    %3439 = vmatprep.subr.mxu0 %v3438
    %v3440 = vand.u32 %v3215, 4294901760
    %v3441 = vsub.f32 %v3215, %v3440
    %v3442 = vand.u32 %v3441, 4294901760
    %v3443 = vsub.f32 %v3441, %v3442
    %v3444 = vand.u32 %v3443, 4294901760
    %3445 = vmatpush1.msra.mxu0 %v3444
    %v3446 = vand.u32 %v3219, 4294901760
    %v3447 = vsub.f32 %v3219, %v3446
    %v3448 = vand.u32 %v3447, 4294901760
    %v3449 = vsub.f32 %v3447, %v3448
    %v3450 = vand.u32 %v3449, 4294901760
    %3451 = vmatprep.subr.mxu0 %v3450
    %v3452 = vand.u32 %v3218, 4294901760
    %v3453 = vsub.f32 %v3218, %v3452
    %v3454 = vand.u32 %v3453, 4294901760
    %v3455 = vsub.f32 %v3453, %v3454
    %v3456 = vand.u32 %v3455, 4294901760
    %3457 = vmatpush1.msra.mxu0 %v3456
    %v3458 = vand.u32 %v3222, 4294901760
    %v3459 = vsub.f32 %v3222, %v3458
    %v3460 = vand.u32 %v3459, 4294901760
    %v3461 = vsub.f32 %v3459, %v3460
    %v3462 = vand.u32 %v3461, 4294901760
    %3463 = vmatprep.subr.mxu0 %v3462
    %v3464 = vand.u32 %v3221, 4294901760
    %v3465 = vsub.f32 %v3221, %v3464
    %v3466 = vand.u32 %v3465, 4294901760
    %v3467 = vsub.f32 %v3465, %v3466
    %v3468 = vand.u32 %v3467, 4294901760
    %3469 = vmatpush1.msra.mxu0 %v3468
    %v3470 = vand.u32 %v3225, 4294901760
    %v3471 = vsub.f32 %v3225, %v3470
    %v3472 = vand.u32 %v3471, 4294901760
    %v3473 = vsub.f32 %v3471, %v3472
    %v3474 = vand.u32 %v3473, 4294901760
    %3475 = vmatprep.subr.mxu0 %v3474
    %v3476 = vand.u32 %v3224, 4294901760
    %v3477 = vsub.f32 %v3224, %v3476
    %v3478 = vand.u32 %v3477, 4294901760
    %v3479 = vsub.f32 %v3477, %v3478
    %v3480 = vand.u32 %v3479, 4294901760
    %3481 = vmatpush1.msra.mxu0 %v3480
    %v3482 = vand.u32 %v3228, 4294901760
    %v3483 = vsub.f32 %v3228, %v3482
    %v3484 = vand.u32 %v3483, 4294901760
    %v3485 = vsub.f32 %v3483, %v3484
    %v3486 = vand.u32 %v3485, 4294901760
    %3487 = vmatprep.subr.mxu0 %v3486
    %v3488 = vand.u32 %v3227, 4294901760
    %v3489 = vsub.f32 %v3227, %v3488
    %v3490 = vand.u32 %v3489, 4294901760
    %v3491 = vsub.f32 %v3489, %v3490
    %v3492 = vand.u32 %v3491, 4294901760
    %3493 = vmatpush1.msra.mxu0 %v3492
    %v3494 = vand.u32 %v3231, 4294901760
    %v3495 = vsub.f32 %v3231, %v3494
    %v3496 = vand.u32 %v3495, 4294901760
    %v3497 = vsub.f32 %v3495, %v3496
    %v3498 = vand.u32 %v3497, 4294901760
    %3499 = vmatprep.subr.mxu0 %v3498
    %v3500 = vand.u32 %v3230, 4294901760
    %v3501 = vsub.f32 %v3230, %v3500
    %v3502 = vand.u32 %v3501, 4294901760
    %v3503 = vsub.f32 %v3501, %v3502
    %v3504 = vand.u32 %v3503, 4294901760
    %3505 = vmatpush1.msra.mxu0 %v3504
    %v3506 = vand.u32 %v3234, 4294901760
    %v3507 = vsub.f32 %v3234, %v3506
    %v3508 = vand.u32 %v3507, 4294901760
    %v3509 = vsub.f32 %v3507, %v3508
    %v3510 = vand.u32 %v3509, 4294901760
    %3511 = vmatprep.subr.mxu0 %v3510
    %v3512 = vand.u32 %v3233, 4294901760
    %v3513 = vsub.f32 %v3233, %v3512
    %v3514 = vand.u32 %v3513, 4294901760
    %v3515 = vsub.f32 %v3513, %v3514
    %v3516 = vand.u32 %v3515, 4294901760
    %3517 = vmatpush1.msra.mxu0 %v3516
    %v3518 = vand.u32 %v3237, 4294901760
    %v3519 = vsub.f32 %v3237, %v3518
    %v3520 = vand.u32 %v3519, 4294901760
    %v3521 = vsub.f32 %v3519, %v3520
    %v3522 = vand.u32 %v3521, 4294901760
    %3523 = vmatprep.subr.mxu0 %v3522
    %v3524 = vand.u32 %v3236, 4294901760
    %v3525 = vsub.f32 %v3236, %v3524
    %v3526 = vand.u32 %v3525, 4294901760
    %v3527 = vsub.f32 %v3525, %v3526
    %v3528 = vand.u32 %v3527, 4294901760
    %3529 = vmatpush1.msra.mxu0 %v3528
    %v3530 = vand.u32 %v3240, 4294901760
    %v3531 = vsub.f32 %v3240, %v3530
    %v3532 = vand.u32 %v3531, 4294901760
    %v3533 = vsub.f32 %v3531, %v3532
    %v3534 = vand.u32 %v3533, 4294901760
    %3535 = vmatprep.subr.mxu0 %v3534
    %v3536 = vand.u32 %v3239, 4294901760
    %v3537 = vsub.f32 %v3239, %v3536
    %v3538 = vand.u32 %v3537, 4294901760
    %v3539 = vsub.f32 %v3537, %v3538
    %v3540 = vand.u32 %v3539, 4294901760
    %3541 = vmatpush1.msra.mxu0 %v3540
    %v3542 = vand.u32 %v3243, 4294901760
    %v3543 = vsub.f32 %v3243, %v3542
    %v3544 = vand.u32 %v3543, 4294901760
    %v3545 = vsub.f32 %v3543, %v3544
    %v3546 = vand.u32 %v3545, 4294901760
    %3547 = vmatprep.subr.mxu0 %v3546
    %v3548 = vand.u32 %v3242, 4294901760
    %v3549 = vsub.f32 %v3242, %v3548
    %v3550 = vand.u32 %v3549, 4294901760
    %v3551 = vsub.f32 %v3549, %v3550
    %v3552 = vand.u32 %v3551, 4294901760
    %3553 = vmatpush1.msra.mxu0 %v3552
    %v3554 = vand.u32 %v3246, 4294901760
    %v3555 = vsub.f32 %v3246, %v3554
    %v3556 = vand.u32 %v3555, 4294901760
    %v3557 = vsub.f32 %v3555, %v3556
    %v3558 = vand.u32 %v3557, 4294901760
    %3559 = vmatprep.subr.mxu0 %v3558
    %v3560 = vand.u32 %v3245, 4294901760
    %v3561 = vsub.f32 %v3245, %v3560
    %v3562 = vand.u32 %v3561, 4294901760
    %v3563 = vsub.f32 %v3561, %v3562
    %v3564 = vand.u32 %v3563, 4294901760
    %3565 = vmatpush1.msra.mxu0 %v3564
    %3566 = vmatprep.subr.mxu0 0.0
    %3567 = vmatpush1.msra.mxu0 0.0
    %3568 = vmatprep.subr.mxu0 0.0
    %3569 = vmatpush1.msra.mxu0 0.0
    %3570 = vmatprep.subr.mxu0 0.0
    %3571 = vmatpush1.msra.mxu0 0.0
    %3572 = vmatprep.subr.mxu0 0.0
    %3573 = vmatpush1.msra.mxu0 0.0
    %3574 = vmatprep.subr.mxu0 0.0
    %3575 = vmatpush1.msra.mxu0 0.0
    %3576 = vmatprep.subr.mxu0 0.0
    %3577 = vmatpush1.msra.mxu0 0.0
    %3578 = vmatprep.subr.mxu0 0.0
    %3579 = vmatpush1.msra.mxu0 0.0
    %3580 = vmatprep.subr.mxu0 0.0
    %3581 = vmatpush1.msra.mxu0 0.0
    %3582 = vmatprep.subr.mxu0 0.0
    %3583 = vmatpush1.msra.mxu0 0.0
    %3584 = vmatprep.subr.mxu0 0.0
    %3585 = vmatpush1.msra.mxu0 0.0
    %3586 = vmatprep.subr.mxu0 0.0
    %3587 = vmatpush1.msra.mxu0 0.0
    %3588 = vmatprep.subr.mxu0 0.0
    %3589 = vmatpush1.msra.mxu0 0.0
    %3590 = vmatprep.subr.mxu0 0.0
    %3591 = vmatpush1.msra.mxu0 0.0
    %3592 = vmatprep.subr.mxu0 0.0
    %3593 = vmatpush1.msra.mxu0 0.0
    %3594 = vmatprep.subr.mxu0 0.0
    %3595 = vmatpush1.msra.mxu0 0.0
    %3596 = vmatprep.subr.mxu0 0.0
    %3597 = vmatpush1.msra.mxu0 0.0
    %3598 = vmatprep.mubr.f32.mxu0 0.0
    %v3599 = vand.u32 %v3198, 4294901760
    %3600 = vmatmul.mubr.f32.gmra.mrb[0].mxu0 %v3599
    %v3601 = vpop.f32.mrb[0].mxu0
    %v3602 = vadd.f32 %v3370, %v3601
    %v3603 = vpop.f32.mrb[0].mxu0
    %v3604 = vadd.f32 %v3372, %v3603
    %3605 = vdwg.mxu0
    %v3606 = vand.u32 %v3201, 4294901760
    %v3607 = vsub.f32 %v3201, %v3606
    %3608 = vmatprep.subr.mxu0 %v3607
    %v3609 = vand.u32 %v3200, 4294901760
    %v3610 = vsub.f32 %v3200, %v3609
    %3611 = vmatpush1.msra.mxu0 %v3610
    %v3612 = vand.u32 %v3204, 4294901760
    %v3613 = vsub.f32 %v3204, %v3612
    %3614 = vmatprep.subr.mxu0 %v3613
    %v3615 = vand.u32 %v3203, 4294901760
    %v3616 = vsub.f32 %v3203, %v3615
    %3617 = vmatpush1.msra.mxu0 %v3616
    %v3618 = vand.u32 %v3207, 4294901760
    %v3619 = vsub.f32 %v3207, %v3618
    %3620 = vmatprep.subr.mxu0 %v3619
    %v3621 = vand.u32 %v3206, 4294901760
    %v3622 = vsub.f32 %v3206, %v3621
    %3623 = vmatpush1.msra.mxu0 %v3622
    %v3624 = vand.u32 %v3210, 4294901760
    %v3625 = vsub.f32 %v3210, %v3624
    %3626 = vmatprep.subr.mxu0 %v3625
    %v3627 = vand.u32 %v3209, 4294901760
    %v3628 = vsub.f32 %v3209, %v3627
    %3629 = vmatpush1.msra.mxu0 %v3628
    %v3630 = vand.u32 %v3213, 4294901760
    %v3631 = vsub.f32 %v3213, %v3630
    %3632 = vmatprep.subr.mxu0 %v3631
    %v3633 = vand.u32 %v3212, 4294901760
    %v3634 = vsub.f32 %v3212, %v3633
    %3635 = vmatpush1.msra.mxu0 %v3634
    %v3636 = vand.u32 %v3216, 4294901760
    %v3637 = vsub.f32 %v3216, %v3636
    %3638 = vmatprep.subr.mxu0 %v3637
    %v3639 = vand.u32 %v3215, 4294901760
    %v3640 = vsub.f32 %v3215, %v3639
    %3641 = vmatpush1.msra.mxu0 %v3640
    %v3642 = vand.u32 %v3219, 4294901760
    %v3643 = vsub.f32 %v3219, %v3642
    %3644 = vmatprep.subr.mxu0 %v3643
    %v3645 = vand.u32 %v3218, 4294901760
    %v3646 = vsub.f32 %v3218, %v3645
    %3647 = vmatpush1.msra.mxu0 %v3646
    %v3648 = vand.u32 %v3222, 4294901760
    %v3649 = vsub.f32 %v3222, %v3648
    %3650 = vmatprep.subr.mxu0 %v3649
    %v3651 = vand.u32 %v3221, 4294901760
    %v3652 = vsub.f32 %v3221, %v3651
    %3653 = vmatpush1.msra.mxu0 %v3652
    %v3654 = vand.u32 %v3225, 4294901760
    %v3655 = vsub.f32 %v3225, %v3654
    %3656 = vmatprep.subr.mxu0 %v3655
    %v3657 = vand.u32 %v3224, 4294901760
    %v3658 = vsub.f32 %v3224, %v3657
    %3659 = vmatpush1.msra.mxu0 %v3658
    %v3660 = vand.u32 %v3228, 4294901760
    %v3661 = vsub.f32 %v3228, %v3660
    %3662 = vmatprep.subr.mxu0 %v3661
    %v3663 = vand.u32 %v3227, 4294901760
    %v3664 = vsub.f32 %v3227, %v3663
    %3665 = vmatpush1.msra.mxu0 %v3664
    %v3666 = vand.u32 %v3231, 4294901760
    %v3667 = vsub.f32 %v3231, %v3666
    %3668 = vmatprep.subr.mxu0 %v3667
    %v3669 = vand.u32 %v3230, 4294901760
    %v3670 = vsub.f32 %v3230, %v3669
    %3671 = vmatpush1.msra.mxu0 %v3670
    %v3672 = vand.u32 %v3234, 4294901760
    %v3673 = vsub.f32 %v3234, %v3672
    %3674 = vmatprep.subr.mxu0 %v3673
    %v3675 = vand.u32 %v3233, 4294901760
    %v3676 = vsub.f32 %v3233, %v3675
    %3677 = vmatpush1.msra.mxu0 %v3676
    %v3678 = vand.u32 %v3237, 4294901760
    %v3679 = vsub.f32 %v3237, %v3678
    %3680 = vmatprep.subr.mxu0 %v3679
    %v3681 = vand.u32 %v3236, 4294901760
    %v3682 = vsub.f32 %v3236, %v3681
    %3683 = vmatpush1.msra.mxu0 %v3682
    %v3684 = vand.u32 %v3240, 4294901760
    %v3685 = vsub.f32 %v3240, %v3684
    %3686 = vmatprep.subr.mxu0 %v3685
    %v3687 = vand.u32 %v3239, 4294901760
    %v3688 = vsub.f32 %v3239, %v3687
    %3689 = vmatpush1.msra.mxu0 %v3688
    %v3690 = vand.u32 %v3243, 4294901760
    %v3691 = vsub.f32 %v3243, %v3690
    %3692 = vmatprep.subr.mxu0 %v3691
    %v3693 = vand.u32 %v3242, 4294901760
    %v3694 = vsub.f32 %v3242, %v3693
    %3695 = vmatpush1.msra.mxu0 %v3694
    %v3696 = vand.u32 %v3246, 4294901760
    %v3697 = vsub.f32 %v3246, %v3696
    %3698 = vmatprep.subr.mxu0 %v3697
    %v3699 = vand.u32 %v3245, 4294901760
    %v3700 = vsub.f32 %v3245, %v3699
    %3701 = vmatpush1.msra.mxu0 %v3700
    %3702 = vmatprep.subr.mxu0 0.0
    %3703 = vmatpush1.msra.mxu0 0.0
    %3704 = vmatprep.subr.mxu0 0.0
    %3705 = vmatpush1.msra.mxu0 0.0
    %3706 = vmatprep.subr.mxu0 0.0
    %3707 = vmatpush1.msra.mxu0 0.0
    %3708 = vmatprep.subr.mxu0 0.0
    %3709 = vmatpush1.msra.mxu0 0.0
    %3710 = vmatprep.subr.mxu0 0.0
    %3711 = vmatpush1.msra.mxu0 0.0
    %3712 = vmatprep.subr.mxu0 0.0
    %3713 = vmatpush1.msra.mxu0 0.0
    %3714 = vmatprep.subr.mxu0 0.0
    %3715 = vmatpush1.msra.mxu0 0.0
    %3716 = vmatprep.subr.mxu0 0.0
    %3717 = vmatpush1.msra.mxu0 0.0
    %3718 = vmatprep.subr.mxu0 0.0
    %3719 = vmatpush1.msra.mxu0 0.0
    %3720 = vmatprep.subr.mxu0 0.0
    %3721 = vmatpush1.msra.mxu0 0.0
    %3722 = vmatprep.subr.mxu0 0.0
    %3723 = vmatpush1.msra.mxu0 0.0
    %3724 = vmatprep.subr.mxu0 0.0
    %3725 = vmatpush1.msra.mxu0 0.0
    %3726 = vmatprep.subr.mxu0 0.0
    %3727 = vmatpush1.msra.mxu0 0.0
    %3728 = vmatprep.subr.mxu0 0.0
    %3729 = vmatpush1.msra.mxu0 0.0
    %3730 = vmatprep.subr.mxu0 0.0
    %3731 = vmatpush1.msra.mxu0 0.0
    %3732 = vmatprep.subr.mxu0 0.0
    %3733 = vmatpush1.msra.mxu0 0.0
    %3734 = vmatprep.mubr.f32.mxu0 0.0
    %v3735 = vand.u32 %v3198, 4294901760
    %v3736 = vsub.f32 %v3198, %v3735
    %3737 = vmatmul.mubr.f32.gmra.mrb[0].mxu0 %v3736
    %v3738 = vpop.f32.mrb[0].mxu0
    %v3739 = vadd.f32 %v3602, %v3738
    %v3740 = vpop.f32.mrb[0].mxu0
    %v3741 = vadd.f32 %v3604, %v3740
    %3742 = vdwg.mxu0
    %v3743 = vand.u32 %v3201, 4294901760
    %3744 = vmatprep.subr.mxu0 %v3743
    %v3745 = vand.u32 %v3200, 4294901760
    %3746 = vmatpush1.msra.mxu0 %v3745
    %v3747 = vand.u32 %v3204, 4294901760
    %3748 = vmatprep.subr.mxu0 %v3747
    %v3749 = vand.u32 %v3203, 4294901760
    %3750 = vmatpush1.msra.mxu0 %v3749
    %v3751 = vand.u32 %v3207, 4294901760
    %3752 = vmatprep.subr.mxu0 %v3751
    %v3753 = vand.u32 %v3206, 4294901760
    %3754 = vmatpush1.msra.mxu0 %v3753
    %v3755 = vand.u32 %v3210, 4294901760
    %3756 = vmatprep.subr.mxu0 %v3755
    %v3757 = vand.u32 %v3209, 4294901760
    %3758 = vmatpush1.msra.mxu0 %v3757
    %v3759 = vand.u32 %v3213, 4294901760
    %3760 = vmatprep.subr.mxu0 %v3759
    %v3761 = vand.u32 %v3212, 4294901760
    %3762 = vmatpush1.msra.mxu0 %v3761
    %v3763 = vand.u32 %v3216, 4294901760
    %3764 = vmatprep.subr.mxu0 %v3763
    %v3765 = vand.u32 %v3215, 4294901760
    %3766 = vmatpush1.msra.mxu0 %v3765
    %v3767 = vand.u32 %v3219, 4294901760
    %3768 = vmatprep.subr.mxu0 %v3767
    %v3769 = vand.u32 %v3218, 4294901760
    %3770 = vmatpush1.msra.mxu0 %v3769
    %v3771 = vand.u32 %v3222, 4294901760
    %3772 = vmatprep.subr.mxu0 %v3771
    %v3773 = vand.u32 %v3221, 4294901760
    %3774 = vmatpush1.msra.mxu0 %v3773
    %v3775 = vand.u32 %v3225, 4294901760
    %3776 = vmatprep.subr.mxu0 %v3775
    %v3777 = vand.u32 %v3224, 4294901760
    %3778 = vmatpush1.msra.mxu0 %v3777
    %v3779 = vand.u32 %v3228, 4294901760
    %3780 = vmatprep.subr.mxu0 %v3779
    %v3781 = vand.u32 %v3227, 4294901760
    %3782 = vmatpush1.msra.mxu0 %v3781
    %v3783 = vand.u32 %v3231, 4294901760
    %3784 = vmatprep.subr.mxu0 %v3783
    %v3785 = vand.u32 %v3230, 4294901760
    %3786 = vmatpush1.msra.mxu0 %v3785
    %v3787 = vand.u32 %v3234, 4294901760
    %3788 = vmatprep.subr.mxu0 %v3787
    %v3789 = vand.u32 %v3233, 4294901760
    %3790 = vmatpush1.msra.mxu0 %v3789
    %v3791 = vand.u32 %v3237, 4294901760
    %3792 = vmatprep.subr.mxu0 %v3791
    %v3793 = vand.u32 %v3236, 4294901760
    %3794 = vmatpush1.msra.mxu0 %v3793
    %v3795 = vand.u32 %v3240, 4294901760
    %3796 = vmatprep.subr.mxu0 %v3795
    %v3797 = vand.u32 %v3239, 4294901760
    %3798 = vmatpush1.msra.mxu0 %v3797
    %v3799 = vand.u32 %v3243, 4294901760
    %3800 = vmatprep.subr.mxu0 %v3799
    %v3801 = vand.u32 %v3242, 4294901760
    %3802 = vmatpush1.msra.mxu0 %v3801
    %v3803 = vand.u32 %v3246, 4294901760
    %3804 = vmatprep.subr.mxu0 %v3803
    %v3805 = vand.u32 %v3245, 4294901760
    %3806 = vmatpush1.msra.mxu0 %v3805
    %3807 = vmatprep.subr.mxu0 0.0
    %3808 = vmatpush1.msra.mxu0 0.0
    %3809 = vmatprep.subr.mxu0 0.0
    %3810 = vmatpush1.msra.mxu0 0.0
    %3811 = vmatprep.subr.mxu0 0.0
    %3812 = vmatpush1.msra.mxu0 0.0
    %3813 = vmatprep.subr.mxu0 0.0
    %3814 = vmatpush1.msra.mxu0 0.0
    %3815 = vmatprep.subr.mxu0 0.0
    %3816 = vmatpush1.msra.mxu0 0.0
    %3817 = vmatprep.subr.mxu0 0.0
    %3818 = vmatpush1.msra.mxu0 0.0
    %3819 = vmatprep.subr.mxu0 0.0
    %3820 = vmatpush1.msra.mxu0 0.0
    %3821 = vmatprep.subr.mxu0 0.0
    %3822 = vmatpush1.msra.mxu0 0.0
    %3823 = vmatprep.subr.mxu0 0.0
    %3824 = vmatpush1.msra.mxu0 0.0
    %3825 = vmatprep.subr.mxu0 0.0
    %3826 = vmatpush1.msra.mxu0 0.0
    %3827 = vmatprep.subr.mxu0 0.0
    %3828 = vmatpush1.msra.mxu0 0.0
    %3829 = vmatprep.subr.mxu0 0.0
    %3830 = vmatpush1.msra.mxu0 0.0
    %3831 = vmatprep.subr.mxu0 0.0
    %3832 = vmatpush1.msra.mxu0 0.0
    %3833 = vmatprep.subr.mxu0 0.0
    %3834 = vmatpush1.msra.mxu0 0.0
    %3835 = vmatprep.subr.mxu0 0.0
    %3836 = vmatpush1.msra.mxu0 0.0
    %3837 = vmatprep.subr.mxu0 0.0
    %3838 = vmatpush1.msra.mxu0 0.0
    %3839 = vmatprep.mubr.f32.mxu0 0.0
    %v3840 = vand.u32 %v3198, 4294901760
    %v3841 = vsub.f32 %v3198, %v3840
    %v3842 = vand.u32 %v3841, 4294901760
    %3843 = vmatmul.mubr.f32.gmra.mrb[0].mxu0 %v3842
    %v3844 = vpop.f32.mrb[0].mxu0
    %v3845 = vadd.f32 %v3739, %v3844
    %v3846 = vpop.f32.mrb[0].mxu0
    %v3847 = vadd.f32 %v3741, %v3846
    %3848 = vdwg.mxu0
    %v3849 = vand.u32 %v3201, 4294901760
    %v3850 = vsub.f32 %v3201, %v3849
    %v3851 = vand.u32 %v3850, 4294901760
    %3852 = vmatprep.subr.mxu0 %v3851
    %v3853 = vand.u32 %v3200, 4294901760
    %v3854 = vsub.f32 %v3200, %v3853
    %v3855 = vand.u32 %v3854, 4294901760
    %3856 = vmatpush1.msra.mxu0 %v3855
    %v3857 = vand.u32 %v3204, 4294901760
    %v3858 = vsub.f32 %v3204, %v3857
    %v3859 = vand.u32 %v3858, 4294901760
    %3860 = vmatprep.subr.mxu0 %v3859
    %v3861 = vand.u32 %v3203, 4294901760
    %v3862 = vsub.f32 %v3203, %v3861
    %v3863 = vand.u32 %v3862, 4294901760
    %3864 = vmatpush1.msra.mxu0 %v3863
    %v3865 = vand.u32 %v3207, 4294901760
    %v3866 = vsub.f32 %v3207, %v3865
    %v3867 = vand.u32 %v3866, 4294901760
    %3868 = vmatprep.subr.mxu0 %v3867
    %v3869 = vand.u32 %v3206, 4294901760
    %v3870 = vsub.f32 %v3206, %v3869
    %v3871 = vand.u32 %v3870, 4294901760
    %3872 = vmatpush1.msra.mxu0 %v3871
    %v3873 = vand.u32 %v3210, 4294901760
    %v3874 = vsub.f32 %v3210, %v3873
    %v3875 = vand.u32 %v3874, 4294901760
    %3876 = vmatprep.subr.mxu0 %v3875
    %v3877 = vand.u32 %v3209, 4294901760
    %v3878 = vsub.f32 %v3209, %v3877
    %v3879 = vand.u32 %v3878, 4294901760
    %3880 = vmatpush1.msra.mxu0 %v3879
    %v3881 = vand.u32 %v3213, 4294901760
    %v3882 = vsub.f32 %v3213, %v3881
    %v3883 = vand.u32 %v3882, 4294901760
    %3884 = vmatprep.subr.mxu0 %v3883
    %v3885 = vand.u32 %v3212, 4294901760
    %v3886 = vsub.f32 %v3212, %v3885
    %v3887 = vand.u32 %v3886, 4294901760
    %3888 = vmatpush1.msra.mxu0 %v3887
    %v3889 = vand.u32 %v3216, 4294901760
    %v3890 = vsub.f32 %v3216, %v3889
    %v3891 = vand.u32 %v3890, 4294901760
    %3892 = vmatprep.subr.mxu0 %v3891
    %v3893 = vand.u32 %v3215, 4294901760
    %v3894 = vsub.f32 %v3215, %v3893
    %v3895 = vand.u32 %v3894, 4294901760
    %3896 = vmatpush1.msra.mxu0 %v3895
    %v3897 = vand.u32 %v3219, 4294901760
    %v3898 = vsub.f32 %v3219, %v3897
    %v3899 = vand.u32 %v3898, 4294901760
    %3900 = vmatprep.subr.mxu0 %v3899
    %v3901 = vand.u32 %v3218, 4294901760
    %v3902 = vsub.f32 %v3218, %v3901
    %v3903 = vand.u32 %v3902, 4294901760
    %3904 = vmatpush1.msra.mxu0 %v3903
    %v3905 = vand.u32 %v3222, 4294901760
    %v3906 = vsub.f32 %v3222, %v3905
    %v3907 = vand.u32 %v3906, 4294901760
    %3908 = vmatprep.subr.mxu0 %v3907
    %v3909 = vand.u32 %v3221, 4294901760
    %v3910 = vsub.f32 %v3221, %v3909
    %v3911 = vand.u32 %v3910, 4294901760
    %3912 = vmatpush1.msra.mxu0 %v3911
    %v3913 = vand.u32 %v3225, 4294901760
    %v3914 = vsub.f32 %v3225, %v3913
    %v3915 = vand.u32 %v3914, 4294901760
    %3916 = vmatprep.subr.mxu0 %v3915
    %v3917 = vand.u32 %v3224, 4294901760
    %v3918 = vsub.f32 %v3224, %v3917
    %v3919 = vand.u32 %v3918, 4294901760
    %3920 = vmatpush1.msra.mxu0 %v3919
    %v3921 = vand.u32 %v3228, 4294901760
    %v3922 = vsub.f32 %v3228, %v3921
    %v3923 = vand.u32 %v3922, 4294901760
    %3924 = vmatprep.subr.mxu0 %v3923
    %v3925 = vand.u32 %v3227, 4294901760
    %v3926 = vsub.f32 %v3227, %v3925
    %v3927 = vand.u32 %v3926, 4294901760
    %3928 = vmatpush1.msra.mxu0 %v3927
    %v3929 = vand.u32 %v3231, 4294901760
    %v3930 = vsub.f32 %v3231, %v3929
    %v3931 = vand.u32 %v3930, 4294901760
    %3932 = vmatprep.subr.mxu0 %v3931
    %v3933 = vand.u32 %v3230, 4294901760
    %v3934 = vsub.f32 %v3230, %v3933
    %v3935 = vand.u32 %v3934, 4294901760
    %3936 = vmatpush1.msra.mxu0 %v3935
    %v3937 = vand.u32 %v3234, 4294901760
    %v3938 = vsub.f32 %v3234, %v3937
    %v3939 = vand.u32 %v3938, 4294901760
    %3940 = vmatprep.subr.mxu0 %v3939
    %v3941 = vand.u32 %v3233, 4294901760
    %v3942 = vsub.f32 %v3233, %v3941
    %v3943 = vand.u32 %v3942, 4294901760
    %3944 = vmatpush1.msra.mxu0 %v3943
    %v3945 = vand.u32 %v3237, 4294901760
    %v3946 = vsub.f32 %v3237, %v3945
    %v3947 = vand.u32 %v3946, 4294901760
    %3948 = vmatprep.subr.mxu0 %v3947
    %v3949 = vand.u32 %v3236, 4294901760
    %v3950 = vsub.f32 %v3236, %v3949
    %v3951 = vand.u32 %v3950, 4294901760
    %3952 = vmatpush1.msra.mxu0 %v3951
    %v3953 = vand.u32 %v3240, 4294901760
    %v3954 = vsub.f32 %v3240, %v3953
    %v3955 = vand.u32 %v3954, 4294901760
    %3956 = vmatprep.subr.mxu0 %v3955
    %v3957 = vand.u32 %v3239, 4294901760
    %v3958 = vsub.f32 %v3239, %v3957
    %v3959 = vand.u32 %v3958, 4294901760
    %3960 = vmatpush1.msra.mxu0 %v3959
    %v3961 = vand.u32 %v3243, 4294901760
    %v3962 = vsub.f32 %v3243, %v3961
    %v3963 = vand.u32 %v3962, 4294901760
    %3964 = vmatprep.subr.mxu0 %v3963
    %v3965 = vand.u32 %v3242, 4294901760
    %v3966 = vsub.f32 %v3242, %v3965
    %v3967 = vand.u32 %v3966, 4294901760
    %3968 = vmatpush1.msra.mxu0 %v3967
    %v3969 = vand.u32 %v3246, 4294901760
    %v3970 = vsub.f32 %v3246, %v3969
    %v3971 = vand.u32 %v3970, 4294901760
    %3972 = vmatprep.subr.mxu0 %v3971
    %v3973 = vand.u32 %v3245, 4294901760
    %v3974 = vsub.f32 %v3245, %v3973
    %v3975 = vand.u32 %v3974, 4294901760
    %3976 = vmatpush1.msra.mxu0 %v3975
    %3977 = vmatprep.subr.mxu0 0.0
    %3978 = vmatpush1.msra.mxu0 0.0
    %3979 = vmatprep.subr.mxu0 0.0
    %3980 = vmatpush1.msra.mxu0 0.0
    %3981 = vmatprep.subr.mxu0 0.0
    %3982 = vmatpush1.msra.mxu0 0.0
    %3983 = vmatprep.subr.mxu0 0.0
    %3984 = vmatpush1.msra.mxu0 0.0
    %3985 = vmatprep.subr.mxu0 0.0
    %3986 = vmatpush1.msra.mxu0 0.0
    %3987 = vmatprep.subr.mxu0 0.0
    %3988 = vmatpush1.msra.mxu0 0.0
    %3989 = vmatprep.subr.mxu0 0.0
    %3990 = vmatpush1.msra.mxu0 0.0
    %3991 = vmatprep.subr.mxu0 0.0
    %3992 = vmatpush1.msra.mxu0 0.0
    %3993 = vmatprep.subr.mxu0 0.0
    %3994 = vmatpush1.msra.mxu0 0.0
    %3995 = vmatprep.subr.mxu0 0.0
    %3996 = vmatpush1.msra.mxu0 0.0
    %3997 = vmatprep.subr.mxu0 0.0
    %3998 = vmatpush1.msra.mxu0 0.0
    %3999 = vmatprep.subr.mxu0 0.0
    %4000 = vmatpush1.msra.mxu0 0.0
    %4001 = vmatprep.subr.mxu0 0.0
    %4002 = vmatpush1.msra.mxu0 0.0
    %4003 = vmatprep.subr.mxu0 0.0
    %4004 = vmatpush1.msra.mxu0 0.0
    %4005 = vmatprep.subr.mxu0 0.0
    %4006 = vmatpush1.msra.mxu0 0.0
    %4007 = vmatprep.subr.mxu0 0.0
    %4008 = vmatpush1.msra.mxu0 0.0
    %4009 = vmatprep.mubr.f32.mxu0 0.0
    %v4010 = vand.u32 %v3198, 4294901760
    %4011 = vmatmul.mubr.f32.gmra.mrb[0].mxu0 %v4010
    %v4012 = vpop.f32.mrb[0].mxu0
    %v4013 = vadd.f32 %v3845, %v4012
    %v4014 = vpop.f32.mrb[0].mxu0
    %v4015 = vadd.f32 %v3847, %v4014
    %4016 = vdwg.mxu0
    %v4017 = vand.u32 %v3201, 4294901760
    %4018 = vmatprep.subr.mxu0 %v4017
    %v4019 = vand.u32 %v3200, 4294901760
    %4020 = vmatpush1.msra.mxu0 %v4019
    %v4021 = vand.u32 %v3204, 4294901760
    %4022 = vmatprep.subr.mxu0 %v4021
    %v4023 = vand.u32 %v3203, 4294901760
    %4024 = vmatpush1.msra.mxu0 %v4023
    %v4025 = vand.u32 %v3207, 4294901760
    %4026 = vmatprep.subr.mxu0 %v4025
    %v4027 = vand.u32 %v3206, 4294901760
    %4028 = vmatpush1.msra.mxu0 %v4027
    %v4029 = vand.u32 %v3210, 4294901760
    %4030 = vmatprep.subr.mxu0 %v4029
    %v4031 = vand.u32 %v3209, 4294901760
    %4032 = vmatpush1.msra.mxu0 %v4031
    %v4033 = vand.u32 %v3213, 4294901760
    %4034 = vmatprep.subr.mxu0 %v4033
    %v4035 = vand.u32 %v3212, 4294901760
    %4036 = vmatpush1.msra.mxu0 %v4035
    %v4037 = vand.u32 %v3216, 4294901760
    %4038 = vmatprep.subr.mxu0 %v4037
    %v4039 = vand.u32 %v3215, 4294901760
    %4040 = vmatpush1.msra.mxu0 %v4039
    %v4041 = vand.u32 %v3219, 4294901760
    %4042 = vmatprep.subr.mxu0 %v4041
    %v4043 = vand.u32 %v3218, 4294901760
    %4044 = vmatpush1.msra.mxu0 %v4043
    %v4045 = vand.u32 %v3222, 4294901760
    %4046 = vmatprep.subr.mxu0 %v4045
    %v4047 = vand.u32 %v3221, 4294901760
    %4048 = vmatpush1.msra.mxu0 %v4047
    %v4049 = vand.u32 %v3225, 4294901760
    %4050 = vmatprep.subr.mxu0 %v4049
    %v4051 = vand.u32 %v3224, 4294901760
    %4052 = vmatpush1.msra.mxu0 %v4051
    %v4053 = vand.u32 %v3228, 4294901760
    %4054 = vmatprep.subr.mxu0 %v4053
    %v4055 = vand.u32 %v3227, 4294901760
    %4056 = vmatpush1.msra.mxu0 %v4055
    %v4057 = vand.u32 %v3231, 4294901760
    %4058 = vmatprep.subr.mxu0 %v4057
    %v4059 = vand.u32 %v3230, 4294901760
    %4060 = vmatpush1.msra.mxu0 %v4059
    %v4061 = vand.u32 %v3234, 4294901760
    %4062 = vmatprep.subr.mxu0 %v4061
    %v4063 = vand.u32 %v3233, 4294901760
    %4064 = vmatpush1.msra.mxu0 %v4063
    %v4065 = vand.u32 %v3237, 4294901760
    %4066 = vmatprep.subr.mxu0 %v4065
    %v4067 = vand.u32 %v3236, 4294901760
    %4068 = vmatpush1.msra.mxu0 %v4067
    %v4069 = vand.u32 %v3240, 4294901760
    %4070 = vmatprep.subr.mxu0 %v4069
    %v4071 = vand.u32 %v3239, 4294901760
    %4072 = vmatpush1.msra.mxu0 %v4071
    %v4073 = vand.u32 %v3243, 4294901760
    %4074 = vmatprep.subr.mxu0 %v4073
    %v4075 = vand.u32 %v3242, 4294901760
    %4076 = vmatpush1.msra.mxu0 %v4075
    %v4077 = vand.u32 %v3246, 4294901760
    %4078 = vmatprep.subr.mxu0 %v4077
    %v4079 = vand.u32 %v3245, 4294901760
    %4080 = vmatpush1.msra.mxu0 %v4079
    %4081 = vmatprep.subr.mxu0 0.0
    %4082 = vmatpush1.msra.mxu0 0.0
    %4083 = vmatprep.subr.mxu0 0.0
    %4084 = vmatpush1.msra.mxu0 0.0
    %4085 = vmatprep.subr.mxu0 0.0
    %4086 = vmatpush1.msra.mxu0 0.0
    %4087 = vmatprep.subr.mxu0 0.0
    %4088 = vmatpush1.msra.mxu0 0.0
    %4089 = vmatprep.subr.mxu0 0.0
    %4090 = vmatpush1.msra.mxu0 0.0
    %4091 = vmatprep.subr.mxu0 0.0
    %4092 = vmatpush1.msra.mxu0 0.0
    %4093 = vmatprep.subr.mxu0 0.0
    %4094 = vmatpush1.msra.mxu0 0.0
    %4095 = vmatprep.subr.mxu0 0.0
    %4096 = vmatpush1.msra.mxu0 0.0
    %4097 = vmatprep.subr.mxu0 0.0
    %4098 = vmatpush1.msra.mxu0 0.0
    %4099 = vmatprep.subr.mxu0 0.0
    %4100 = vmatpush1.msra.mxu0 0.0
    %4101 = vmatprep.subr.mxu0 0.0
    %4102 = vmatpush1.msra.mxu0 0.0
    %4103 = vmatprep.subr.mxu0 0.0
    %4104 = vmatpush1.msra.mxu0 0.0
    %4105 = vmatprep.subr.mxu0 0.0
    %4106 = vmatpush1.msra.mxu0 0.0
    %4107 = vmatprep.subr.mxu0 0.0
    %4108 = vmatpush1.msra.mxu0 0.0
    %4109 = vmatprep.subr.mxu0 0.0
    %4110 = vmatpush1.msra.mxu0 0.0
    %4111 = vmatprep.subr.mxu0 0.0
    %4112 = vmatpush1.msra.mxu0 0.0
    %4113 = vmatprep.mubr.f32.mxu0 0.0
    %v4114 = vand.u32 %v3198, 4294901760
    %4115 = vmatmul.mubr.f32.gmra.mrb[0].mxu0 %v4114
    %v4116 = vpop.f32.mrb[0].mxu0
    %v4117 = vadd.f32 %v4013, %v4116
    %v4118 = vpop.f32.mrb[0].mxu0
    %v4119 = vadd.f32 %v4015, %v4118
    %4120 = vdwg.mxu0
    %4121 = vmatprep.subr.mxu0 0.0
    %v4122 = vand.u32 %v3202, 4294901760
    %4123 = vmatpush1.msra.mxu0 %v4122
    %4124 = vmatprep.subr.mxu0 0.0
    %v4125 = vand.u32 %v3205, 4294901760
    %4126 = vmatpush1.msra.mxu0 %v4125
    %4127 = vmatprep.subr.mxu0 0.0
    %v4128 = vand.u32 %v3208, 4294901760
    %4129 = vmatpush1.msra.mxu0 %v4128
    %4130 = vmatprep.subr.mxu0 0.0
    %v4131 = vand.u32 %v3211, 4294901760
    %4132 = vmatpush1.msra.mxu0 %v4131
    %4133 = vmatprep.subr.mxu0 0.0
    %v4134 = vand.u32 %v3214, 4294901760
    %4135 = vmatpush1.msra.mxu0 %v4134
    %4136 = vmatprep.subr.mxu0 0.0
    %v4137 = vand.u32 %v3217, 4294901760
    %4138 = vmatpush1.msra.mxu0 %v4137
    %4139 = vmatprep.subr.mxu0 0.0
    %v4140 = vand.u32 %v3220, 4294901760
    %4141 = vmatpush1.msra.mxu0 %v4140
    %4142 = vmatprep.subr.mxu0 0.0
    %v4143 = vand.u32 %v3223, 4294901760
    %4144 = vmatpush1.msra.mxu0 %v4143
    %4145 = vmatprep.subr.mxu0 0.0
    %v4146 = vand.u32 %v3226, 4294901760
    %4147 = vmatpush1.msra.mxu0 %v4146
    %4148 = vmatprep.subr.mxu0 0.0
    %v4149 = vand.u32 %v3229, 4294901760
    %4150 = vmatpush1.msra.mxu0 %v4149
    %4151 = vmatprep.subr.mxu0 0.0
    %v4152 = vand.u32 %v3232, 4294901760
    %4153 = vmatpush1.msra.mxu0 %v4152
    %4154 = vmatprep.subr.mxu0 0.0
    %v4155 = vand.u32 %v3235, 4294901760
    %4156 = vmatpush1.msra.mxu0 %v4155
    %4157 = vmatprep.subr.mxu0 0.0
    %v4158 = vand.u32 %v3238, 4294901760
    %4159 = vmatpush1.msra.mxu0 %v4158
    %4160 = vmatprep.subr.mxu0 0.0
    %v4161 = vand.u32 %v3241, 4294901760
    %4162 = vmatpush1.msra.mxu0 %v4161
    %4163 = vmatprep.subr.mxu0 0.0
    %v4164 = vand.u32 %v3244, 4294901760
    %4165 = vmatpush1.msra.mxu0 %v4164
    %4166 = vmatprep.subr.mxu0 0.0
    %v4167 = vand.u32 %v3247, 4294901760
    %4168 = vmatpush1.msra.mxu0 %v4167
    %4169 = vmatprep.subr.mxu0 0.0
    %4170 = vmatpush1.msra.mxu0 0.0
    %4171 = vmatprep.subr.mxu0 0.0
    %4172 = vmatpush1.msra.mxu0 0.0
    %4173 = vmatprep.subr.mxu0 0.0
    %4174 = vmatpush1.msra.mxu0 0.0
    %4175 = vmatprep.subr.mxu0 0.0
    %4176 = vmatpush1.msra.mxu0 0.0
    %4177 = vmatprep.subr.mxu0 0.0
    %4178 = vmatpush1.msra.mxu0 0.0
    %4179 = vmatprep.subr.mxu0 0.0
    %4180 = vmatpush1.msra.mxu0 0.0
    %4181 = vmatprep.subr.mxu0 0.0
    %4182 = vmatpush1.msra.mxu0 0.0
    %4183 = vmatprep.subr.mxu0 0.0
    %4184 = vmatpush1.msra.mxu0 0.0
    %4185 = vmatprep.subr.mxu0 0.0
    %4186 = vmatpush1.msra.mxu0 0.0
    %4187 = vmatprep.subr.mxu0 0.0
    %4188 = vmatpush1.msra.mxu0 0.0
    %4189 = vmatprep.subr.mxu0 0.0
    %4190 = vmatpush1.msra.mxu0 0.0
    %4191 = vmatprep.subr.mxu0 0.0
    %4192 = vmatpush1.msra.mxu0 0.0
    %4193 = vmatprep.subr.mxu0 0.0
    %4194 = vmatpush1.msra.mxu0 0.0
    %4195 = vmatprep.subr.mxu0 0.0
    %4196 = vmatpush1.msra.mxu0 0.0
    %4197 = vmatprep.subr.mxu0 0.0
    %4198 = vmatpush1.msra.mxu0 0.0
    %4199 = vmatprep.subr.mxu0 0.0
    %4200 = vmatpush1.msra.mxu0 0.0
    %4201 = vmatprep.mubr.f32.mxu0 0.0
    %v4202 = vand.u32 %v3198, 4294901760
    %v4203 = vsub.f32 %v3198, %v4202
    %v4204 = vand.u32 %v4203, 4294901760
    %v4205 = vsub.f32 %v4203, %v4204
    %v4206 = vand.u32 %v4205, 4294901760
    %4207 = vmatmul.mubr.f32.gmra.mrb[0].mxu0 %v4206
    %v4208 = vpop.f32.mrb[0].mxu0
    %v4209 = vadd.f32 %v3262, %v4208
    %v4210 = vpop.f32.mrb[0].mxu0
    %4211 = vdwg.mxu0
    %4212 = vmatprep.subr.mxu0 0.0
    %v4213 = vand.u32 %v3202, 4294901760
    %v4214 = vsub.f32 %v3202, %v4213
    %v4215 = vand.u32 %v4214, 4294901760
    %v4216 = vsub.f32 %v4214, %v4215
    %v4217 = vand.u32 %v4216, 4294901760
    %4218 = vmatpush1.msra.mxu0 %v4217
    %4219 = vmatprep.subr.mxu0 0.0
    %v4220 = vand.u32 %v3205, 4294901760
    %v4221 = vsub.f32 %v3205, %v4220
    %v4222 = vand.u32 %v4221, 4294901760
    %v4223 = vsub.f32 %v4221, %v4222
    %v4224 = vand.u32 %v4223, 4294901760
    %4225 = vmatpush1.msra.mxu0 %v4224
    %4226 = vmatprep.subr.mxu0 0.0
    %v4227 = vand.u32 %v3208, 4294901760
    %v4228 = vsub.f32 %v3208, %v4227
    %v4229 = vand.u32 %v4228, 4294901760
    %v4230 = vsub.f32 %v4228, %v4229
    %v4231 = vand.u32 %v4230, 4294901760
    %4232 = vmatpush1.msra.mxu0 %v4231
    %4233 = vmatprep.subr.mxu0 0.0
    %v4234 = vand.u32 %v3211, 4294901760
    %v4235 = vsub.f32 %v3211, %v4234
    %v4236 = vand.u32 %v4235, 4294901760
    %v4237 = vsub.f32 %v4235, %v4236
    %v4238 = vand.u32 %v4237, 4294901760
    %4239 = vmatpush1.msra.mxu0 %v4238
    %4240 = vmatprep.subr.mxu0 0.0
    %v4241 = vand.u32 %v3214, 4294901760
    %v4242 = vsub.f32 %v3214, %v4241
    %v4243 = vand.u32 %v4242, 4294901760
    %v4244 = vsub.f32 %v4242, %v4243
    %v4245 = vand.u32 %v4244, 4294901760
    %4246 = vmatpush1.msra.mxu0 %v4245
    %4247 = vmatprep.subr.mxu0 0.0
    %v4248 = vand.u32 %v3217, 4294901760
    %v4249 = vsub.f32 %v3217, %v4248
    %v4250 = vand.u32 %v4249, 4294901760
    %v4251 = vsub.f32 %v4249, %v4250
    %v4252 = vand.u32 %v4251, 4294901760
    %4253 = vmatpush1.msra.mxu0 %v4252
    %4254 = vmatprep.subr.mxu0 0.0
    %v4255 = vand.u32 %v3220, 4294901760
    %v4256 = vsub.f32 %v3220, %v4255
    %v4257 = vand.u32 %v4256, 4294901760
    %v4258 = vsub.f32 %v4256, %v4257
    %v4259 = vand.u32 %v4258, 4294901760
    %4260 = vmatpush1.msra.mxu0 %v4259
    %4261 = vmatprep.subr.mxu0 0.0
    %v4262 = vand.u32 %v3223, 4294901760
    %v4263 = vsub.f32 %v3223, %v4262
    %v4264 = vand.u32 %v4263, 4294901760
    %v4265 = vsub.f32 %v4263, %v4264
    %v4266 = vand.u32 %v4265, 4294901760
    %4267 = vmatpush1.msra.mxu0 %v4266
    %4268 = vmatprep.subr.mxu0 0.0
    %v4269 = vand.u32 %v3226, 4294901760
    %v4270 = vsub.f32 %v3226, %v4269
    %v4271 = vand.u32 %v4270, 4294901760
    %v4272 = vsub.f32 %v4270, %v4271
    %v4273 = vand.u32 %v4272, 4294901760
    %4274 = vmatpush1.msra.mxu0 %v4273
    %4275 = vmatprep.subr.mxu0 0.0
    %v4276 = vand.u32 %v3229, 4294901760
    %v4277 = vsub.f32 %v3229, %v4276
    %v4278 = vand.u32 %v4277, 4294901760
    %v4279 = vsub.f32 %v4277, %v4278
    %v4280 = vand.u32 %v4279, 4294901760
    %4281 = vmatpush1.msra.mxu0 %v4280
    %4282 = vmatprep.subr.mxu0 0.0
    %v4283 = vand.u32 %v3232, 4294901760
    %v4284 = vsub.f32 %v3232, %v4283
    %v4285 = vand.u32 %v4284, 4294901760
    %v4286 = vsub.f32 %v4284, %v4285
    %v4287 = vand.u32 %v4286, 4294901760
    %4288 = vmatpush1.msra.mxu0 %v4287
    %4289 = vmatprep.subr.mxu0 0.0
    %v4290 = vand.u32 %v3235, 4294901760
    %v4291 = vsub.f32 %v3235, %v4290
    %v4292 = vand.u32 %v4291, 4294901760
    %v4293 = vsub.f32 %v4291, %v4292
    %v4294 = vand.u32 %v4293, 4294901760
    %4295 = vmatpush1.msra.mxu0 %v4294
    %4296 = vmatprep.subr.mxu0 0.0
    %v4297 = vand.u32 %v3238, 4294901760
    %v4298 = vsub.f32 %v3238, %v4297
    %v4299 = vand.u32 %v4298, 4294901760
    %v4300 = vsub.f32 %v4298, %v4299
    %v4301 = vand.u32 %v4300, 4294901760
    %4302 = vmatpush1.msra.mxu0 %v4301
    %4303 = vmatprep.subr.mxu0 0.0
    %v4304 = vand.u32 %v3241, 4294901760
    %v4305 = vsub.f32 %v3241, %v4304
    %v4306 = vand.u32 %v4305, 4294901760
    %v4307 = vsub.f32 %v4305, %v4306
    %v4308 = vand.u32 %v4307, 4294901760
    %4309 = vmatpush1.msra.mxu0 %v4308
    %4310 = vmatprep.subr.mxu0 0.0
    %v4311 = vand.u32 %v3244, 4294901760
    %v4312 = vsub.f32 %v3244, %v4311
    %v4313 = vand.u32 %v4312, 4294901760
    %v4314 = vsub.f32 %v4312, %v4313
    %v4315 = vand.u32 %v4314, 4294901760
    %4316 = vmatpush1.msra.mxu0 %v4315
    %4317 = vmatprep.subr.mxu0 0.0
    %v4318 = vand.u32 %v3247, 4294901760
    %v4319 = vsub.f32 %v3247, %v4318
    %v4320 = vand.u32 %v4319, 4294901760
    %v4321 = vsub.f32 %v4319, %v4320
    %v4322 = vand.u32 %v4321, 4294901760
    %4323 = vmatpush1.msra.mxu0 %v4322
    %4324 = vmatprep.subr.mxu0 0.0
    %4325 = vmatpush1.msra.mxu0 0.0
    %4326 = vmatprep.subr.mxu0 0.0
    %4327 = vmatpush1.msra.mxu0 0.0
    %4328 = vmatprep.subr.mxu0 0.0
    %4329 = vmatpush1.msra.mxu0 0.0
    %4330 = vmatprep.subr.mxu0 0.0
    %4331 = vmatpush1.msra.mxu0 0.0
    %4332 = vmatprep.subr.mxu0 0.0
    %4333 = vmatpush1.msra.mxu0 0.0
    %4334 = vmatprep.subr.mxu0 0.0
    %4335 = vmatpush1.msra.mxu0 0.0
    %4336 = vmatprep.subr.mxu0 0.0
    %4337 = vmatpush1.msra.mxu0 0.0
    %4338 = vmatprep.subr.mxu0 0.0
    %4339 = vmatpush1.msra.mxu0 0.0
    %4340 = vmatprep.subr.mxu0 0.0
    %4341 = vmatpush1.msra.mxu0 0.0
    %4342 = vmatprep.subr.mxu0 0.0
    %4343 = vmatpush1.msra.mxu0 0.0
    %4344 = vmatprep.subr.mxu0 0.0
    %4345 = vmatpush1.msra.mxu0 0.0
    %4346 = vmatprep.subr.mxu0 0.0
    %4347 = vmatpush1.msra.mxu0 0.0
    %4348 = vmatprep.subr.mxu0 0.0
    %4349 = vmatpush1.msra.mxu0 0.0
    %4350 = vmatprep.subr.mxu0 0.0
    %4351 = vmatpush1.msra.mxu0 0.0
    %4352 = vmatprep.subr.mxu0 0.0
    %4353 = vmatpush1.msra.mxu0 0.0
    %4354 = vmatprep.subr.mxu0 0.0
    %4355 = vmatpush1.msra.mxu0 0.0
    %4356 = vmatprep.mubr.f32.mxu0 0.0
    %v4357 = vand.u32 %v3198, 4294901760
    %4358 = vmatmul.mubr.f32.gmra.mrb[0].mxu0 %v4357
    %v4359 = vpop.f32.mrb[0].mxu0
    %v4360 = vadd.f32 %v4209, %v4359
    %v4361 = vpop.f32.mrb[0].mxu0
    %4362 = vdwg.mxu0
    %4363 = vmatprep.subr.mxu0 0.0
    %v4364 = vand.u32 %v3202, 4294901760
    %v4365 = vsub.f32 %v3202, %v4364
    %4366 = vmatpush1.msra.mxu0 %v4365
    %4367 = vmatprep.subr.mxu0 0.0
    %v4368 = vand.u32 %v3205, 4294901760
    %v4369 = vsub.f32 %v3205, %v4368
    %4370 = vmatpush1.msra.mxu0 %v4369
    %4371 = vmatprep.subr.mxu0 0.0
    %v4372 = vand.u32 %v3208, 4294901760
    %v4373 = vsub.f32 %v3208, %v4372
    %4374 = vmatpush1.msra.mxu0 %v4373
    %4375 = vmatprep.subr.mxu0 0.0
    %v4376 = vand.u32 %v3211, 4294901760
    %v4377 = vsub.f32 %v3211, %v4376
    %4378 = vmatpush1.msra.mxu0 %v4377
    %4379 = vmatprep.subr.mxu0 0.0
    %v4380 = vand.u32 %v3214, 4294901760
    %v4381 = vsub.f32 %v3214, %v4380
    %4382 = vmatpush1.msra.mxu0 %v4381
    %4383 = vmatprep.subr.mxu0 0.0
    %v4384 = vand.u32 %v3217, 4294901760
    %v4385 = vsub.f32 %v3217, %v4384
    %4386 = vmatpush1.msra.mxu0 %v4385
    %4387 = vmatprep.subr.mxu0 0.0
    %v4388 = vand.u32 %v3220, 4294901760
    %v4389 = vsub.f32 %v3220, %v4388
    %4390 = vmatpush1.msra.mxu0 %v4389
    %4391 = vmatprep.subr.mxu0 0.0
    %v4392 = vand.u32 %v3223, 4294901760
    %v4393 = vsub.f32 %v3223, %v4392
    %4394 = vmatpush1.msra.mxu0 %v4393
    %4395 = vmatprep.subr.mxu0 0.0
    %v4396 = vand.u32 %v3226, 4294901760
    %v4397 = vsub.f32 %v3226, %v4396
    %4398 = vmatpush1.msra.mxu0 %v4397
    %4399 = vmatprep.subr.mxu0 0.0
    %v4400 = vand.u32 %v3229, 4294901760
    %v4401 = vsub.f32 %v3229, %v4400
    %4402 = vmatpush1.msra.mxu0 %v4401
    %4403 = vmatprep.subr.mxu0 0.0
    %v4404 = vand.u32 %v3232, 4294901760
    %v4405 = vsub.f32 %v3232, %v4404
    %4406 = vmatpush1.msra.mxu0 %v4405
    %4407 = vmatprep.subr.mxu0 0.0
    %v4408 = vand.u32 %v3235, 4294901760
    %v4409 = vsub.f32 %v3235, %v4408
    %4410 = vmatpush1.msra.mxu0 %v4409
    %4411 = vmatprep.subr.mxu0 0.0
    %v4412 = vand.u32 %v3238, 4294901760
    %v4413 = vsub.f32 %v3238, %v4412
    %4414 = vmatpush1.msra.mxu0 %v4413
    %4415 = vmatprep.subr.mxu0 0.0
    %v4416 = vand.u32 %v3241, 4294901760
    %v4417 = vsub.f32 %v3241, %v4416
    %4418 = vmatpush1.msra.mxu0 %v4417
    %4419 = vmatprep.subr.mxu0 0.0
    %v4420 = vand.u32 %v3244, 4294901760
    %v4421 = vsub.f32 %v3244, %v4420
    %4422 = vmatpush1.msra.mxu0 %v4421
    %4423 = vmatprep.subr.mxu0 0.0
    %v4424 = vand.u32 %v3247, 4294901760
    %v4425 = vsub.f32 %v3247, %v4424
    %4426 = vmatpush1.msra.mxu0 %v4425
    %4427 = vmatprep.subr.mxu0 0.0
    %4428 = vmatpush1.msra.mxu0 0.0
    %4429 = vmatprep.subr.mxu0 0.0
    %4430 = vmatpush1.msra.mxu0 0.0
    %4431 = vmatprep.subr.mxu0 0.0
    %4432 = vmatpush1.msra.mxu0 0.0
    %4433 = vmatprep.subr.mxu0 0.0
    %4434 = vmatpush1.msra.mxu0 0.0
    %4435 = vmatprep.subr.mxu0 0.0
    %4436 = vmatpush1.msra.mxu0 0.0
    %4437 = vmatprep.subr.mxu0 0.0
    %4438 = vmatpush1.msra.mxu0 0.0
    %4439 = vmatprep.subr.mxu0 0.0
    %4440 = vmatpush1.msra.mxu0 0.0
    %4441 = vmatprep.subr.mxu0 0.0
    %4442 = vmatpush1.msra.mxu0 0.0
    %4443 = vmatprep.subr.mxu0 0.0
    %4444 = vmatpush1.msra.mxu0 0.0
    %4445 = vmatprep.subr.mxu0 0.0
    %4446 = vmatpush1.msra.mxu0 0.0
    %4447 = vmatprep.subr.mxu0 0.0
    %4448 = vmatpush1.msra.mxu0 0.0
    %4449 = vmatprep.subr.mxu0 0.0
    %4450 = vmatpush1.msra.mxu0 0.0
    %4451 = vmatprep.subr.mxu0 0.0
    %4452 = vmatpush1.msra.mxu0 0.0
    %4453 = vmatprep.subr.mxu0 0.0
    %4454 = vmatpush1.msra.mxu0 0.0
    %4455 = vmatprep.subr.mxu0 0.0
    %4456 = vmatpush1.msra.mxu0 0.0
    %4457 = vmatprep.subr.mxu0 0.0
    %4458 = vmatpush1.msra.mxu0 0.0
    %4459 = vmatprep.mubr.f32.mxu0 0.0
    %v4460 = vand.u32 %v3198, 4294901760
    %v4461 = vsub.f32 %v3198, %v4460
    %4462 = vmatmul.mubr.f32.gmra.mrb[0].mxu0 %v4461
    %v4463 = vpop.f32.mrb[0].mxu0
    %v4464 = vadd.f32 %v4360, %v4463
    %v4465 = vpop.f32.mrb[0].mxu0
    %4466 = vdwg.mxu0
    %4467 = vmatprep.subr.mxu0 0.0
    %v4468 = vand.u32 %v3202, 4294901760
    %4469 = vmatpush1.msra.mxu0 %v4468
    %4470 = vmatprep.subr.mxu0 0.0
    %v4471 = vand.u32 %v3205, 4294901760
    %4472 = vmatpush1.msra.mxu0 %v4471
    %4473 = vmatprep.subr.mxu0 0.0
    %v4474 = vand.u32 %v3208, 4294901760
    %4475 = vmatpush1.msra.mxu0 %v4474
    %4476 = vmatprep.subr.mxu0 0.0
    %v4477 = vand.u32 %v3211, 4294901760
    %4478 = vmatpush1.msra.mxu0 %v4477
    %4479 = vmatprep.subr.mxu0 0.0
    %v4480 = vand.u32 %v3214, 4294901760
    %4481 = vmatpush1.msra.mxu0 %v4480
    %4482 = vmatprep.subr.mxu0 0.0
    %v4483 = vand.u32 %v3217, 4294901760
    %4484 = vmatpush1.msra.mxu0 %v4483
    %4485 = vmatprep.subr.mxu0 0.0
    %v4486 = vand.u32 %v3220, 4294901760
    %4487 = vmatpush1.msra.mxu0 %v4486
    %4488 = vmatprep.subr.mxu0 0.0
    %v4489 = vand.u32 %v3223, 4294901760
    %4490 = vmatpush1.msra.mxu0 %v4489
    %4491 = vmatprep.subr.mxu0 0.0
    %v4492 = vand.u32 %v3226, 4294901760
    %4493 = vmatpush1.msra.mxu0 %v4492
    %4494 = vmatprep.subr.mxu0 0.0
    %v4495 = vand.u32 %v3229, 4294901760
    %4496 = vmatpush1.msra.mxu0 %v4495
    %4497 = vmatprep.subr.mxu0 0.0
    %v4498 = vand.u32 %v3232, 4294901760
    %4499 = vmatpush1.msra.mxu0 %v4498
    %4500 = vmatprep.subr.mxu0 0.0
    %v4501 = vand.u32 %v3235, 4294901760
    %4502 = vmatpush1.msra.mxu0 %v4501
    %4503 = vmatprep.subr.mxu0 0.0
    %v4504 = vand.u32 %v3238, 4294901760
    %4505 = vmatpush1.msra.mxu0 %v4504
    %4506 = vmatprep.subr.mxu0 0.0
    %v4507 = vand.u32 %v3241, 4294901760
    %4508 = vmatpush1.msra.mxu0 %v4507
    %4509 = vmatprep.subr.mxu0 0.0
    %v4510 = vand.u32 %v3244, 4294901760
    %4511 = vmatpush1.msra.mxu0 %v4510
    %4512 = vmatprep.subr.mxu0 0.0
    %v4513 = vand.u32 %v3247, 4294901760
    %4514 = vmatpush1.msra.mxu0 %v4513
    %4515 = vmatprep.subr.mxu0 0.0
    %4516 = vmatpush1.msra.mxu0 0.0
    %4517 = vmatprep.subr.mxu0 0.0
    %4518 = vmatpush1.msra.mxu0 0.0
    %4519 = vmatprep.subr.mxu0 0.0
    %4520 = vmatpush1.msra.mxu0 0.0
    %4521 = vmatprep.subr.mxu0 0.0
    %4522 = vmatpush1.msra.mxu0 0.0
    %4523 = vmatprep.subr.mxu0 0.0
    %4524 = vmatpush1.msra.mxu0 0.0
    %4525 = vmatprep.subr.mxu0 0.0
    %4526 = vmatpush1.msra.mxu0 0.0
    %4527 = vmatprep.subr.mxu0 0.0
    %4528 = vmatpush1.msra.mxu0 0.0
    %4529 = vmatprep.subr.mxu0 0.0
    %4530 = vmatpush1.msra.mxu0 0.0
    %4531 = vmatprep.subr.mxu0 0.0
    %4532 = vmatpush1.msra.mxu0 0.0
    %4533 = vmatprep.subr.mxu0 0.0
    %4534 = vmatpush1.msra.mxu0 0.0
    %4535 = vmatprep.subr.mxu0 0.0
    %4536 = vmatpush1.msra.mxu0 0.0
    %4537 = vmatprep.subr.mxu0 0.0
    %4538 = vmatpush1.msra.mxu0 0.0
    %4539 = vmatprep.subr.mxu0 0.0
    %4540 = vmatpush1.msra.mxu0 0.0
    %4541 = vmatprep.subr.mxu0 0.0
    %4542 = vmatpush1.msra.mxu0 0.0
    %4543 = vmatprep.subr.mxu0 0.0
    %4544 = vmatpush1.msra.mxu0 0.0
    %4545 = vmatprep.subr.mxu0 0.0
    %4546 = vmatpush1.msra.mxu0 0.0
    %4547 = vmatprep.mubr.f32.mxu0 0.0
    %v4548 = vand.u32 %v3198, 4294901760
    %v4549 = vsub.f32 %v3198, %v4548
    %v4550 = vand.u32 %v4549, 4294901760
    %4551 = vmatmul.mubr.f32.gmra.mrb[0].mxu0 %v4550
    %v4552 = vpop.f32.mrb[0].mxu0
    %v4553 = vadd.f32 %v4464, %v4552
    %v4554 = vpop.f32.mrb[0].mxu0
    %4555 = vdwg.mxu0
    %4556 = vmatprep.subr.mxu0 0.0
    %v4557 = vand.u32 %v3202, 4294901760
    %v4558 = vsub.f32 %v3202, %v4557
    %v4559 = vand.u32 %v4558, 4294901760
    %4560 = vmatpush1.msra.mxu0 %v4559
    %4561 = vmatprep.subr.mxu0 0.0
    %v4562 = vand.u32 %v3205, 4294901760
    %v4563 = vsub.f32 %v3205, %v4562
    %v4564 = vand.u32 %v4563, 4294901760
    %4565 = vmatpush1.msra.mxu0 %v4564
    %4566 = vmatprep.subr.mxu0 0.0
    %v4567 = vand.u32 %v3208, 4294901760
    %v4568 = vsub.f32 %v3208, %v4567
    %v4569 = vand.u32 %v4568, 4294901760
    %4570 = vmatpush1.msra.mxu0 %v4569
    %4571 = vmatprep.subr.mxu0 0.0
    %v4572 = vand.u32 %v3211, 4294901760
    %v4573 = vsub.f32 %v3211, %v4572
    %v4574 = vand.u32 %v4573, 4294901760
    %4575 = vmatpush1.msra.mxu0 %v4574
    %4576 = vmatprep.subr.mxu0 0.0
    %v4577 = vand.u32 %v3214, 4294901760
    %v4578 = vsub.f32 %v3214, %v4577
    %v4579 = vand.u32 %v4578, 4294901760
    %4580 = vmatpush1.msra.mxu0 %v4579
    %4581 = vmatprep.subr.mxu0 0.0
    %v4582 = vand.u32 %v3217, 4294901760
    %v4583 = vsub.f32 %v3217, %v4582
    %v4584 = vand.u32 %v4583, 4294901760
    %4585 = vmatpush1.msra.mxu0 %v4584
    %4586 = vmatprep.subr.mxu0 0.0
    %v4587 = vand.u32 %v3220, 4294901760
    %v4588 = vsub.f32 %v3220, %v4587
    %v4589 = vand.u32 %v4588, 4294901760
    %4590 = vmatpush1.msra.mxu0 %v4589
    %4591 = vmatprep.subr.mxu0 0.0
    %v4592 = vand.u32 %v3223, 4294901760
    %v4593 = vsub.f32 %v3223, %v4592
    %v4594 = vand.u32 %v4593, 4294901760
    %4595 = vmatpush1.msra.mxu0 %v4594
    %4596 = vmatprep.subr.mxu0 0.0
    %v4597 = vand.u32 %v3226, 4294901760
    %v4598 = vsub.f32 %v3226, %v4597
    %v4599 = vand.u32 %v4598, 4294901760
    %4600 = vmatpush1.msra.mxu0 %v4599
    %4601 = vmatprep.subr.mxu0 0.0
    %v4602 = vand.u32 %v3229, 4294901760
    %v4603 = vsub.f32 %v3229, %v4602
    %v4604 = vand.u32 %v4603, 4294901760
    %4605 = vmatpush1.msra.mxu0 %v4604
    %4606 = vmatprep.subr.mxu0 0.0
    %v4607 = vand.u32 %v3232, 4294901760
    %v4608 = vsub.f32 %v3232, %v4607
    %v4609 = vand.u32 %v4608, 4294901760
    %4610 = vmatpush1.msra.mxu0 %v4609
    %4611 = vmatprep.subr.mxu0 0.0
    %v4612 = vand.u32 %v3235, 4294901760
    %v4613 = vsub.f32 %v3235, %v4612
    %v4614 = vand.u32 %v4613, 4294901760
    %4615 = vmatpush1.msra.mxu0 %v4614
    %4616 = vmatprep.subr.mxu0 0.0
    %v4617 = vand.u32 %v3238, 4294901760
    %v4618 = vsub.f32 %v3238, %v4617
    %v4619 = vand.u32 %v4618, 4294901760
    %4620 = vmatpush1.msra.mxu0 %v4619
    %4621 = vmatprep.subr.mxu0 0.0
    %v4622 = vand.u32 %v3241, 4294901760
    %v4623 = vsub.f32 %v3241, %v4622
    %v4624 = vand.u32 %v4623, 4294901760
    %4625 = vmatpush1.msra.mxu0 %v4624
    %4626 = vmatprep.subr.mxu0 0.0
    %v4627 = vand.u32 %v3244, 4294901760
    %v4628 = vsub.f32 %v3244, %v4627
    %v4629 = vand.u32 %v4628, 4294901760
    %4630 = vmatpush1.msra.mxu0 %v4629
    %4631 = vmatprep.subr.mxu0 0.0
    %v4632 = vand.u32 %v3247, 4294901760
    %v4633 = vsub.f32 %v3247, %v4632
    %v4634 = vand.u32 %v4633, 4294901760
    %4635 = vmatpush1.msra.mxu0 %v4634
    %4636 = vmatprep.subr.mxu0 0.0
    %4637 = vmatpush1.msra.mxu0 0.0
    %4638 = vmatprep.subr.mxu0 0.0
    %4639 = vmatpush1.msra.mxu0 0.0
    %4640 = vmatprep.subr.mxu0 0.0
    %4641 = vmatpush1.msra.mxu0 0.0
    %4642 = vmatprep.subr.mxu0 0.0
    %4643 = vmatpush1.msra.mxu0 0.0
    %4644 = vmatprep.subr.mxu0 0.0
    %4645 = vmatpush1.msra.mxu0 0.0
    %4646 = vmatprep.subr.mxu0 0.0
    %4647 = vmatpush1.msra.mxu0 0.0
    %4648 = vmatprep.subr.mxu0 0.0
    %4649 = vmatpush1.msra.mxu0 0.0
    %4650 = vmatprep.subr.mxu0 0.0
    %4651 = vmatpush1.msra.mxu0 0.0
    %4652 = vmatprep.subr.mxu0 0.0
    %4653 = vmatpush1.msra.mxu0 0.0
    %4654 = vmatprep.subr.mxu0 0.0
    %4655 = vmatpush1.msra.mxu0 0.0
    %4656 = vmatprep.subr.mxu0 0.0
    %4657 = vmatpush1.msra.mxu0 0.0
    %4658 = vmatprep.subr.mxu0 0.0
    %4659 = vmatpush1.msra.mxu0 0.0
    %4660 = vmatprep.subr.mxu0 0.0
    %4661 = vmatpush1.msra.mxu0 0.0
    %4662 = vmatprep.subr.mxu0 0.0
    %4663 = vmatpush1.msra.mxu0 0.0
    %4664 = vmatprep.subr.mxu0 0.0
    %4665 = vmatpush1.msra.mxu0 0.0
    %4666 = vmatprep.subr.mxu0 0.0
    %4667 = vmatpush1.msra.mxu0 0.0
    %4668 = vmatprep.mubr.f32.mxu0 0.0
    %v4669 = vand.u32 %v3198, 4294901760
    %4670 = vmatmul.mubr.f32.gmra.mrb[0].mxu0 %v4669
    %v4671 = vpop.f32.mrb[0].mxu0
    %v4672 = vadd.f32 %v4553, %v4671
    %v4673 = vpop.f32.mrb[0].mxu0
    %4674 = vdwg.mxu0
    %4675 = vmatprep.subr.mxu0 0.0
    %v4676 = vand.u32 %v3202, 4294901760
    %4677 = vmatpush1.msra.mxu0 %v4676
    %4678 = vmatprep.subr.mxu0 0.0
    %v4679 = vand.u32 %v3205, 4294901760
    %4680 = vmatpush1.msra.mxu0 %v4679
    %4681 = vmatprep.subr.mxu0 0.0
    %v4682 = vand.u32 %v3208, 4294901760
    %4683 = vmatpush1.msra.mxu0 %v4682
    %4684 = vmatprep.subr.mxu0 0.0
    %v4685 = vand.u32 %v3211, 4294901760
    %4686 = vmatpush1.msra.mxu0 %v4685
    %4687 = vmatprep.subr.mxu0 0.0
    %v4688 = vand.u32 %v3214, 4294901760
    %4689 = vmatpush1.msra.mxu0 %v4688
    %4690 = vmatprep.subr.mxu0 0.0
    %v4691 = vand.u32 %v3217, 4294901760
    %4692 = vmatpush1.msra.mxu0 %v4691
    %4693 = vmatprep.subr.mxu0 0.0
    %v4694 = vand.u32 %v3220, 4294901760
    %4695 = vmatpush1.msra.mxu0 %v4694
    %4696 = vmatprep.subr.mxu0 0.0
    %v4697 = vand.u32 %v3223, 4294901760
    %4698 = vmatpush1.msra.mxu0 %v4697
    %4699 = vmatprep.subr.mxu0 0.0
    %v4700 = vand.u32 %v3226, 4294901760
    %4701 = vmatpush1.msra.mxu0 %v4700
    %4702 = vmatprep.subr.mxu0 0.0
    %v4703 = vand.u32 %v3229, 4294901760
    %4704 = vmatpush1.msra.mxu0 %v4703
    %4705 = vmatprep.subr.mxu0 0.0
    %v4706 = vand.u32 %v3232, 4294901760
    %4707 = vmatpush1.msra.mxu0 %v4706
    %4708 = vmatprep.subr.mxu0 0.0
    %v4709 = vand.u32 %v3235, 4294901760
    %4710 = vmatpush1.msra.mxu0 %v4709
    %4711 = vmatprep.subr.mxu0 0.0
    %v4712 = vand.u32 %v3238, 4294901760
    %4713 = vmatpush1.msra.mxu0 %v4712
    %4714 = vmatprep.subr.mxu0 0.0
    %v4715 = vand.u32 %v3241, 4294901760
    %4716 = vmatpush1.msra.mxu0 %v4715
    %4717 = vmatprep.subr.mxu0 0.0
    %v4718 = vand.u32 %v3244, 4294901760
    %4719 = vmatpush1.msra.mxu0 %v4718
    %4720 = vmatprep.subr.mxu0 0.0
    %v4721 = vand.u32 %v3247, 4294901760
    %4722 = vmatpush1.msra.mxu0 %v4721
    %4723 = vmatprep.subr.mxu0 0.0
    %4724 = vmatpush1.msra.mxu0 0.0
    %4725 = vmatprep.subr.mxu0 0.0
    %4726 = vmatpush1.msra.mxu0 0.0
    %4727 = vmatprep.subr.mxu0 0.0
    %4728 = vmatpush1.msra.mxu0 0.0
    %4729 = vmatprep.subr.mxu0 0.0
    %4730 = vmatpush1.msra.mxu0 0.0
    %4731 = vmatprep.subr.mxu0 0.0
    %4732 = vmatpush1.msra.mxu0 0.0
    %4733 = vmatprep.subr.mxu0 0.0
    %4734 = vmatpush1.msra.mxu0 0.0
    %4735 = vmatprep.subr.mxu0 0.0
    %4736 = vmatpush1.msra.mxu0 0.0
    %4737 = vmatprep.subr.mxu0 0.0
    %4738 = vmatpush1.msra.mxu0 0.0
    %4739 = vmatprep.subr.mxu0 0.0
    %4740 = vmatpush1.msra.mxu0 0.0
    %4741 = vmatprep.subr.mxu0 0.0
    %4742 = vmatpush1.msra.mxu0 0.0
    %4743 = vmatprep.subr.mxu0 0.0
    %4744 = vmatpush1.msra.mxu0 0.0
    %4745 = vmatprep.subr.mxu0 0.0
    %4746 = vmatpush1.msra.mxu0 0.0
    %4747 = vmatprep.subr.mxu0 0.0
    %4748 = vmatpush1.msra.mxu0 0.0
    %4749 = vmatprep.subr.mxu0 0.0
    %4750 = vmatpush1.msra.mxu0 0.0
    %4751 = vmatprep.subr.mxu0 0.0
    %4752 = vmatpush1.msra.mxu0 0.0
    %4753 = vmatprep.subr.mxu0 0.0
    %4754 = vmatpush1.msra.mxu0 0.0
    %4755 = vmatprep.mubr.f32.mxu0 0.0
    %v4756 = vand.u32 %v3198, 4294901760
    %4757 = vmatmul.mubr.f32.gmra.mrb[0].mxu0 %v4756
    %v4758 = vpop.f32.mrb[0].mxu0
    %v4759 = vadd.f32 %v4672, %v4758
    %v4760 = vpop.f32.mrb[0].mxu0
    %4761 = vdwg.mxu0
    %v4762 = vxor.u32 %v4117, 2147483648
    %v4763 = vmul.f32 %v4762, 1.442695
    %v4764 = vpow.pop %v4763
    %v4765 = vadd.f32 %v4764, 1.0
    %v4766 = vrcp.pop %v4765
    %v4767 = vmul.f32 1.0, %v4766
    %v4768 = vmax.f32 %v4119, 0.0
    %v4769 = vsub.f32 %v4768, %v4759
    %v4770 = vmul.f32 %v4767, %v4769
    %v4771 = vadd.f32 %v4759, %v4770
    %4772 = vst [vmem:[#allocation8] sm:$0xff] %v4771
    // Predicated region
    $region26: #{highway_forward.1} parent=1 // pred_check
      _
    $region27: #{highway_forward.1} parent=1 // pred_check_branch
      %4774 = sbr.rel (0) target = $region29
    $region28: #{highway_forward.1} parent=1 // pred_region
      %s4776 = ssub.s32 128, 128
      %4777 = vsyncadd [#allocation4], %s4776
      %s4779 = sshll.u32 [#allocation8], 4
      %s4780 = int_to_ptr.vmem [resolvable:$true] %s4779
      %4782 = dma.vmem_to_hbm [thread:$0]  %s4780, 128, %s3, [#allocation4]
    $region29: #{highway_forward.1} parent=1 // pred_fallthru
      _
    // Predicated region
    $region30: #{highway_forward.1} parent=1 // pred_check
      _
    $region31: #{highway_forward.1} parent=1 // pred_check_branch
      %4784 = sbr.rel (0) target = $region33
    $region32: #{highway_forward.1} parent=1 // pred_region
      %4785 = dma.done [#allocation4], 128
    $region33: #{highway_forward.1} parent=1 // pred_fallthru
      _
    %4786 = vsyncpa [#allocation3], 1
    %4787 = vsyncpa [#allocation6], 1
    %4788 = vsyncpa [#allocation4], 1

</llo_original>
